<compile_context>
chip_gen: v6e
topology: v6e:2x2x1
jax: 0.10.0
libtpu: 0.0.40
codegen_flags: <defaults>
</compile_context>

<pallas_src>
import functools

import jax
import jax.numpy as jnp
from jax.experimental import pallas as pl
from jax.experimental.pallas import tpu as pltpu


def _round_up(a, b):
    return (a + b - 1) // b * b


def _gat_layer_kernel(x_full_ref, x_tile_ref, adj_ref, w_aug_ref, w_adst_ref,
                      bias_ref, out_ref, *, heads, ch, relu, concat):
    """One GATConv layer for a [TM, N] dst-row tile of the graph."""
    tm = out_ref.shape[0]
    out_width = out_ref.shape[1]
    hc = heads * ch
    neg_inf = jnp.float32(-1e30)

    # Edge mask for this dst-row tile, straight from int8 (no upcast pass).
    adj_mask = adj_ref[...] != 0                                  # [TM, N] bool

    # One bf16 MXU pass over all sources: features + per-head src scores.
    z = jnp.dot(x_full_ref[...], w_aug_ref[...],
                preferred_element_type=jnp.float32)               # [N, H*C + H]
    xp = z[:, :hc]                                                # [N, H*C]
    a_src_t = jnp.transpose(z[:, hc:hc + heads])                  # [H, N]
    xp_bf = xp.astype(jnp.bfloat16)

    # Tiny per-tile dst-score matmul (rides a free MXU slot; VPU/EUP-bound kernel).
    a_dst = jnp.dot(x_tile_ref[...], w_adst_ref[...],
                    preferred_element_type=jnp.float32)           # [TM, H]

    # Per-head dense masked softmax + aggregation. heads <= 4 and the row
    # tiling already bounds each head's live working set to [TM, N].
    outs = []
    for h in range(heads):
        e = a_dst[:, h:h + 1] + a_src_t[h:h + 1, :]               # [TM, N]
        e = jnp.where(adj_mask, jnp.where(e > 0.0, e, 0.2 * e), neg_inf)
        m = jnp.max(e, axis=-1, keepdims=True)                    # [TM, 1]
        p = jnp.exp(e - m)                                        # [TM, N]
        s = jnp.sum(p, axis=-1, keepdims=True)                    # [TM, 1]
        out_h = jnp.dot(p.astype(jnp.bfloat16), xp_bf[:, h * ch:(h + 1) * ch],
                        preferred_element_type=jnp.float32)       # [TM, C]
        outs.append(out_h * pl.reciprocal(s, approx=False))

    if concat:
        res = jnp.concatenate(outs, axis=-1)                      # [TM, H*C]
    else:
        res = outs[0]
        for o in outs[1:]:
            res = res + o
        res = res / float(heads)                                  # [TM, C]

    # Lane-dense store: zero-pad to the (multiple-of-128) output width.
    width = res.shape[-1]
    if width < out_width:
        res = jnp.concatenate(
            [res, jnp.zeros((tm, out_width - width), jnp.float32)], axis=-1)
    res = res + bias_ref[...]                                     # padded bias
    if relu:
        res = jnp.maximum(res, 0.0)
    out_ref[...] = res.astype(out_ref.dtype)


def _block_diag_att(att):
    """att [H, C] -> block-diag projection [H*C, H]: x'_flat @ P = per-head scores."""
    heads, c = att.shape
    eye = jnp.eye(heads, dtype=jnp.float32)
    return (att.astype(jnp.float32)[:, :, None] * eye[:, None, :]
            ).reshape(heads * c, heads)


def _vmem_cap_bytes():
    """Generation-aware ceiling: ~80% of physical VMEM (v7x 64MiB, v5e/v6e 128MiB)."""
    phys = 64 << 20
    try:
        info = pltpu.get_tpu_info()
        phys = int(getattr(info, "vmem_capacity_bytes", phys))
    except Exception:
        pass
    return int(phys * 0.80)


def _vmem_limit_bytes(tm, n_pad, cin, hc, heads, out_width):
    f32, bf16 = 4, 2
    est = (2 * tm * n_pad * 1                 # adj row tile, double buffered
           + n_pad * cin * bf16               # x (all sources), resident
           + 2 * tm * cin * bf16              # x dst-row tile, double buffered
           + n_pad * (hc + heads) * f32       # z = x @ W_aug
           + n_pad * hc * bf16                # bf16 copy of x'
           + 6 * tm * n_pad * f32             # e/p working set (few heads live)
           + 2 * tm * out_width * f32         # output tile, double buffered
           + cin * (hc + 2 * heads) * bf16)   # weights
    est = int(est * 1.5) + (4 << 20)          # headroom for compiler scratch
    return max(32 << 20, min(est, _vmem_cap_bytes()))


def _gat_layer(x, adj, w, att_src, att_dst, bias, *, heads, ch, concat, relu,
               tm, n_pad, out_width, out_dtype):
    """One gridded GATConv layer: dst-row tiles on a "parallel" grid axis."""
    cin = x.shape[1]
    hc = heads * ch

    w_f32 = w.astype(jnp.float32)
    p_src = _block_diag_att(att_src)                            # [H*C, H]
    p_dst = _block_diag_att(att_dst)                            # [H*C, H]
    # Fused projection: x @ [W | W@P_src] -> x' and all per-head src scores.
    w_aug = jnp.concatenate([w_f32, w_f32 @ p_src], axis=1).astype(jnp.bfloat16)
    w_adst = (w_f32 @ p_dst).astype(jnp.bfloat16)               # [Cin, H]
    bias_pad = jnp.zeros((1, out_width), jnp.float32
                         ).at[:, :bias.shape[1]].set(bias.astype(jnp.float32))

    kernel = functools.partial(_gat_layer_kernel, heads=heads, ch=ch,
                               relu=relu, concat=concat)
    vmem_whole = pl.BlockSpec(memory_space=pltpu.MemorySpace.VMEM)
    return pl.pallas_call(
        kernel,
        out_shape=jax.ShapeDtypeStruct((n_pad, out_width), out_dtype),
        grid=(n_pad // tm,),
        in_specs=[
            vmem_whole,                                         # x (all sources)
            pl.BlockSpec((tm, cin), lambda i: (i, 0)),          # x (dst row tile)
            pl.BlockSpec((tm, n_pad), lambda i: (i, 0)),        # int8 adj row tile
            vmem_whole,                                         # W_aug (bf16)
            vmem_whole,                                         # W @ P_dst (bf16)
            vmem_whole,                                         # padded bias
        ],
        out_specs=pl.BlockSpec((tm, out_width), lambda i: (i, 0)),
        compiler_params=pltpu.CompilerParams(
            dimension_semantics=("parallel",),
            vmem_limit_bytes=_vmem_limit_bytes(tm, n_pad, cin, hc, heads,
                                               out_width),
        ),
    )(x, x, adj, w_aug, w_adst, bias_pad)


@functools.partial(jax.jit, static_argnames=("heads",))
def gnn_head_forward(x, edge_index, params, *, heads):
    """GNNHead.forward: gat1 (concat, +ReLU fused) -> gat2 (mean)."""
    n, in_ch = x.shape
    hid = params["att_src1"].shape[1]
    out_ch = params["att_src2"].shape[1]

    # Row-tile size and padded node count (lane-dense adjacency columns).
    n_pad = _round_up(n, 128)
    tm = 256 if n_pad % 256 == 0 else 128

    # Dense int8 adjacency adj[dst, src] = 1 plus self-loops (built once per
    # call; for static graphs cache this outside the forward).
    src, dst = edge_index[0], edge_index[1]
    adj = jnp.zeros((n_pad, n_pad), jnp.int8).at[dst, src].set(1)
    adj = adj.at[jnp.arange(n), jnp.arange(n)].set(1)

    # bf16 node features, zero-padded rows (padded rows carry no edges).
    x_pad = jnp.zeros((n_pad, in_ch), jnp.bfloat16).at[:n].set(
        x.astype(jnp.bfloat16))

    hid_total = heads * hid
    hid_pad = _round_up(hid_total, 128)
    out_pad = _round_up(out_ch, 128)

    # Layer 1: concat heads, bias, ReLU fused; bf16 HBM pass-through.
    h1 = _gat_layer(x_pad, adj, params["w1"], params["att_src1"],
                    params["att_dst1"], params["bias1"],
                    heads=heads, ch=hid, concat=True, relu=True,
                    tm=tm, n_pad=n_pad, out_width=hid_pad,
                    out_dtype=jnp.bfloat16)

    # Layer 2: single head, mean (=identity), bias; zero-padded weight rows
    # soak up h1's padded columns.
    w2_pad = jnp.zeros((hid_pad, out_ch), jnp.float32
                       ).at[:hid_total].set(params["w2"].astype(jnp.float32))
    att_src2_pad = params["att_src2"]                           # [1, out_ch]
    att_dst2_pad = params["att_dst2"]
    out = _gat_layer(h1, adj, w2_pad, att_src2_pad, att_dst2_pad,
                     params["bias2"],
                     heads=1, ch=out_ch, concat=False, relu=False,
                     tm=tm, n_pad=n_pad, out_width=out_pad,
                     out_dtype=jnp.float32)
    return out[:n, :out_ch]


def init_params(key, in_channels, hidden_channels, out_channels, heads):
    k = jax.random.split(key, 8)
    scale1 = 1.0 / jnp.sqrt(in_channels)
    scale2 = 1.0 / jnp.sqrt(hidden_channels * heads)
    return {
        "w1": jax.random.normal(k[0], (in_channels, heads * hidden_channels),
                                jnp.float32) * scale1,
        "att_src1": jax.random.normal(k[1], (heads, hidden_channels),
                                      jnp.float32) * 0.1,
        "att_dst1": jax.random.normal(k[2], (heads, hidden_channels),
                                      jnp.float32) * 0.1,
        "bias1": jnp.zeros((1, heads * hidden_channels), jnp.float32),
        "w2": jax.random.normal(k[3], (heads * hidden_channels, out_channels),
                                jnp.float32) * scale2,
        "att_src2": jax.random.normal(k[4], (1, out_channels),
                                      jnp.float32) * 0.1,
        "att_dst2": jax.random.normal(k[5], (1, out_channels),
                                      jnp.float32) * 0.1,
        "bias2": jnp.zeros((1, out_channels), jnp.float32),
    }


if __name__ == "__main__":
    N = 16            # number of nodes
    IN_CH = 8         # in_channels
    HID_CH = 8        # hidden_channels
    OUT_CH = 8        # out_channels
    HEADS = 4
    E = 40            # number of unique directed edges

    key = jax.random.PRNGKey(0)
    kx, ke, kp = jax.random.split(key, 3)

    x = jax.random.normal(kx, (N, IN_CH), jnp.float32)

    # unique directed edges (src, dst) so the dense-adjacency softmax matches
    # PyG's per-edge softmax exactly.
    flat = jax.random.choice(ke, N * N, shape=(E,), replace=False)
    edge_index = jnp.stack([flat // N, flat % N]).astype(jnp.int32)  # [2, E]

    params = init_params(kp, IN_CH, HID_CH, OUT_CH, HEADS)

    out = gnn_head_forward(x, edge_index, params, heads=HEADS)
    jax.block_until_ready(out)
    assert out.shape == (N, OUT_CH), out.shape
    assert bool(jnp.all(jnp.isfinite(out)))
    print("KERNEL_OK")
</pallas_src>

<mosaic_0001>
module attributes {stable_mosaic.version = 11 : i64} {
  func.func @_gat_layer_kernel(%arg0: i32, %arg1: memref<128x128xbf16, #tpu.memory_space<vmem>>, %arg2: memref<128x128xbf16, #tpu.memory_space<vmem>>, %arg3: memref<128x128xi8, #tpu.memory_space<vmem>>, %arg4: memref<128x9xbf16, #tpu.memory_space<vmem>>, %arg5: memref<128x1xbf16, #tpu.memory_space<vmem>>, %arg6: memref<1x128xf32, #tpu.memory_space<vmem>>, %arg7: memref<128x128xf32, #tpu.memory_space<vmem>>) attributes {dimension_semantics = [#tpu.dimension_semantics<parallel>], iteration_bounds = array<i64: 1>, scalar_prefetch = 0 : i64, scratch_operands = 0 : i64, tpu.core_type = #tpu.core_type<tc>, window_params = [{pipeline_mode = #tpu.pipeline_mode<synchronous>, transform_indices = @transform_0, window_bounds = array<i64: 128, 128>}, {transform_indices = @transform_1, window_bounds = array<i64: 128, 128>}, {transform_indices = @transform_2, window_bounds = array<i64: 128, 128>}, {pipeline_mode = #tpu.pipeline_mode<synchronous>, transform_indices = @transform_3, window_bounds = array<i64: 128, 9>}, {pipeline_mode = #tpu.pipeline_mode<synchronous>, transform_indices = @transform_4, window_bounds = array<i64: 128, 1>}, {pipeline_mode = #tpu.pipeline_mode<synchronous>, transform_indices = @transform_5, window_bounds = array<i64: 1, 128>}, {transform_indices = @transform_6, window_bounds = array<i64: 128, 128>}]} {
    %c0 = arith.constant 0 : index
    %c0_0 = arith.constant 0 : index
    %0 = vector.load %arg3[%c0, %c0_0] : memref<128x128xi8, #tpu.memory_space<vmem>>, vector<128x128xi8>
    %c0_i8 = arith.constant 0 : i8
    %1 = vector.broadcast %c0_i8 : i8 to vector<128x128xi8>
    %2 = arith.cmpi ne, %0, %1 : vector<128x128xi8>
    %c0_1 = arith.constant 0 : index
    %c0_2 = arith.constant 0 : index
    %3 = vector.load %arg1[%c0_1, %c0_2] : memref<128x128xbf16, #tpu.memory_space<vmem>>, vector<128x128xbf16>
    %c0_3 = arith.constant 0 : index
    %c0_4 = arith.constant 0 : index
    %4 = vector.load %arg4[%c0_3, %c0_4] : memref<128x9xbf16, #tpu.memory_space<vmem>>, vector<128x9xbf16>
    %cst = arith.constant dense<0.000000e+00> : vector<128x9xf32>
    %5 = tpu.matmul %3, %4, %cst {dimension_numbers = #tpu.dot_dimension_numbers<[1], [0], [0], [1], [0, 0, 1, 1], [], []>} : vector<128x128xbf16>, vector<128x9xbf16>, vector<128x9xf32> -> vector<128x9xf32>
    %6 = vector.extract_strided_slice %5 {offsets = [0, 0], sizes = [128, 8], strides = [1, 1]} : vector<128x9xf32> to vector<128x8xf32>
    %7 = vector.extract_strided_slice %5 {offsets = [0, 8], sizes = [128, 1], strides = [1, 1]} : vector<128x9xf32> to vector<128x1xf32>
    %8 = tpu.transpose %7, [1, 0] : vector<128x1xf32> -> vector<1x128xf32>
    %9 = arith.truncf %6 : vector<128x8xf32> to vector<128x8xbf16>
    %c0_5 = arith.constant 0 : index
    %c0_6 = arith.constant 0 : index
    %10 = vector.load %arg2[%c0_5, %c0_6] : memref<128x128xbf16, #tpu.memory_space<vmem>>, vector<128x128xbf16>
    %c0_7 = arith.constant 0 : index
    %c0_8 = arith.constant 0 : index
    %11 = vector.load %arg5[%c0_7, %c0_8] : memref<128x1xbf16, #tpu.memory_space<vmem>>, vector<128x1xbf16>
    %cst_9 = arith.constant dense<0.000000e+00> : vector<128x1xf32>
    %12 = tpu.matmul %10, %11, %cst_9 {dimension_numbers = #tpu.dot_dimension_numbers<[1], [0], [0], [1], [0, 0, 1, 1], [], []>} : vector<128x128xbf16>, vector<128x1xbf16>, vector<128x1xf32> -> vector<128x1xf32>
    %13 = vector.broadcast %12 : vector<128x1xf32> to vector<128x128xf32>
    %14 = vector.broadcast %8 : vector<1x128xf32> to vector<128x128xf32>
    %15 = arith.addf %13, %14 : vector<128x128xf32>
    %cst_10 = arith.constant 0.000000e+00 : f32
    %16 = vector.broadcast %cst_10 : f32 to vector<128x128xf32>
    %17 = arith.cmpf ogt, %15, %16 : vector<128x128xf32>
    %cst_11 = arith.constant 2.000000e-01 : f32
    %18 = vector.broadcast %cst_11 : f32 to vector<128x128xf32>
    %19 = arith.mulf %18, %15 : vector<128x128xf32>
    %20 = arith.select %17, %15, %19 : vector<128x128xi1>, vector<128x128xf32>
    %cst_12 = arith.constant -1.000000e+30 : f32
    %21 = vector.broadcast %cst_12 : f32 to vector<128x128xf32>
    %22 = arith.select %2, %20, %21 : vector<128x128xi1>, vector<128x128xf32>
    %cst_13 = arith.constant dense<0xFF800000> : vector<128xf32>
    %23 = vector.multi_reduction <maximumf>, %22, %cst_13 [1] : vector<128x128xf32> to vector<128xf32>
    %24 = vector.shape_cast %23 : vector<128xf32> to vector<128x1xf32>
    %25 = vector.broadcast %24 : vector<128x1xf32> to vector<128x128xf32>
    %26 = arith.subf %22, %25 : vector<128x128xf32>
    %27 = math.exp %26 : vector<128x128xf32>
    %cst_14 = arith.constant dense<0.000000e+00> : vector<128xf32>
    %28 = vector.multi_reduction <add>, %27, %cst_14 [1] : vector<128x128xf32> to vector<128xf32>
    %29 = vector.shape_cast %28 : vector<128xf32> to vector<128x1xf32>
    %30 = arith.truncf %27 : vector<128x128xf32> to vector<128x128xbf16>
    %cst_15 = arith.constant dense<0.000000e+00> : vector<128x8xf32>
    %31 = tpu.matmul %30, %9, %cst_15 {dimension_numbers = #tpu.dot_dimension_numbers<[1], [0], [0], [1], [0, 0, 1, 1], [], []>} : vector<128x128xbf16>, vector<128x8xbf16>, vector<128x8xf32> -> vector<128x8xf32>
    %32 = tpu.reciprocal %29 : vector<128x1xf32> -> vector<128x1xf32>
    %33 = vector.broadcast %32 : vector<128x1xf32> to vector<128x8xf32>
    %34 = arith.mulf %31, %33 : vector<128x8xf32>
    %cst_16 = arith.constant 1.000000e+00 : f32
    %35 = vector.broadcast %cst_16 : f32 to vector<128x8xf32>
    %36 = arith.divf %34, %35 : vector<128x8xf32>
    %cst_17 = arith.constant 0.000000e+00 : f32
    %37 = vector.broadcast %cst_17 : f32 to vector<128x120xf32>
    %38 = tpu.concatenate %36, %37 in 1 : vector<128x8xf32>, vector<128x120xf32> -> vector<128x128xf32>
    %c0_18 = arith.constant 0 : index
    %c0_19 = arith.constant 0 : index
    %39 = vector.load %arg6[%c0_18, %c0_19] : memref<1x128xf32, #tpu.memory_space<vmem>>, vector<1x128xf32>
    %40 = vector.broadcast %39 : vector<1x128xf32> to vector<128x128xf32>
    %41 = arith.addf %38, %40 : vector<128x128xf32>
    %c0_20 = arith.constant 0 : index
    %c0_21 = arith.constant 0 : index
    %42 = vector.load %arg7[%c0_20, %c0_21] : memref<128x128xf32, #tpu.memory_space<vmem>>, vector<128x128xf32>
    tpu.vector_store %arg7[%c0_20, %c0_21], %41 {strides = array<i32>} : memref<128x128xf32, #tpu.memory_space<vmem>>, vector<128x128xf32>,
    return
  }
  func.func @transform_0(%arg0: i32) -> (i32, i32) {
    %c0_i32 = arith.constant 0 : i32
    %c0_i32_0 = arith.constant 0 : i32
    %c0_i32_1 = arith.constant 0 : i32
    return %c0_i32, %c0_i32_0 : i32, i32
  }
  func.func @transform_1(%arg0: i32) -> (i32, i32) {
    %c0_i32 = arith.constant 0 : i32
    %c0_i32_0 = arith.constant 0 : i32
    return %arg0, %c0_i32 : i32, i32
  }
  func.func @transform_2(%arg0: i32) -> (i32, i32) {
    %c0_i32 = arith.constant 0 : i32
    %c0_i32_0 = arith.constant 0 : i32
    return %arg0, %c0_i32 : i32, i32
  }
  func.func @transform_3(%arg0: i32) -> (i32, i32) {
    %c0_i32 = arith.constant 0 : i32
    %c0_i32_0 = arith.constant 0 : i32
    %c0_i32_1 = arith.constant 0 : i32
    return %c0_i32, %c0_i32_0 : i32, i32
  }
  func.func @transform_4(%arg0: i32) -> (i32, i32) {
    %c0_i32 = arith.constant 0 : i32
    %c0_i32_0 = arith.constant 0 : i32
    %c0_i32_1 = arith.constant 0 : i32
    return %c0_i32, %c0_i32_0 : i32, i32
  }
  func.func @transform_5(%arg0: i32) -> (i32, i32) {
    %c0_i32 = arith.constant 0 : i32
    %c0_i32_0 = arith.constant 0 : i32
    %c0_i32_1 = arith.constant 0 : i32
    return %c0_i32, %c0_i32_0 : i32, i32
  }
  func.func @transform_6(%arg0: i32) -> (i32, i32) {
    %c0_i32 = arith.constant 0 : i32
    %c0_i32_0 = arith.constant 0 : i32
    return %arg0, %c0_i32 : i32, i32
  }
}

module attributes {stable_mosaic.version = 11 : i64} {
  func.func @_gat_layer_kernel(%arg0: i32, %arg1: memref<128x8xbf16, #tpu.memory_space<vmem>>, %arg2: memref<128x8xbf16, #tpu.memory_space<vmem>>, %arg3: memref<128x128xi8, #tpu.memory_space<vmem>>, %arg4: memref<8x36xbf16, #tpu.memory_space<vmem>>, %arg5: memref<8x4xbf16, #tpu.memory_space<vmem>>, %arg6: memref<1x128xf32, #tpu.memory_space<vmem>>, %arg7: memref<128x128xbf16, #tpu.memory_space<vmem>>) attributes {dimension_semantics = [#tpu.dimension_semantics<parallel>], iteration_bounds = array<i64: 1>, scalar_prefetch = 0 : i64, scratch_operands = 0 : i64, tpu.core_type = #tpu.core_type<tc>, window_params = [{pipeline_mode = #tpu.pipeline_mode<synchronous>, transform_indices = @transform_0, window_bounds = array<i64: 128, 8>}, {transform_indices = @transform_1, window_bounds = array<i64: 128, 8>}, {transform_indices = @transform_2, window_bounds = array<i64: 128, 128>}, {pipeline_mode = #tpu.pipeline_mode<synchronous>, transform_indices = @transform_3, window_bounds = array<i64: 8, 36>}, {pipeline_mode = #tpu.pipeline_mode<synchronous>, transform_indices = @transform_4, window_bounds = array<i64: 8, 4>}, {pipeline_mode = #tpu.pipeline_mode<synchronous>, transform_indices = @transform_5, window_bounds = array<i64: 1, 128>}, {transform_indices = @transform_6, window_bounds = array<i64: 128, 128>}]} {
    %c0 = arith.constant 0 : index
    %c0_0 = arith.constant 0 : index
    %0 = vector.load %arg3[%c0, %c0_0] : memref<128x128xi8, #tpu.memory_space<vmem>>, vector<128x128xi8>
    %c0_i8 = arith.constant 0 : i8
    %1 = vector.broadcast %c0_i8 : i8 to vector<128x128xi8>
    %2 = arith.cmpi ne, %0, %1 : vector<128x128xi8>
    %c0_1 = arith.constant 0 : index
    %c0_2 = arith.constant 0 : index
    %3 = vector.load %arg1[%c0_1, %c0_2] : memref<128x8xbf16, #tpu.memory_space<vmem>>, vector<128x8xbf16>
    %c0_3 = arith.constant 0 : index
    %c0_4 = arith.constant 0 : index
    %4 = vector.load %arg4[%c0_3, %c0_4] : memref<8x36xbf16, #tpu.memory_space<vmem>>, vector<8x36xbf16>
    %cst = arith.constant dense<0.000000e+00> : vector<128x36xf32>
    %5 = tpu.matmul %3, %4, %cst {dimension_numbers = #tpu.dot_dimension_numbers<[1], [0], [0], [1], [0, 0, 1, 1], [], []>} : vector<128x8xbf16>, vector<8x36xbf16>, vector<128x36xf32> -> vector<128x36xf32>
    %6 = vector.extract_strided_slice %5 {offsets = [0, 0], sizes = [128, 32], strides = [1, 1]} : vector<128x36xf32> to vector<128x32xf32>
    %7 = vector.extract_strided_slice %5 {offsets = [0, 32], sizes = [128, 4], strides = [1, 1]} : vector<128x36xf32> to vector<128x4xf32>
    %8 = tpu.transpose %7, [1, 0] : vector<128x4xf32> -> vector<4x128xf32>
    %9 = arith.truncf %6 : vector<128x32xf32> to vector<128x32xbf16>
    %c0_5 = arith.constant 0 : index
    %c0_6 = arith.constant 0 : index
    %10 = vector.load %arg2[%c0_5, %c0_6] : memref<128x8xbf16, #tpu.memory_space<vmem>>, vector<128x8xbf16>
    %c0_7 = arith.constant 0 : index
    %c0_8 = arith.constant 0 : index
    %11 = vector.load %arg5[%c0_7, %c0_8] : memref<8x4xbf16, #tpu.memory_space<vmem>>, vector<8x4xbf16>
    %cst_9 = arith.constant dense<0.000000e+00> : vector<128x4xf32>
    %12 = tpu.matmul %10, %11, %cst_9 {dimension_numbers = #tpu.dot_dimension_numbers<[1], [0], [0], [1], [0, 0, 1, 1], [], []>} : vector<128x8xbf16>, vector<8x4xbf16>, vector<128x4xf32> -> vector<128x4xf32>
    %13 = vector.extract_strided_slice %12 {offsets = [0, 0], sizes = [128, 1], strides = [1, 1]} : vector<128x4xf32> to vector<128x1xf32>
    %14 = vector.extract_strided_slice %8 {offsets = [0, 0], sizes = [1, 128], strides = [1, 1]} : vector<4x128xf32> to vector<1x128xf32>
    %15 = vector.broadcast %13 : vector<128x1xf32> to vector<128x128xf32>
    %16 = vector.broadcast %14 : vector<1x128xf32> to vector<128x128xf32>
    %17 = arith.addf %15, %16 : vector<128x128xf32>
    %cst_10 = arith.constant 0.000000e+00 : f32
    %18 = vector.broadcast %cst_10 : f32 to vector<128x128xf32>
    %19 = arith.cmpf ogt, %17, %18 : vector<128x128xf32>
    %cst_11 = arith.constant 2.000000e-01 : f32
    %20 = vector.broadcast %cst_11 : f32 to vector<128x128xf32>
    %21 = arith.mulf %20, %17 : vector<128x128xf32>
    %22 = arith.select %19, %17, %21 : vector<128x128xi1>, vector<128x128xf32>
    %cst_12 = arith.constant -1.000000e+30 : f32
    %23 = vector.broadcast %cst_12 : f32 to vector<128x128xf32>
    %24 = arith.select %2, %22, %23 : vector<128x128xi1>, vector<128x128xf32>
    %cst_13 = arith.constant dense<0xFF800000> : vector<128xf32>
    %25 = vector.multi_reduction <maximumf>, %24, %cst_13 [1] : vector<128x128xf32> to vector<128xf32>
    %26 = vector.shape_cast %25 : vector<128xf32> to vector<128x1xf32>
    %27 = vector.broadcast %26 : vector<128x1xf32> to vector<128x128xf32>
    %28 = arith.subf %24, %27 : vector<128x128xf32>
    %29 = math.exp %28 : vector<128x128xf32>
    %cst_14 = arith.constant dense<0.000000e+00> : vector<128xf32>
    %30 = vector.multi_reduction <add>, %29, %cst_14 [1] : vector<128x128xf32> to vector<128xf32>
    %31 = vector.shape_cast %30 : vector<128xf32> to vector<128x1xf32>
    %32 = arith.truncf %29 : vector<128x128xf32> to vector<128x128xbf16>
    %33 = vector.extract_strided_slice %9 {offsets = [0, 0], sizes = [128, 8], strides = [1, 1]} : vector<128x32xbf16> to vector<128x8xbf16>
    %cst_15 = arith.constant dense<0.000000e+00> : vector<128x8xf32>
    %34 = tpu.matmul %32, %33, %cst_15 {dimension_numbers = #tpu.dot_dimension_numbers<[1], [0], [0], [1], [0, 0, 1, 1], [], []>} : vector<128x128xbf16>, vector<128x8xbf16>, vector<128x8xf32> -> vector<128x8xf32>
    %35 = tpu.reciprocal %31 : vector<128x1xf32> -> vector<128x1xf32>
    %36 = vector.broadcast %35 : vector<128x1xf32> to vector<128x8xf32>
    %37 = arith.mulf %34, %36 : vector<128x8xf32>
    %38 = vector.extract_strided_slice %12 {offsets = [0, 1], sizes = [128, 1], strides = [1, 1]} : vector<128x4xf32> to vector<128x1xf32>
    %39 = vector.extract_strided_slice %8 {offsets = [1, 0], sizes = [1, 128], strides = [1, 1]} : vector<4x128xf32> to vector<1x128xf32>
    %40 = vector.broadcast %38 : vector<128x1xf32> to vector<128x128xf32>
    %41 = vector.broadcast %39 : vector<1x128xf32> to vector<128x128xf32>
    %42 = arith.addf %40, %41 : vector<128x128xf32>
    %cst_16 = arith.constant 0.000000e+00 : f32
    %43 = vector.broadcast %cst_16 : f32 to vector<128x128xf32>
    %44 = arith.cmpf ogt, %42, %43 : vector<128x128xf32>
    %cst_17 = arith.constant 2.000000e-01 : f32
    %45 = vector.broadcast %cst_17 : f32 to vector<128x128xf32>
    %46 = arith.mulf %45, %42 : vector<128x128xf32>
    %47 = arith.select %44, %42, %46 : vector<128x128xi1>, vector<128x128xf32>
    %cst_18 = arith.constant -1.000000e+30 : f32
    %48 = vector.broadcast %cst_18 : f32 to vector<128x128xf32>
    %49 = arith.select %2, %47, %48 : vector<128x128xi1>, vector<128x128xf32>
    %cst_19 = arith.constant dense<0xFF800000> : vector<128xf32>
    %50 = vector.multi_reduction <maximumf>, %49, %cst_19 [1] : vector<128x128xf32> to vector<128xf32>
    %51 = vector.shape_cast %50 : vector<128xf32> to vector<128x1xf32>
    %52 = vector.broadcast %51 : vector<128x1xf32> to vector<128x128xf32>
    %53 = arith.subf %49, %52 : vector<128x128xf32>
    %54 = math.exp %53 : vector<128x128xf32>
    %cst_20 = arith.constant dense<0.000000e+00> : vector<128xf32>
    %55 = vector.multi_reduction <add>, %54, %cst_20 [1] : vector<128x128xf32> to vector<128xf32>
    %56 = vector.shape_cast %55 : vector<128xf32> to vector<128x1xf32>
    %57 = arith.truncf %54 : vector<128x128xf32> to vector<128x128xbf16>
    %58 = vector.extract_strided_slice %9 {offsets = [0, 8], sizes = [128, 8], strides = [1, 1]} : vector<128x32xbf16> to vector<128x8xbf16>
    %cst_21 = arith.constant dense<0.000000e+00> : vector<128x8xf32>
    %59 = tpu.matmul %57, %58, %cst_21 {dimension_numbers = #tpu.dot_dimension_numbers<[1], [0], [0], [1], [0, 0, 1, 1], [], []>} : vector<128x128xbf16>, vector<128x8xbf16>, vector<128x8xf32> -> vector<128x8xf32>
    %60 = tpu.reciprocal %56 : vector<128x1xf32> -> vector<128x1xf32>
    %61 = vector.broadcast %60 : vector<128x1xf32> to vector<128x8xf32>
    %62 = arith.mulf %59, %61 : vector<128x8xf32>
    %63 = vector.extract_strided_slice %12 {offsets = [0, 2], sizes = [128, 1], strides = [1, 1]} : vector<128x4xf32> to vector<128x1xf32>
    %64 = vector.extract_strided_slice %8 {offsets = [2, 0], sizes = [1, 128], strides = [1, 1]} : vector<4x128xf32> to vector<1x128xf32>
    %65 = vector.broadcast %63 : vector<128x1xf32> to vector<128x128xf32>
    %66 = vector.broadcast %64 : vector<1x128xf32> to vector<128x128xf32>
    %67 = arith.addf %65, %66 : vector<128x128xf32>
    %cst_22 = arith.constant 0.000000e+00 : f32
    %68 = vector.broadcast %cst_22 : f32 to vector<128x128xf32>
    %69 = arith.cmpf ogt, %67, %68 : vector<128x128xf32>
    %cst_23 = arith.constant 2.000000e-01 : f32
    %70 = vector.broadcast %cst_23 : f32 to vector<128x128xf32>
    %71 = arith.mulf %70, %67 : vector<128x128xf32>
    %72 = arith.select %69, %67, %71 : vector<128x128xi1>, vector<128x128xf32>
    %cst_24 = arith.constant -1.000000e+30 : f32
    %73 = vector.broadcast %cst_24 : f32 to vector<128x128xf32>
    %74 = arith.select %2, %72, %73 : vector<128x128xi1>, vector<128x128xf32>
    %cst_25 = arith.constant dense<0xFF800000> : vector<128xf32>
    %75 = vector.multi_reduction <maximumf>, %74, %cst_25 [1] : vector<128x128xf32> to vector<128xf32>
    %76 = vector.shape_cast %75 : vector<128xf32> to vector<128x1xf32>
    %77 = vector.broadcast %76 : vector<128x1xf32> to vector<128x128xf32>
    %78 = arith.subf %74, %77 : vector<128x128xf32>
    %79 = math.exp %78 : vector<128x128xf32>
    %cst_26 = arith.constant dense<0.000000e+00> : vector<128xf32>
    %80 = vector.multi_reduction <add>, %79, %cst_26 [1] : vector<128x128xf32> to vector<128xf32>
    %81 = vector.shape_cast %80 : vector<128xf32> to vector<128x1xf32>
    %82 = arith.truncf %79 : vector<128x128xf32> to vector<128x128xbf16>
    %83 = vector.extract_strided_slice %9 {offsets = [0, 16], sizes = [128, 8], strides = [1, 1]} : vector<128x32xbf16> to vector<128x8xbf16>
    %cst_27 = arith.constant dense<0.000000e+00> : vector<128x8xf32>
    %84 = tpu.matmul %82, %83, %cst_27 {dimension_numbers = #tpu.dot_dimension_numbers<[1], [0], [0], [1], [0, 0, 1, 1], [], []>} : vector<128x128xbf16>, vector<128x8xbf16>, vector<128x8xf32> -> vector<128x8xf32>
    %85 = tpu.reciprocal %81 : vector<128x1xf32> -> vector<128x1xf32>
    %86 = vector.broadcast %85 : vector<128x1xf32> to vector<128x8xf32>
    %87 = arith.mulf %84, %86 : vector<128x8xf32>
    %88 = vector.extract_strided_slice %12 {offsets = [0, 3], sizes = [128, 1], strides = [1, 1]} : vector<128x4xf32> to vector<128x1xf32>
    %89 = vector.extract_strided_slice %8 {offsets = [3, 0], sizes = [1, 128], strides = [1, 1]} : vector<4x128xf32> to vector<1x128xf32>
    %90 = vector.broadcast %88 : vector<128x1xf32> to vector<128x128xf32>
    %91 = vector.broadcast %89 : vector<1x128xf32> to vector<128x128xf32>
    %92 = arith.addf %90, %91 : vector<128x128xf32>
    %cst_28 = arith.constant 0.000000e+00 : f32
    %93 = vector.broadcast %cst_28 : f32 to vector<128x128xf32>
    %94 = arith.cmpf ogt, %92, %93 : vector<128x128xf32>
    %cst_29 = arith.constant 2.000000e-01 : f32
    %95 = vector.broadcast %cst_29 : f32 to vector<128x128xf32>
    %96 = arith.mulf %95, %92 : vector<128x128xf32>
    %97 = arith.select %94, %92, %96 : vector<128x128xi1>, vector<128x128xf32>
    %cst_30 = arith.constant -1.000000e+30 : f32
    %98 = vector.broadcast %cst_30 : f32 to vector<128x128xf32>
    %99 = arith.select %2, %97, %98 : vector<128x128xi1>, vector<128x128xf32>
    %cst_31 = arith.constant dense<0xFF800000> : vector<128xf32>
    %100 = vector.multi_reduction <maximumf>, %99, %cst_31 [1] : vector<128x128xf32> to vector<128xf32>
    %101 = vector.shape_cast %100 : vector<128xf32> to vector<128x1xf32>
    %102 = vector.broadcast %101 : vector<128x1xf32> to vector<128x128xf32>
    %103 = arith.subf %99, %102 : vector<128x128xf32>
    %104 = math.exp %103 : vector<128x128xf32>
    %cst_32 = arith.constant dense<0.000000e+00> : vector<128xf32>
    %105 = vector.multi_reduction <add>, %104, %cst_32 [1] : vector<128x128xf32> to vector<128xf32>
    %106 = vector.shape_cast %105 : vector<128xf32> to vector<128x1xf32>
    %107 = arith.truncf %104 : vector<128x128xf32> to vector<128x128xbf16>
    %108 = vector.extract_strided_slice %9 {offsets = [0, 24], sizes = [128, 8], strides = [1, 1]} : vector<128x32xbf16> to vector<128x8xbf16>
    %cst_33 = arith.constant dense<0.000000e+00> : vector<128x8xf32>
    %109 = tpu.matmul %107, %108, %cst_33 {dimension_numbers = #tpu.dot_dimension_numbers<[1], [0], [0], [1], [0, 0, 1, 1], [], []>} : vector<128x128xbf16>, vector<128x8xbf16>, vector<128x8xf32> -> vector<128x8xf32>
    %110 = tpu.reciprocal %106 : vector<128x1xf32> -> vector<128x1xf32>
    %111 = vector.broadcast %110 : vector<128x1xf32> to vector<128x8xf32>
    %112 = arith.mulf %109, %111 : vector<128x8xf32>
    %113 = tpu.concatenate %37, %62, %87, %112 in 1 : vector<128x8xf32>, vector<128x8xf32>, vector<128x8xf32>, vector<128x8xf32> -> vector<128x32xf32>
    %cst_34 = arith.constant 0.000000e+00 : f32
    %114 = vector.broadcast %cst_34 : f32 to vector<128x96xf32>
    %115 = tpu.concatenate %113, %114 in 1 : vector<128x32xf32>, vector<128x96xf32> -> vector<128x128xf32>
    %c0_35 = arith.constant 0 : index
    %c0_36 = arith.constant 0 : index
    %116 = vector.load %arg6[%c0_35, %c0_36] : memref<1x128xf32, #tpu.memory_space<vmem>>, vector<1x128xf32>
    %117 = vector.broadcast %116 : vector<1x128xf32> to vector<128x128xf32>
    %118 = arith.addf %115, %117 : vector<128x128xf32>
    %cst_37 = arith.constant 0.000000e+00 : f32
    %119 = vector.broadcast %cst_37 : f32 to vector<128x128xf32>
    %120 = arith.maximumf %118, %119 : vector<128x128xf32>
    %121 = arith.truncf %120 : vector<128x128xf32> to vector<128x128xbf16>
    %c0_38 = arith.constant 0 : index
    %c0_39 = arith.constant 0 : index
    %122 = vector.load %arg7[%c0_38, %c0_39] : memref<128x128xbf16, #tpu.memory_space<vmem>>, vector<128x128xbf16>
    tpu.vector_store %arg7[%c0_38, %c0_39], %121 {strides = array<i32>} : memref<128x128xbf16, #tpu.memory_space<vmem>>, vector<128x128xbf16>,
    return
  }
  func.func @transform_0(%arg0: i32) -> (i32, i32) {
    %c0_i32 = arith.constant 0 : i32
    %c0_i32_0 = arith.constant 0 : i32
    %c0_i32_1 = arith.constant 0 : i32
    return %c0_i32, %c0_i32_0 : i32, i32
  }
  func.func @transform_1(%arg0: i32) -> (i32, i32) {
    %c0_i32 = arith.constant 0 : i32
    %c0_i32_0 = arith.constant 0 : i32
    return %arg0, %c0_i32 : i32, i32
  }
  func.func @transform_2(%arg0: i32) -> (i32, i32) {
    %c0_i32 = arith.constant 0 : i32
    %c0_i32_0 = arith.constant 0 : i32
    return %arg0, %c0_i32 : i32, i32
  }
  func.func @transform_3(%arg0: i32) -> (i32, i32) {
    %c0_i32 = arith.constant 0 : i32
    %c0_i32_0 = arith.constant 0 : i32
    %c0_i32_1 = arith.constant 0 : i32
    return %c0_i32, %c0_i32_0 : i32, i32
  }
  func.func @transform_4(%arg0: i32) -> (i32, i32) {
    %c0_i32 = arith.constant 0 : i32
    %c0_i32_0 = arith.constant 0 : i32
    %c0_i32_1 = arith.constant 0 : i32
    return %c0_i32, %c0_i32_0 : i32, i32
  }
  func.func @transform_5(%arg0: i32) -> (i32, i32) {
    %c0_i32 = arith.constant 0 : i32
    %c0_i32_0 = arith.constant 0 : i32
    %c0_i32_1 = arith.constant 0 : i32
    return %c0_i32, %c0_i32_0 : i32, i32
  }
  func.func @transform_6(%arg0: i32) -> (i32, i32) {
    %c0_i32 = arith.constant 0 : i32
    %c0_i32_0 = arith.constant 0 : i32
    return %arg0, %c0_i32 : i32, i32
  }
}

</mosaic_0001>

<llo_original>
// kernel: gnn_head_forward.3
$region0: #{gnn_head_forward.3}
  #allocation0 [shape = 'u32[]', space=smem, size = 0x4, offset = 0x4, fixed_abs, tag = 'smem constant byte address 0x4 - core index']
  #allocation1 [shape = 'u32[144,128]{1,0:T(1,128)}', space=vmem, size = 0x12000, scoped, tag = 'internal scratch']
  %s0 = inlined_call_operand.vmem [shape: bf16[128,128], index: 0, kind: input, shape index: {}, may-alias: {0,1}]
  %s1 = inlined_call_operand.vmem [shape: bf16[128,128], index: 1, kind: input, shape index: {}, may-alias: {0,1}]
  %s2 = inlined_call_operand.vmem [shape: s8[128,128], index: 2, kind: input, shape index: {}]
  %s3 = inlined_call_operand.vmem [shape: bf16[128,9], index: 3, kind: input, shape index: {}]
  %s4 = inlined_call_operand.vmem [shape: bf16[128,1], index: 4, kind: input, shape index: {}]
  %s5 = inlined_call_operand.vmem [shape: f32[1,128], index: 5, kind: input, shape index: {}]
  %s6 = inlined_call_operand.vmem [shape: f32[128,128], index: 6, kind: output, shape index: {}]
  %s7 = sld [smem:[#allocation0]]
  $region34: #{gnn_head_forward.3} parent=0
    _
  %s9 = ssub.s32 1, %s7
  %s10 = scalar_select 0, %s9, %s7
  // Predicated region
  $region2: #{gnn_head_forward.3} parent=0 // pred_check
    _
  $region3: #{gnn_head_forward.3} parent=0 // pred_check_branch
    %12 = sbr.rel (0) target = $region5
  $region4: #{gnn_head_forward.3} parent=0 // pred_region
    _
  $region5: #{gnn_head_forward.3} parent=0 // pred_fallthru
    _
  // Predicated region
  $region6: #{gnn_head_forward.3} parent=0 // pred_check
    _
  $region7: #{gnn_head_forward.3} parent=0 // pred_check_branch
    %14 = sbr.rel (0) target = $region9
  $region8: #{gnn_head_forward.3} parent=0 // pred_region
    _
  $region9: #{gnn_head_forward.3} parent=0 // pred_fallthru
    _
  // Predicated region
  $region10: #{gnn_head_forward.3} parent=0 // pred_check
    _
  $region11: #{gnn_head_forward.3} parent=0 // pred_check_branch
    %16 = sbr.rel (0) target = $region13
  $region12: #{gnn_head_forward.3} parent=0 // pred_region
    _
  $region13: #{gnn_head_forward.3} parent=0 // pred_fallthru
    _
  // Predicated region
  $region14: #{gnn_head_forward.3} parent=0 // pred_check
    _
  $region15: #{gnn_head_forward.3} parent=0 // pred_check_branch
    %18 = sbr.rel (0) target = $region17
  $region16: #{gnn_head_forward.3} parent=0 // pred_region
    _
  $region17: #{gnn_head_forward.3} parent=0 // pred_fallthru
    _
  // Predicated region
  $region18: #{gnn_head_forward.3} parent=0 // pred_check
    _
  $region19: #{gnn_head_forward.3} parent=0 // pred_check_branch
    %20 = sbr.rel (0) target = $region21
  $region20: #{gnn_head_forward.3} parent=0 // pred_region
    _
  $region21: #{gnn_head_forward.3} parent=0 // pred_fallthru
    _
  // Predicated region
  $region22: #{gnn_head_forward.3} parent=0 // pred_check
    _
  $region23: #{gnn_head_forward.3} parent=0 // pred_check_branch
    %22 = sbr.rel (0) target = $region25
  $region24: #{gnn_head_forward.3} parent=0 // pred_region
    _
  $region25: #{gnn_head_forward.3} parent=0 // pred_fallthru
    _
  %v26 = vld [vmem:[%s2] sm:$0x3]
  %v27 = vld [vmem:[%s2 + $0x2] sm:$0x3]
  %v28 = vld [vmem:[%s2 + $0x4] sm:$0x3]
  %v29 = vld [vmem:[%s2 + $0x6] sm:$0x3]
  %v30 = vld [vmem:[%s2 + $0x8] sm:$0x3]
  %v31 = vld [vmem:[%s2 + $0xa] sm:$0x3]
  %v32 = vld [vmem:[%s2 + $0xc] sm:$0x3]
  %v33 = vld [vmem:[%s2 + $0xe] sm:$0x3]
  %v34 = vld [vmem:[%s2 + $0x10] sm:$0x3]
  %v35 = vld [vmem:[%s2 + $0x12] sm:$0x3]
  %v36 = vld [vmem:[%s2 + $0x14] sm:$0x3]
  %v37 = vld [vmem:[%s2 + $0x16] sm:$0x3]
  %v38 = vld [vmem:[%s2 + $0x18] sm:$0x3]
  %v39 = vld [vmem:[%s2 + $0x1a] sm:$0x3]
  %v40 = vld [vmem:[%s2 + $0x1c] sm:$0x3]
  %v41 = vld [vmem:[%s2 + $0x1e] sm:$0x3]
  %vm42 = vnez %v26
  %vm43 = vnez %v27
  %vm44 = vnez %v28
  %vm45 = vnez %v29
  %vm46 = vnez %v30
  %vm47 = vnez %v31
  %vm48 = vnez %v32
  %vm49 = vnez %v33
  %vm50 = vnez %v34
  %vm51 = vnez %v35
  %vm52 = vnez %v36
  %vm53 = vnez %v37
  %vm54 = vnez %v38
  %vm55 = vnez %v39
  %vm56 = vnez %v40
  %vm57 = vnez %v41
  %v58 = vld [vmem:[%s0] sm:$0xf]
  %v59 = vld [vmem:[%s0 + $0x4] sm:$0xf]
  %v60 = vld [vmem:[%s0 + $0x8] sm:$0xf]
  %v61 = vld [vmem:[%s0 + $0xc] sm:$0xf]
  %v62 = vld [vmem:[%s0 + $0x10] sm:$0xf]
  %v63 = vld [vmem:[%s0 + $0x14] sm:$0xf]
  %v64 = vld [vmem:[%s0 + $0x18] sm:$0xf]
  %v65 = vld [vmem:[%s0 + $0x1c] sm:$0xf]
  %v66 = vld [vmem:[%s0 + $0x20] sm:$0xf]
  %v67 = vld [vmem:[%s0 + $0x24] sm:$0xf]
  %v68 = vld [vmem:[%s0 + $0x28] sm:$0xf]
  %v69 = vld [vmem:[%s0 + $0x2c] sm:$0xf]
  %v70 = vld [vmem:[%s0 + $0x30] sm:$0xf]
  %v71 = vld [vmem:[%s0 + $0x34] sm:$0xf]
  %v72 = vld [vmem:[%s0 + $0x38] sm:$0xf]
  %v73 = vld [vmem:[%s0 + $0x3c] sm:$0xf]
  %v74 = vld [vmem:[%s3] sm:$0xf]
  %v75 = vld [vmem:[%s3 + $0x4] sm:$0xf]
  %v76 = vld [vmem:[%s3 + $0x8] sm:$0xf]
  %v77 = vld [vmem:[%s3 + $0xc] sm:$0xf]
  %v78 = vld [vmem:[%s3 + $0x10] sm:$0xf]
  %v79 = vld [vmem:[%s3 + $0x14] sm:$0xf]
  %v80 = vld [vmem:[%s3 + $0x18] sm:$0xf]
  %v81 = vld [vmem:[%s3 + $0x1c] sm:$0xf]
  %v82 = vld [vmem:[%s3 + $0x20] sm:$0xf]
  %v83 = vld [vmem:[%s3 + $0x24] sm:$0xf]
  %v84 = vld [vmem:[%s3 + $0x28] sm:$0xf]
  %v85 = vld [vmem:[%s3 + $0x2c] sm:$0xf]
  %v86 = vld [vmem:[%s3 + $0x30] sm:$0xf]
  %v87 = vld [vmem:[%s3 + $0x34] sm:$0xf]
  %v88 = vld [vmem:[%s3 + $0x38] sm:$0xf]
  %v89 = vld [vmem:[%s3 + $0x3c] sm:$0xf]
  %v106 = vunpack.c.l.b16 %v58
  %v107 = vunpack.c.l.b16 %v59
  %v108 = vunpack.c.l.b16 %v60
  %v109 = vunpack.c.l.b16 %v61
  %v110 = vunpack.c.l.b16 %v62
  %v111 = vunpack.c.l.b16 %v63
  %v112 = vunpack.c.l.b16 %v64
  %v113 = vunpack.c.l.b16 %v65
  %v114 = vunpack.c.l.b16 %v66
  %v115 = vunpack.c.l.b16 %v67
  %v116 = vunpack.c.l.b16 %v68
  %v117 = vunpack.c.l.b16 %v69
  %v118 = vunpack.c.l.b16 %v70
  %v119 = vunpack.c.l.b16 %v71
  %v120 = vunpack.c.l.b16 %v72
  %v121 = vunpack.c.l.b16 %v73
  %v122 = vpack.c.b16 %v107, %v106
  %v123 = vpack.c.b16 %v109, %v108
  %v124 = vpack.c.b16 %v111, %v110
  %v125 = vpack.c.b16 %v113, %v112
  %v126 = vpack.c.b16 %v115, %v114
  %v127 = vpack.c.b16 %v117, %v116
  %v128 = vpack.c.b16 %v119, %v118
  %v129 = vpack.c.b16 %v121, %v120
  %v154 = vunpack.c.l.b16 %v74
  %v155 = vunpack.c.l.b16 %v75
  %v156 = vunpack.c.l.b16 %v76
  %v157 = vunpack.c.l.b16 %v77
  %v158 = vunpack.c.l.b16 %v78
  %v159 = vunpack.c.l.b16 %v79
  %v160 = vunpack.c.l.b16 %v80
  %v161 = vunpack.c.l.b16 %v81
  %v162 = vunpack.c.l.b16 %v82
  %v163 = vunpack.c.l.b16 %v83
  %v164 = vunpack.c.l.b16 %v84
  %v165 = vunpack.c.l.b16 %v85
  %v166 = vunpack.c.l.b16 %v86
  %v167 = vunpack.c.l.b16 %v87
  %v168 = vunpack.c.l.b16 %v88
  %v169 = vunpack.c.l.b16 %v89
  %v170 = vpack.c.b16 %v155, %v154
  %v171 = vpack.c.b16 %v157, %v156
  %v172 = vpack.c.b16 %v159, %v158
  %v173 = vpack.c.b16 %v161, %v160
  %v174 = vpack.c.b16 %v163, %v162
  %v175 = vpack.c.b16 %v165, %v164
  %v176 = vpack.c.b16 %v167, %v166
  %v177 = vpack.c.b16 %v169, %v168
  %186 = vmatprep.subr.bf16.mxu0 0
  %187 = vmatpush1.bf16.msra.mxu0 %v177
  %188 = vmatprep.subr.bf16.mxu0 0
  %189 = vmatpush1.bf16.msra.mxu0 %v176
  %190 = vmatprep.subr.bf16.mxu0 0
  %191 = vmatpush1.bf16.msra.mxu0 %v175
  %192 = vmatprep.subr.bf16.mxu0 0
  %193 = vmatpush1.bf16.msra.mxu0 %v174
  %194 = vmatprep.subr.bf16.mxu0 0
  %195 = vmatpush1.bf16.msra.mxu0 %v173
  %196 = vmatprep.subr.bf16.mxu0 0
  %197 = vmatpush1.bf16.msra.mxu0 %v172
  %198 = vmatprep.subr.bf16.mxu0 0
  %199 = vmatpush1.bf16.msra.mxu0 %v171
  %200 = vmatprep.subr.bf16.mxu0 0
  %201 = vmatpush1.bf16.msra.mxu0 %v170
  %202 = vmatprep.subr.bf16.mxu0 0
  %203 = vmatpush2.bf16.msra.mxu0 0
  %204 = vmatprep.subr.bf16.mxu0 0
  %205 = vmatpush2.bf16.msra.mxu0 0
  %206 = vmatprep.subr.bf16.mxu0 0
  %207 = vmatpush2.bf16.msra.mxu0 0
  %208 = vmatprep.subr.bf16.mxu0 0
  %209 = vmatpush2.bf16.msra.mxu0 0
  %210 = vmatprep.subr.bf16.mxu0 0
  %211 = vmatpush2.bf16.msra.mxu0 0
  %212 = vmatprep.subr.bf16.mxu0 0
  %213 = vmatpush2.bf16.msra.mxu0 0
  %214 = vmatprep.subr.bf16.mxu0 0
  %215 = vmatpush2.bf16.msra.mxu0 0
  %216 = vmatprep.subr.bf16.mxu0 0
  %217 = vmatpush2.bf16.msra.mxu0 0
  %218 = vmatprep.mubr.bf16.mxu0 0
  %219 = vmatmul.mubr.bf16.gmra.mxu0 %v122
  %v220 = vpop.f32.mrf.mxu0
  %v221 = vadd.f32 0.0, %v220
  %v222 = vpop.f32.mrf.mxu0
  %v223 = vpop.f32.mrf.mxu0
  %v224 = vadd.f32 0.0, %v223
  %v225 = vpop.f32.mrf.mxu0
  %226 = vmatprep.mubr.bf16.mxu0 0
  %227 = vmatmul.mubr.bf16.gmra.mxu0 %v123
  %v228 = vpop.f32.mrf.mxu0
  %v229 = vadd.f32 0.0, %v228
  %v230 = vpop.f32.mrf.mxu0
  %v231 = vpop.f32.mrf.mxu0
  %v232 = vadd.f32 0.0, %v231
  %v233 = vpop.f32.mrf.mxu0
  %234 = vmatprep.mubr.bf16.mxu0 0
  %235 = vmatmul.mubr.bf16.gmra.mxu0 %v124
  %v236 = vpop.f32.mrf.mxu0
  %v237 = vadd.f32 0.0, %v236
  %v238 = vpop.f32.mrf.mxu0
  %v239 = vpop.f32.mrf.mxu0
  %v240 = vadd.f32 0.0, %v239
  %v241 = vpop.f32.mrf.mxu0
  %242 = vmatprep.mubr.bf16.mxu0 0
  %243 = vmatmul.mubr.bf16.gmra.mxu0 %v125
  %v244 = vpop.f32.mrf.mxu0
  %v245 = vadd.f32 0.0, %v244
  %v246 = vpop.f32.mrf.mxu0
  %v247 = vpop.f32.mrf.mxu0
  %v248 = vadd.f32 0.0, %v247
  %v249 = vpop.f32.mrf.mxu0
  %250 = vmatprep.mubr.bf16.mxu0 0
  %251 = vmatmul.mubr.bf16.gmra.mxu0 %v126
  %v252 = vpop.f32.mrf.mxu0
  %v253 = vadd.f32 0.0, %v252
  %v254 = vpop.f32.mrf.mxu0
  %v255 = vpop.f32.mrf.mxu0
  %v256 = vadd.f32 0.0, %v255
  %v257 = vpop.f32.mrf.mxu0
  %258 = vmatprep.mubr.bf16.mxu0 0
  %259 = vmatmul.mubr.bf16.gmra.mxu0 %v127
  %v260 = vpop.f32.mrf.mxu0
  %v261 = vadd.f32 0.0, %v260
  %v262 = vpop.f32.mrf.mxu0
  %v263 = vpop.f32.mrf.mxu0
  %v264 = vadd.f32 0.0, %v263
  %v265 = vpop.f32.mrf.mxu0
  %266 = vmatprep.mubr.bf16.mxu0 0
  %267 = vmatmul.mubr.bf16.gmra.mxu0 %v128
  %v268 = vpop.f32.mrf.mxu0
  %v269 = vadd.f32 0.0, %v268
  %v270 = vpop.f32.mrf.mxu0
  %v271 = vpop.f32.mrf.mxu0
  %v272 = vadd.f32 0.0, %v271
  %v273 = vpop.f32.mrf.mxu0
  %274 = vmatprep.mubr.bf16.mxu0 0
  %275 = vmatmul.mubr.bf16.gmra.mxu0 %v129
  %v276 = vpop.f32.mrf.mxu0
  %v277 = vadd.f32 0.0, %v276
  %v278 = vpop.f32.mrf.mxu0
  %v279 = vpop.f32.mrf.mxu0
  %v280 = vadd.f32 0.0, %v279
  %v281 = vpop.f32.mrf.mxu0
  %282 = vdwg.mxu0
  %299 = vrot.lane.b32.xlu0 %v221, 120
  %v300 = vpop.permute.xlu0 %299
  %301 = vrot.lane.b32.xlu0 %v224, 120
  %v302 = vpop.permute.xlu0 %301
  %303 = vrot.lane.b32.xlu0 %v229, 120
  %v304 = vpop.permute.xlu0 %303
  %305 = vrot.lane.b32.xlu0 %v232, 120
  %v306 = vpop.permute.xlu0 %305
  %307 = vrot.lane.b32.xlu0 %v237, 120
  %v308 = vpop.permute.xlu0 %307
  %309 = vrot.lane.b32.xlu0 %v240, 120
  %v310 = vpop.permute.xlu0 %309
  %311 = vrot.lane.b32.xlu0 %v245, 120
  %v312 = vpop.permute.xlu0 %311
  %313 = vrot.lane.b32.xlu0 %v248, 120
  %v314 = vpop.permute.xlu0 %313
  %315 = vrot.lane.b32.xlu0 %v253, 120
  %v316 = vpop.permute.xlu0 %315
  %317 = vrot.lane.b32.xlu0 %v256, 120
  %v318 = vpop.permute.xlu0 %317
  %319 = vrot.lane.b32.xlu0 %v261, 120
  %v320 = vpop.permute.xlu0 %319
  %321 = vrot.lane.b32.xlu0 %v264, 120
  %v322 = vpop.permute.xlu0 %321
  %323 = vrot.lane.b32.xlu0 %v269, 120
  %v324 = vpop.permute.xlu0 %323
  %325 = vrot.lane.b32.xlu0 %v272, 120
  %v326 = vpop.permute.xlu0 %325
  %327 = vrot.lane.b32.xlu0 %v277, 120
  %v328 = vpop.permute.xlu0 %327
  %329 = vrot.lane.b32.xlu0 %v280, 120
  %v330 = vpop.permute.xlu0 %329
  %347 = vxpose.xlu0.b32.start [1/16] %v300, 128
  %348 = vxpose.xlu0.b32.cont [2/16] %v302, 128
  %349 = vxpose.xlu0.b32.cont [3/16] %v304, 128
  %350 = vxpose.xlu0.b32.cont [4/16] %v306, 128
  %351 = vxpose.xlu0.b32.cont [5/16] %v308, 128
  %352 = vxpose.xlu0.b32.cont [6/16] %v310, 128
  %353 = vxpose.xlu0.b32.cont [7/16] %v312, 128
  %354 = vxpose.xlu0.b32.cont [8/16] %v314, 128
  %355 = vxpose.xlu0.b32.cont [9/16] %v316, 128
  %356 = vxpose.xlu0.b32.cont [10/16] %v318, 128
  %357 = vxpose.xlu0.b32.cont [11/16] %v320, 128
  %358 = vxpose.xlu0.b32.cont [12/16] %v322, 128
  %359 = vxpose.xlu0.b32.cont [13/16] %v324, 128
  %360 = vxpose.xlu0.b32.cont [14/16] %v326, 128
  %361 = vxpose.xlu0.b32.cont [15/16] %v328, 128
  %362 = vxpose.xlu0.b32.end [16/16] %v330, 128
  %v363 = vpop.trf.xlu0
  %v364 = vpop.trf.xlu0
  %v365 = vpop.trf.xlu0
  %v366 = vpop.trf.xlu0
  %v367 = vpop.trf.xlu0
  %v368 = vpop.trf.xlu0
  %v369 = vpop.trf.xlu0
  %v370 = vpop.trf.xlu0
  %v371 = vpop.trf.xlu0
  %v372 = vpop.trf.xlu0
  %v373 = vpop.trf.xlu0
  %v374 = vpop.trf.xlu0
  %v375 = vpop.trf.xlu0
  %v376 = vpop.trf.xlu0
  %v377 = vpop.trf.xlu0
  %v378 = vpop.trf.xlu0
  %v379 = vpack.c.bf16 %v224, %v221
  %v380 = vpack.c.bf16 %v232, %v229
  %v381 = vpack.c.bf16 %v240, %v237
  %v382 = vpack.c.bf16 %v248, %v245
  %v383 = vpack.c.bf16 %v256, %v253
  %v384 = vpack.c.bf16 %v264, %v261
  %v385 = vpack.c.bf16 %v272, %v269
  %v386 = vpack.c.bf16 %v280, %v277
  %v387 = vld [vmem:[%s1] sm:$0xf]
  %v388 = vld [vmem:[%s1 + $0x4] sm:$0xf]
  %v389 = vld [vmem:[%s1 + $0x8] sm:$0xf]
  %v390 = vld [vmem:[%s1 + $0xc] sm:$0xf]
  %v391 = vld [vmem:[%s1 + $0x10] sm:$0xf]
  %v392 = vld [vmem:[%s1 + $0x14] sm:$0xf]
  %v393 = vld [vmem:[%s1 + $0x18] sm:$0xf]
  %v394 = vld [vmem:[%s1 + $0x1c] sm:$0xf]
  %v395 = vld [vmem:[%s1 + $0x20] sm:$0xf]
  %v396 = vld [vmem:[%s1 + $0x24] sm:$0xf]
  %v397 = vld [vmem:[%s1 + $0x28] sm:$0xf]
  %v398 = vld [vmem:[%s1 + $0x2c] sm:$0xf]
  %v399 = vld [vmem:[%s1 + $0x30] sm:$0xf]
  %v400 = vld [vmem:[%s1 + $0x34] sm:$0xf]
  %v401 = vld [vmem:[%s1 + $0x38] sm:$0xf]
  %v402 = vld [vmem:[%s1 + $0x3c] sm:$0xf]
  %v403 = vld [vmem:[%s4] sm:$0xf]
  %v404 = vld [vmem:[%s4 + $0x4] sm:$0xf]
  %v405 = vld [vmem:[%s4 + $0x8] sm:$0xf]
  %v406 = vld [vmem:[%s4 + $0xc] sm:$0xf]
  %v407 = vld [vmem:[%s4 + $0x10] sm:$0xf]
  %v408 = vld [vmem:[%s4 + $0x14] sm:$0xf]
  %v409 = vld [vmem:[%s4 + $0x18] sm:$0xf]
  %v410 = vld [vmem:[%s4 + $0x1c] sm:$0xf]
  %v411 = vld [vmem:[%s4 + $0x20] sm:$0xf]
  %v412 = vld [vmem:[%s4 + $0x24] sm:$0xf]
  %v413 = vld [vmem:[%s4 + $0x28] sm:$0xf]
  %v414 = vld [vmem:[%s4 + $0x2c] sm:$0xf]
  %v415 = vld [vmem:[%s4 + $0x30] sm:$0xf]
  %v416 = vld [vmem:[%s4 + $0x34] sm:$0xf]
  %v417 = vld [vmem:[%s4 + $0x38] sm:$0xf]
  %v418 = vld [vmem:[%s4 + $0x3c] sm:$0xf]
  %v435 = vunpack.c.l.b16 %v387
  %v436 = vunpack.c.l.b16 %v388
  %v437 = vunpack.c.l.b16 %v389
  %v438 = vunpack.c.l.b16 %v390
  %v439 = vunpack.c.l.b16 %v391
  %v440 = vunpack.c.l.b16 %v392
  %v441 = vunpack.c.l.b16 %v393
  %v442 = vunpack.c.l.b16 %v394
  %v443 = vunpack.c.l.b16 %v395
  %v444 = vunpack.c.l.b16 %v396
  %v445 = vunpack.c.l.b16 %v397
  %v446 = vunpack.c.l.b16 %v398
  %v447 = vunpack.c.l.b16 %v399
  %v448 = vunpack.c.l.b16 %v400
  %v449 = vunpack.c.l.b16 %v401
  %v450 = vunpack.c.l.b16 %v402
  %v451 = vpack.c.b16 %v436, %v435
  %v452 = vpack.c.b16 %v438, %v437
  %v453 = vpack.c.b16 %v440, %v439
  %v454 = vpack.c.b16 %v442, %v441
  %v455 = vpack.c.b16 %v444, %v443
  %v456 = vpack.c.b16 %v446, %v445
  %v457 = vpack.c.b16 %v448, %v447
  %v458 = vpack.c.b16 %v450, %v449
  %v483 = vunpack.c.l.b16 %v403
  %v484 = vunpack.c.l.b16 %v404
  %v485 = vunpack.c.l.b16 %v405
  %v486 = vunpack.c.l.b16 %v406
  %v487 = vunpack.c.l.b16 %v407
  %v488 = vunpack.c.l.b16 %v408
  %v489 = vunpack.c.l.b16 %v409
  %v490 = vunpack.c.l.b16 %v410
  %v491 = vunpack.c.l.b16 %v411
  %v492 = vunpack.c.l.b16 %v412
  %v493 = vunpack.c.l.b16 %v413
  %v494 = vunpack.c.l.b16 %v414
  %v495 = vunpack.c.l.b16 %v415
  %v496 = vunpack.c.l.b16 %v416
  %v497 = vunpack.c.l.b16 %v417
  %v498 = vunpack.c.l.b16 %v418
  %v499 = vpack.c.b16 %v484, %v483
  %v500 = vpack.c.b16 %v486, %v485
  %v501 = vpack.c.b16 %v488, %v487
  %v502 = vpack.c.b16 %v490, %v489
  %v503 = vpack.c.b16 %v492, %v491
  %v504 = vpack.c.b16 %v494, %v493
  %v505 = vpack.c.b16 %v496, %v495
  %v506 = vpack.c.b16 %v498, %v497
  %515 = vmatprep.subr.bf16.mxu0 0
  %516 = vmatpush1.bf16.msra.mxu0 %v506
  %517 = vmatprep.subr.bf16.mxu0 0
  %518 = vmatpush1.bf16.msra.mxu0 %v505
  %519 = vmatprep.subr.bf16.mxu0 0
  %520 = vmatpush1.bf16.msra.mxu0 %v504
  %521 = vmatprep.subr.bf16.mxu0 0
  %522 = vmatpush1.bf16.msra.mxu0 %v503
  %523 = vmatprep.subr.bf16.mxu0 0
  %524 = vmatpush1.bf16.msra.mxu0 %v502
  %525 = vmatprep.subr.bf16.mxu0 0
  %526 = vmatpush1.bf16.msra.mxu0 %v501
  %527 = vmatprep.subr.bf16.mxu0 0
  %528 = vmatpush1.bf16.msra.mxu0 %v500
  %529 = vmatprep.subr.bf16.mxu0 0
  %530 = vmatpush1.bf16.msra.mxu0 %v499
  %531 = vmatprep.subr.bf16.mxu0 0
  %532 = vmatpush2.bf16.msra.mxu0 0
  %533 = vmatprep.subr.bf16.mxu0 0
  %534 = vmatpush2.bf16.msra.mxu0 0
  %535 = vmatprep.subr.bf16.mxu0 0
  %536 = vmatpush2.bf16.msra.mxu0 0
  %537 = vmatprep.subr.bf16.mxu0 0
  %538 = vmatpush2.bf16.msra.mxu0 0
  %539 = vmatprep.subr.bf16.mxu0 0
  %540 = vmatpush2.bf16.msra.mxu0 0
  %541 = vmatprep.subr.bf16.mxu0 0
  %542 = vmatpush2.bf16.msra.mxu0 0
  %543 = vmatprep.subr.bf16.mxu0 0
  %544 = vmatpush2.bf16.msra.mxu0 0
  %545 = vmatprep.subr.bf16.mxu0 0
  %546 = vmatpush2.bf16.msra.mxu0 0
  %547 = vmatprep.mubr.bf16.mxu0 0
  %548 = vmatmul.mubr.bf16.gmra.mxu0 %v451
  %v549 = vpop.f32.mrf.mxu0
  %v550 = vadd.f32 0.0, %v549
  %v551 = vpop.f32.mrf.mxu0
  %v552 = vpop.f32.mrf.mxu0
  %v553 = vadd.f32 0.0, %v552
  %v554 = vpop.f32.mrf.mxu0
  %555 = vmatprep.mubr.bf16.mxu0 0
  %556 = vmatmul.mubr.bf16.gmra.mxu0 %v452
  %v557 = vpop.f32.mrf.mxu0
  %v558 = vadd.f32 0.0, %v557
  %v559 = vpop.f32.mrf.mxu0
  %v560 = vpop.f32.mrf.mxu0
  %v561 = vadd.f32 0.0, %v560
  %v562 = vpop.f32.mrf.mxu0
  %563 = vmatprep.mubr.bf16.mxu0 0
  %564 = vmatmul.mubr.bf16.gmra.mxu0 %v453
  %v565 = vpop.f32.mrf.mxu0
  %v566 = vadd.f32 0.0, %v565
  %v567 = vpop.f32.mrf.mxu0
  %v568 = vpop.f32.mrf.mxu0
  %v569 = vadd.f32 0.0, %v568
  %v570 = vpop.f32.mrf.mxu0
  %571 = vmatprep.mubr.bf16.mxu0 0
  %572 = vmatmul.mubr.bf16.gmra.mxu0 %v454
  %v573 = vpop.f32.mrf.mxu0
  %v574 = vadd.f32 0.0, %v573
  %v575 = vpop.f32.mrf.mxu0
  %v576 = vpop.f32.mrf.mxu0
  %v577 = vadd.f32 0.0, %v576
  %v578 = vpop.f32.mrf.mxu0
  %579 = vmatprep.mubr.bf16.mxu0 0
  %580 = vmatmul.mubr.bf16.gmra.mxu0 %v455
  %v581 = vpop.f32.mrf.mxu0
  %v582 = vadd.f32 0.0, %v581
  %v583 = vpop.f32.mrf.mxu0
  %v584 = vpop.f32.mrf.mxu0
  %v585 = vadd.f32 0.0, %v584
  %v586 = vpop.f32.mrf.mxu0
  %587 = vmatprep.mubr.bf16.mxu0 0
  %588 = vmatmul.mubr.bf16.gmra.mxu0 %v456
  %v589 = vpop.f32.mrf.mxu0
  %v590 = vadd.f32 0.0, %v589
  %v591 = vpop.f32.mrf.mxu0
  %v592 = vpop.f32.mrf.mxu0
  %v593 = vadd.f32 0.0, %v592
  %v594 = vpop.f32.mrf.mxu0
  %595 = vmatprep.mubr.bf16.mxu0 0
  %596 = vmatmul.mubr.bf16.gmra.mxu0 %v457
  %v597 = vpop.f32.mrf.mxu0
  %v598 = vadd.f32 0.0, %v597
  %v599 = vpop.f32.mrf.mxu0
  %v600 = vpop.f32.mrf.mxu0
  %v601 = vadd.f32 0.0, %v600
  %v602 = vpop.f32.mrf.mxu0
  %603 = vmatprep.mubr.bf16.mxu0 0
  %604 = vmatmul.mubr.bf16.gmra.mxu0 %v458
  %v605 = vpop.f32.mrf.mxu0
  %v606 = vadd.f32 0.0, %v605
  %v607 = vpop.f32.mrf.mxu0
  %v608 = vpop.f32.mrf.mxu0
  %v609 = vadd.f32 0.0, %v608
  %v610 = vpop.f32.mrf.mxu0
  %611 = vdwg.mxu0
  %613 = vset.pattern.permute.xlu0 0
  %614 = vperm.xlu0 %613, %v550
  %v615 = vpop.permute.xlu0 %614
  %618 = vset.pattern.permute.xlu0 0
  %619 = vperm.xlu0 %618, %v553
  %v620 = vpop.permute.xlu0 %619
  %623 = vset.pattern.permute.xlu0 0
  %624 = vperm.xlu0 %623, %v558
  %v625 = vpop.permute.xlu0 %624
  %628 = vset.pattern.permute.xlu0 0
  %629 = vperm.xlu0 %628, %v561
  %v630 = vpop.permute.xlu0 %629
  %633 = vset.pattern.permute.xlu0 0
  %634 = vperm.xlu0 %633, %v566
  %v635 = vpop.permute.xlu0 %634
  %638 = vset.pattern.permute.xlu0 0
  %639 = vperm.xlu0 %638, %v569
  %v640 = vpop.permute.xlu0 %639
  %643 = vset.pattern.permute.xlu0 0
  %644 = vperm.xlu0 %643, %v574
  %v645 = vpop.permute.xlu0 %644
  %648 = vset.pattern.permute.xlu0 0
  %649 = vperm.xlu0 %648, %v577
  %v650 = vpop.permute.xlu0 %649
  %653 = vset.pattern.permute.xlu0 0
  %654 = vperm.xlu0 %653, %v582
  %v655 = vpop.permute.xlu0 %654
  %658 = vset.pattern.permute.xlu0 0
  %659 = vperm.xlu0 %658, %v585
  %v660 = vpop.permute.xlu0 %659
  %663 = vset.pattern.permute.xlu0 0
  %664 = vperm.xlu0 %663, %v590
  %v665 = vpop.permute.xlu0 %664
  %668 = vset.pattern.permute.xlu0 0
  %669 = vperm.xlu0 %668, %v593
  %v670 = vpop.permute.xlu0 %669
  %673 = vset.pattern.permute.xlu0 0
  %674 = vperm.xlu0 %673, %v598
  %v675 = vpop.permute.xlu0 %674
  %678 = vset.pattern.permute.xlu0 0
  %679 = vperm.xlu0 %678, %v601
  %v680 = vpop.permute.xlu0 %679
  %683 = vset.pattern.permute.xlu0 0
  %684 = vperm.xlu0 %683, %v606
  %v685 = vpop.permute.xlu0 %684
  %688 = vset.pattern.permute.xlu0 0
  %689 = vperm.xlu0 %688, %v609
  %v690 = vpop.permute.xlu0 %689
  %v692 = vlaneseq
  %v693 = vshrl.u32 %v692, 7
  %v694 = vsub.s32 0, %v693
  %v695 = vrot.slane %v363, %v694
  %v696 = vadd.f32 %v615, %v695
  %v697 = vadd.f32 %v620, %v695
  %v698 = vadd.f32 %v625, %v695
  %v699 = vadd.f32 %v630, %v695
  %v700 = vadd.f32 %v635, %v695
  %v701 = vadd.f32 %v640, %v695
  %v702 = vadd.f32 %v645, %v695
  %v703 = vadd.f32 %v650, %v695
  %v704 = vadd.f32 %v655, %v695
  %v705 = vadd.f32 %v660, %v695
  %v706 = vadd.f32 %v665, %v695
  %v707 = vadd.f32 %v670, %v695
  %v708 = vadd.f32 %v675, %v695
  %v709 = vadd.f32 %v680, %v695
  %v710 = vadd.f32 %v685, %v695
  %v711 = vadd.f32 %v690, %v695
  %vm712 = vcmp.gt.f32.partialorder %v696, 0.0
  %vm713 = vcmp.gt.f32.partialorder %v697, 0.0
  %vm714 = vcmp.gt.f32.partialorder %v698, 0.0
  %vm715 = vcmp.gt.f32.partialorder %v699, 0.0
  %vm716 = vcmp.gt.f32.partialorder %v700, 0.0
  %vm717 = vcmp.gt.f32.partialorder %v701, 0.0
  %vm718 = vcmp.gt.f32.partialorder %v702, 0.0
  %vm719 = vcmp.gt.f32.partialorder %v703, 0.0
  %vm720 = vcmp.gt.f32.partialorder %v704, 0.0
  %vm721 = vcmp.gt.f32.partialorder %v705, 0.0
  %vm722 = vcmp.gt.f32.partialorder %v706, 0.0
  %vm723 = vcmp.gt.f32.partialorder %v707, 0.0
  %vm724 = vcmp.gt.f32.partialorder %v708, 0.0
  %vm725 = vcmp.gt.f32.partialorder %v709, 0.0
  %vm726 = vcmp.gt.f32.partialorder %v710, 0.0
  %vm727 = vcmp.gt.f32.partialorder %v711, 0.0
  %v728 = vmul.f32 %v696, 0.2
  %v729 = vmul.f32 %v697, 0.2
  %v730 = vmul.f32 %v698, 0.2
  %v731 = vmul.f32 %v699, 0.2
  %v732 = vmul.f32 %v700, 0.2
  %v733 = vmul.f32 %v701, 0.2
  %v734 = vmul.f32 %v702, 0.2
  %v735 = vmul.f32 %v703, 0.2
  %v736 = vmul.f32 %v704, 0.2
  %v737 = vmul.f32 %v705, 0.2
  %v738 = vmul.f32 %v706, 0.2
  %v739 = vmul.f32 %v707, 0.2
  %v740 = vmul.f32 %v708, 0.2
  %v741 = vmul.f32 %v709, 0.2
  %v742 = vmul.f32 %v710, 0.2
  %v743 = vmul.f32 %v711, 0.2
  %v744 = vsel %vm712, %v696, %v728
  %v745 = vsel %vm713, %v697, %v729
  %v746 = vsel %vm714, %v698, %v730
  %v747 = vsel %vm715, %v699, %v731
  %v748 = vsel %vm716, %v700, %v732
  %v749 = vsel %vm717, %v701, %v733
  %v750 = vsel %vm718, %v702, %v734
  %v751 = vsel %vm719, %v703, %v735
  %v752 = vsel %vm720, %v704, %v736
  %v753 = vsel %vm721, %v705, %v737
  %v754 = vsel %vm722, %v706, %v738
  %v755 = vsel %vm723, %v707, %v739
  %v756 = vsel %vm724, %v708, %v740
  %v757 = vsel %vm725, %v709, %v741
  %v758 = vsel %vm726, %v710, %v742
  %v759 = vsel %vm727, %v711, %v743
  %v760 = vsel %vm42, 16843009, 0
  %v761 = vsel %vm43, 16843009, 0
  %v762 = vsel %vm44, 16843009, 0
  %v763 = vsel %vm45, 16843009, 0
  %v764 = vsel %vm46, 16843009, 0
  %v765 = vsel %vm47, 16843009, 0
  %v766 = vsel %vm48, 16843009, 0
  %v767 = vsel %vm49, 16843009, 0
  %v768 = vsel %vm50, 16843009, 0
  %v769 = vsel %vm51, 16843009, 0
  %v770 = vsel %vm52, 16843009, 0
  %v771 = vsel %vm53, 16843009, 0
  %v772 = vsel %vm54, 16843009, 0
  %v773 = vsel %vm55, 16843009, 0
  %v774 = vsel %vm56, 16843009, 0
  %v775 = vsel %vm57, 16843009, 0
  %v776 = vunpack.c.0.s8 %v760
  %v777 = vunpack.c.0.s8 %v761
  %v778 = vunpack.c.0.s8 %v762
  %v779 = vunpack.c.0.s8 %v763
  %v780 = vunpack.c.0.s8 %v764
  %v781 = vunpack.c.0.s8 %v765
  %v782 = vunpack.c.0.s8 %v766
  %v783 = vunpack.c.0.s8 %v767
  %v784 = vunpack.c.0.s8 %v768
  %v785 = vunpack.c.0.s8 %v769
  %v786 = vunpack.c.0.s8 %v770
  %v787 = vunpack.c.0.s8 %v771
  %v788 = vunpack.c.0.s8 %v772
  %v789 = vunpack.c.0.s8 %v773
  %v790 = vunpack.c.0.s8 %v774
  %v791 = vunpack.c.0.s8 %v775
  %vm792 = vcmp.ne.s32.totalorder %v776, 0
  %vm793 = vcmp.ne.s32.totalorder %v777, 0
  %vm794 = vcmp.ne.s32.totalorder %v778, 0
  %vm795 = vcmp.ne.s32.totalorder %v779, 0
  %vm796 = vcmp.ne.s32.totalorder %v780, 0
  %vm797 = vcmp.ne.s32.totalorder %v781, 0
  %vm798 = vcmp.ne.s32.totalorder %v782, 0
  %vm799 = vcmp.ne.s32.totalorder %v783, 0
  %vm800 = vcmp.ne.s32.totalorder %v784, 0
  %vm801 = vcmp.ne.s32.totalorder %v785, 0
  %vm802 = vcmp.ne.s32.totalorder %v786, 0
  %vm803 = vcmp.ne.s32.totalorder %v787, 0
  %vm804 = vcmp.ne.s32.totalorder %v788, 0
  %vm805 = vcmp.ne.s32.totalorder %v789, 0
  %vm806 = vcmp.ne.s32.totalorder %v790, 0
  %vm807 = vcmp.ne.s32.totalorder %v791, 0
  %v808 = vsel %vm792, %v744, -1e+30
  %v809 = vsel %vm793, %v745, -1e+30
  %v810 = vsel %vm794, %v746, -1e+30
  %v811 = vsel %vm795, %v747, -1e+30
  %v812 = vsel %vm796, %v748, -1e+30
  %v813 = vsel %vm797, %v749, -1e+30
  %v814 = vsel %vm798, %v750, -1e+30
  %v815 = vsel %vm799, %v751, -1e+30
  %v816 = vsel %vm800, %v752, -1e+30
  %v817 = vsel %vm801, %v753, -1e+30
  %v818 = vsel %vm802, %v754, -1e+30
  %v819 = vsel %vm803, %v755, -1e+30
  %v820 = vsel %vm804, %v756, -1e+30
  %v821 = vsel %vm805, %v757, -1e+30
  %v822 = vsel %vm806, %v758, -1e+30
  %v823 = vsel %vm807, %v759, -1e+30
  %824 = vmax.xlane.f32.xlu0 %v808
  %v825 = vpop.xlane.xlu0 %824
  %826 = vmax.xlane.f32.xlu0 %v809
  %v827 = vpop.xlane.xlu0 %826
  %828 = vmax.xlane.f32.xlu0 %v810
  %v829 = vpop.xlane.xlu0 %828
  %830 = vmax.xlane.f32.xlu0 %v811
  %v831 = vpop.xlane.xlu0 %830
  %832 = vmax.xlane.f32.xlu0 %v812
  %v833 = vpop.xlane.xlu0 %832
  %834 = vmax.xlane.f32.xlu0 %v813
  %v835 = vpop.xlane.xlu0 %834
  %836 = vmax.xlane.f32.xlu0 %v814
  %v837 = vpop.xlane.xlu0 %836
  %838 = vmax.xlane.f32.xlu0 %v815
  %v839 = vpop.xlane.xlu0 %838
  %840 = vmax.xlane.f32.xlu0 %v816
  %v841 = vpop.xlane.xlu0 %840
  %842 = vmax.xlane.f32.xlu0 %v817
  %v843 = vpop.xlane.xlu0 %842
  %844 = vmax.xlane.f32.xlu0 %v818
  %v845 = vpop.xlane.xlu0 %844
  %846 = vmax.xlane.f32.xlu0 %v819
  %v847 = vpop.xlane.xlu0 %846
  %848 = vmax.xlane.f32.xlu0 %v820
  %v849 = vpop.xlane.xlu0 %848
  %850 = vmax.xlane.f32.xlu0 %v821
  %v851 = vpop.xlane.xlu0 %850
  %852 = vmax.xlane.f32.xlu0 %v822
  %v853 = vpop.xlane.xlu0 %852
  %854 = vmax.xlane.f32.xlu0 %v823
  %v855 = vpop.xlane.xlu0 %854
  %v856 = vsub.f32 %v808, %v825
  %v857 = vsub.f32 %v809, %v827
  %v858 = vsub.f32 %v810, %v829
  %v859 = vsub.f32 %v811, %v831
  %v860 = vsub.f32 %v812, %v833
  %v861 = vsub.f32 %v813, %v835
  %v862 = vsub.f32 %v814, %v837
  %v863 = vsub.f32 %v815, %v839
  %v864 = vsub.f32 %v816, %v841
  %v865 = vsub.f32 %v817, %v843
  %v866 = vsub.f32 %v818, %v845
  %v867 = vsub.f32 %v819, %v847
  %v868 = vsub.f32 %v820, %v849
  %v869 = vsub.f32 %v821, %v851
  %v870 = vsub.f32 %v822, %v853
  %v871 = vsub.f32 %v823, %v855
  %v872 = vmul.f32 %v856, 1.442695
  %v873 = vpow.pop %v872
  %v874 = vmul.f32 %v857, 1.442695
  %v875 = vpow.pop %v874
  %v876 = vmul.f32 %v858, 1.442695
  %v877 = vpow.pop %v876
  %v878 = vmul.f32 %v859, 1.442695
  %v879 = vpow.pop %v878
  %v880 = vmul.f32 %v860, 1.442695
  %v881 = vpow.pop %v880
  %v882 = vmul.f32 %v861, 1.442695
  %v883 = vpow.pop %v882
  %v884 = vmul.f32 %v862, 1.442695
  %v885 = vpow.pop %v884
  %v886 = vmul.f32 %v863, 1.442695
  %v887 = vpow.pop %v886
  %v888 = vmul.f32 %v864, 1.442695
  %v889 = vpow.pop %v888
  %v890 = vmul.f32 %v865, 1.442695
  %v891 = vpow.pop %v890
  %v892 = vmul.f32 %v866, 1.442695
  %v893 = vpow.pop %v892
  %v894 = vmul.f32 %v867, 1.442695
  %v895 = vpow.pop %v894
  %v896 = vmul.f32 %v868, 1.442695
  %v897 = vpow.pop %v896
  %v898 = vmul.f32 %v869, 1.442695
  %v899 = vpow.pop %v898
  %v900 = vmul.f32 %v870, 1.442695
  %v901 = vpow.pop %v900
  %v902 = vmul.f32 %v871, 1.442695
  %v903 = vpow.pop %v902
  %904 = vadd.xlane.f32.xlu0 %v873
  %v905 = vpop.xlane.xlu0 %904
  %906 = vadd.xlane.f32.xlu0 %v875
  %v907 = vpop.xlane.xlu0 %906
  %908 = vadd.xlane.f32.xlu0 %v877
  %v909 = vpop.xlane.xlu0 %908
  %910 = vadd.xlane.f32.xlu0 %v879
  %v911 = vpop.xlane.xlu0 %910
  %912 = vadd.xlane.f32.xlu0 %v881
  %v913 = vpop.xlane.xlu0 %912
  %914 = vadd.xlane.f32.xlu0 %v883
  %v915 = vpop.xlane.xlu0 %914
  %916 = vadd.xlane.f32.xlu0 %v885
  %v917 = vpop.xlane.xlu0 %916
  %918 = vadd.xlane.f32.xlu0 %v887
  %v919 = vpop.xlane.xlu0 %918
  %920 = vadd.xlane.f32.xlu0 %v889
  %v921 = vpop.xlane.xlu0 %920
  %922 = vadd.xlane.f32.xlu0 %v891
  %v923 = vpop.xlane.xlu0 %922
  %924 = vadd.xlane.f32.xlu0 %v893
  %v925 = vpop.xlane.xlu0 %924
  %926 = vadd.xlane.f32.xlu0 %v895
  %v927 = vpop.xlane.xlu0 %926
  %928 = vadd.xlane.f32.xlu0 %v897
  %v929 = vpop.xlane.xlu0 %928
  %930 = vadd.xlane.f32.xlu0 %v899
  %v931 = vpop.xlane.xlu0 %930
  %932 = vadd.xlane.f32.xlu0 %v901
  %v933 = vpop.xlane.xlu0 %932
  %934 = vadd.xlane.f32.xlu0 %v903
  %v935 = vpop.xlane.xlu0 %934
  %v936 = vpack.c.bf16 %v875, %v873
  %v937 = vpack.c.bf16 %v879, %v877
  %v938 = vpack.c.bf16 %v883, %v881
  %v939 = vpack.c.bf16 %v887, %v885
  %v940 = vpack.c.bf16 %v891, %v889
  %v941 = vpack.c.bf16 %v895, %v893
  %v942 = vpack.c.bf16 %v899, %v897
  %v943 = vpack.c.bf16 %v903, %v901
  %944 = vmatprep.subr.bf16.mxu0 0
  %945 = vmatpush1.bf16.msra.mxu0 %v386
  %946 = vmatprep.subr.bf16.mxu0 0
  %947 = vmatpush1.bf16.msra.mxu0 %v385
  %948 = vmatprep.subr.bf16.mxu0 0
  %949 = vmatpush1.bf16.msra.mxu0 %v384
  %950 = vmatprep.subr.bf16.mxu0 0
  %951 = vmatpush1.bf16.msra.mxu0 %v383
  %952 = vmatprep.subr.bf16.mxu0 0
  %953 = vmatpush1.bf16.msra.mxu0 %v382
  %954 = vmatprep.subr.bf16.mxu0 0
  %955 = vmatpush1.bf16.msra.mxu0 %v381
  %956 = vmatprep.subr.bf16.mxu0 0
  %957 = vmatpush1.bf16.msra.mxu0 %v380
  %958 = vmatprep.subr.bf16.mxu0 0
  %959 = vmatpush1.bf16.msra.mxu0 %v379
  %960 = vmatprep.subr.bf16.mxu0 0
  %961 = vmatpush2.bf16.msra.mxu0 0
  %962 = vmatprep.subr.bf16.mxu0 0
  %963 = vmatpush2.bf16.msra.mxu0 0
  %964 = vmatprep.subr.bf16.mxu0 0
  %965 = vmatpush2.bf16.msra.mxu0 0
  %966 = vmatprep.subr.bf16.mxu0 0
  %967 = vmatpush2.bf16.msra.mxu0 0
  %968 = vmatprep.subr.bf16.mxu0 0
  %969 = vmatpush2.bf16.msra.mxu0 0
  %970 = vmatprep.subr.bf16.mxu0 0
  %971 = vmatpush2.bf16.msra.mxu0 0
  %972 = vmatprep.subr.bf16.mxu0 0
  %973 = vmatpush2.bf16.msra.mxu0 0
  %974 = vmatprep.subr.bf16.mxu0 0
  %975 = vmatpush2.bf16.msra.mxu0 0
  %976 = vmatprep.mubr.bf16.mxu0 0
  %977 = vmatmul.mubr.bf16.gmra.mxu0 %v936
  %v978 = vpop.f32.mrf.mxu0
  %v979 = vadd.f32 0.0, %v978
  %v980 = vpop.f32.mrf.mxu0
  %v981 = vpop.f32.mrf.mxu0
  %v982 = vadd.f32 0.0, %v981
  %v983 = vpop.f32.mrf.mxu0
  %984 = vmatprep.mubr.bf16.mxu0 0
  %985 = vmatmul.mubr.bf16.gmra.mxu0 %v937
  %v986 = vpop.f32.mrf.mxu0
  %v987 = vadd.f32 0.0, %v986
  %v988 = vpop.f32.mrf.mxu0
  %v989 = vpop.f32.mrf.mxu0
  %v990 = vadd.f32 0.0, %v989
  %v991 = vpop.f32.mrf.mxu0
  %992 = vmatprep.mubr.bf16.mxu0 0
  %993 = vmatmul.mubr.bf16.gmra.mxu0 %v938
  %v994 = vpop.f32.mrf.mxu0
  %v995 = vadd.f32 0.0, %v994
  %v996 = vpop.f32.mrf.mxu0
  %v997 = vpop.f32.mrf.mxu0
  %v998 = vadd.f32 0.0, %v997
  %v999 = vpop.f32.mrf.mxu0
  %1000 = vmatprep.mubr.bf16.mxu0 0
  %1001 = vmatmul.mubr.bf16.gmra.mxu0 %v939
  %v1002 = vpop.f32.mrf.mxu0
  %v1003 = vadd.f32 0.0, %v1002
  %v1004 = vpop.f32.mrf.mxu0
  %v1005 = vpop.f32.mrf.mxu0
  %v1006 = vadd.f32 0.0, %v1005
  %v1007 = vpop.f32.mrf.mxu0
  %1008 = vmatprep.mubr.bf16.mxu0 0
  %1009 = vmatmul.mubr.bf16.gmra.mxu0 %v940
  %v1010 = vpop.f32.mrf.mxu0
  %v1011 = vadd.f32 0.0, %v1010
  %v1012 = vpop.f32.mrf.mxu0
  %v1013 = vpop.f32.mrf.mxu0
  %v1014 = vadd.f32 0.0, %v1013
  %v1015 = vpop.f32.mrf.mxu0
  %1016 = vmatprep.mubr.bf16.mxu0 0
  %1017 = vmatmul.mubr.bf16.gmra.mxu0 %v941
  %v1018 = vpop.f32.mrf.mxu0
  %v1019 = vadd.f32 0.0, %v1018
  %v1020 = vpop.f32.mrf.mxu0
  %v1021 = vpop.f32.mrf.mxu0
  %v1022 = vadd.f32 0.0, %v1021
  %v1023 = vpop.f32.mrf.mxu0
  %1024 = vmatprep.mubr.bf16.mxu0 0
  %1025 = vmatmul.mubr.bf16.gmra.mxu0 %v942
  %v1026 = vpop.f32.mrf.mxu0
  %v1027 = vadd.f32 0.0, %v1026
  %v1028 = vpop.f32.mrf.mxu0
  %v1029 = vpop.f32.mrf.mxu0
  %v1030 = vadd.f32 0.0, %v1029
  %v1031 = vpop.f32.mrf.mxu0
  %1032 = vmatprep.mubr.bf16.mxu0 0
  %1033 = vmatmul.mubr.bf16.gmra.mxu0 %v943
  %v1034 = vpop.f32.mrf.mxu0
  %v1035 = vadd.f32 0.0, %v1034
  %v1036 = vpop.f32.mrf.mxu0
  %v1037 = vpop.f32.mrf.mxu0
  %v1038 = vadd.f32 0.0, %v1037
  %v1039 = vpop.f32.mrf.mxu0
  %1040 = vdwg.mxu0
  %v1041 = vrcp.pop %v905
  %v1042 = vrcp.pop %v907
  %v1043 = vrcp.pop %v909
  %v1044 = vrcp.pop %v911
  %v1045 = vrcp.pop %v913
  %v1046 = vrcp.pop %v915
  %v1047 = vrcp.pop %v917
  %v1048 = vrcp.pop %v919
  %v1049 = vrcp.pop %v921
  %v1050 = vrcp.pop %v923
  %v1051 = vrcp.pop %v925
  %v1052 = vrcp.pop %v927
  %v1053 = vrcp.pop %v929
  %v1054 = vrcp.pop %v931
  %v1055 = vrcp.pop %v933
  %v1056 = vrcp.pop %v935
  %v1057 = vmul.f32 %v979, %v1041
  %v1058 = vmul.f32 %v982, %v1042
  %v1059 = vmul.f32 %v987, %v1043
  %v1060 = vmul.f32 %v990, %v1044
  %v1061 = vmul.f32 %v995, %v1045
  %v1062 = vmul.f32 %v998, %v1046
  %v1063 = vmul.f32 %v1003, %v1047
  %v1064 = vmul.f32 %v1006, %v1048
  %v1065 = vmul.f32 %v1011, %v1049
  %v1066 = vmul.f32 %v1014, %v1050
  %v1067 = vmul.f32 %v1019, %v1051
  %v1068 = vmul.f32 %v1022, %v1052
  %v1069 = vmul.f32 %v1027, %v1053
  %v1070 = vmul.f32 %v1030, %v1054
  %v1071 = vmul.f32 %v1035, %v1055
  %v1072 = vmul.f32 %v1038, %v1056
  %vm1073 = vcmask 64512
  %v1074 = vsel %vm1073, %v1057, 0.0
  %v1075 = vsel %vm1073, %v1058, 0.0
  %v1076 = vsel %vm1073, %v1059, 0.0
  %v1077 = vsel %vm1073, %v1060, 0.0
  %v1078 = vsel %vm1073, %v1061, 0.0
  %v1079 = vsel %vm1073, %v1062, 0.0
  %v1080 = vsel %vm1073, %v1063, 0.0
  %v1081 = vsel %vm1073, %v1064, 0.0
  %v1082 = vsel %vm1073, %v1065, 0.0
  %v1083 = vsel %vm1073, %v1066, 0.0
  %v1084 = vsel %vm1073, %v1067, 0.0
  %v1085 = vsel %vm1073, %v1068, 0.0
  %v1086 = vsel %vm1073, %v1069, 0.0
  %v1087 = vsel %vm1073, %v1070, 0.0
  %v1088 = vsel %vm1073, %v1071, 0.0
  %v1089 = vsel %vm1073, %v1072, 0.0
  %v1090 = vld [vmem:[%s5] sm:$0x1]
  %v1092 = vlaneseq
  %v1093 = vshrl.u32 %v1092, 7
  %v1094 = vsub.s32 0, %v1093
  %v1095 = vrot.slane %v1090, %v1094
  %v1097 = vadd.f32 %v1074, %v1095
  %v1098 = vadd.f32 %v1075, %v1095
  %v1099 = vadd.f32 %v1076, %v1095
  %v1100 = vadd.f32 %v1077, %v1095
  %v1101 = vadd.f32 %v1078, %v1095
  %v1102 = vadd.f32 %v1079, %v1095
  %v1103 = vadd.f32 %v1080, %v1095
  %v1104 = vadd.f32 %v1081, %v1095
  %v1105 = vadd.f32 %v1082, %v1095
  %v1106 = vadd.f32 %v1083, %v1095
  %v1107 = vadd.f32 %v1084, %v1095
  %v1108 = vadd.f32 %v1085, %v1095
  %v1109 = vadd.f32 %v1086, %v1095
  %v1110 = vadd.f32 %v1087, %v1095
  %v1111 = vadd.f32 %v1088, %v1095
  %v1112 = vadd.f32 %v1089, %v1095
  %1113 = vst [vmem:[%s6] sm:$0xff] %v1097
  %1114 = vst [vmem:[%s6 + $0x8] sm:$0xff] %v1098
  %1115 = vst [vmem:[%s6 + $0x10] sm:$0xff] %v1099
  %1116 = vst [vmem:[%s6 + $0x18] sm:$0xff] %v1100
  %1117 = vst [vmem:[%s6 + $0x20] sm:$0xff] %v1101
  %1118 = vst [vmem:[%s6 + $0x28] sm:$0xff] %v1102
  %1119 = vst [vmem:[%s6 + $0x30] sm:$0xff] %v1103
  %1120 = vst [vmem:[%s6 + $0x38] sm:$0xff] %v1104
  %1121 = vst [vmem:[%s6 + $0x40] sm:$0xff] %v1105
  %1122 = vst [vmem:[%s6 + $0x48] sm:$0xff] %v1106
  %1123 = vst [vmem:[%s6 + $0x50] sm:$0xff] %v1107
  %1124 = vst [vmem:[%s6 + $0x58] sm:$0xff] %v1108
  %1125 = vst [vmem:[%s6 + $0x60] sm:$0xff] %v1109
  %1126 = vst [vmem:[%s6 + $0x68] sm:$0xff] %v1110
  %1127 = vst [vmem:[%s6 + $0x70] sm:$0xff] %v1111
  %1128 = vst [vmem:[%s6 + $0x78] sm:$0xff] %v1112
  // Predicated region
  $region26: #{gnn_head_forward.3} parent=0 // pred_check
    _
  $region27: #{gnn_head_forward.3} parent=0 // pred_check_branch
    %1130 = sbr.rel (0) target = $region29
  $region28: #{gnn_head_forward.3} parent=0 // pred_region
    _
  $region29: #{gnn_head_forward.3} parent=0 // pred_fallthru
    _
  // Predicated region
  $region30: #{gnn_head_forward.3} parent=0 // pred_check
    _
  $region31: #{gnn_head_forward.3} parent=0 // pred_check_branch
    %1132 = sbr.rel (0) target = $region33
  $region32: #{gnn_head_forward.3} parent=0 // pred_region
    _
  $region33: #{gnn_head_forward.3} parent=0 // pred_fallthru
    _

// kernel: gnn_head_forward.2
$region0: #{gnn_head_forward.2}
  #allocation0 [shape = 'u32[]', space=smem, size = 0x4, offset = 0x4, fixed_abs, tag = 'smem constant byte address 0x4 - core index']
  #allocation1 [shape = 'u32[144,128]{1,0:T(1,128)}', space=vmem, size = 0x12000, scoped, tag = 'internal scratch']
  %s0 = inlined_call_operand.vmem [shape: bf16[128,8], index: 0, kind: input, shape index: {}, may-alias: {0,1}]
  %s1 = inlined_call_operand.vmem [shape: bf16[128,8], index: 1, kind: input, shape index: {}, may-alias: {0,1}]
  %s2 = inlined_call_operand.vmem [shape: s8[128,128], index: 2, kind: input, shape index: {}]
  %s3 = inlined_call_operand.vmem [shape: bf16[8,36], index: 3, kind: input, shape index: {}]
  %s4 = inlined_call_operand.vmem [shape: bf16[8,4], index: 4, kind: input, shape index: {}]
  %s5 = inlined_call_operand.vmem [shape: f32[1,128], index: 5, kind: input, shape index: {}]
  %s6 = inlined_call_operand.vmem [shape: bf16[128,128], index: 6, kind: output, shape index: {}]
  %s7 = sld [smem:[#allocation0]]
  $region34: #{gnn_head_forward.2} parent=0
    _
  %s9 = ssub.s32 1, %s7
  %s10 = scalar_select 0, %s9, %s7
  // Predicated region
  $region2: #{gnn_head_forward.2} parent=0 // pred_check
    _
  $region3: #{gnn_head_forward.2} parent=0 // pred_check_branch
    %12 = sbr.rel (0) target = $region5
  $region4: #{gnn_head_forward.2} parent=0 // pred_region
    _
  $region5: #{gnn_head_forward.2} parent=0 // pred_fallthru
    _
  // Predicated region
  $region6: #{gnn_head_forward.2} parent=0 // pred_check
    _
  $region7: #{gnn_head_forward.2} parent=0 // pred_check_branch
    %14 = sbr.rel (0) target = $region9
  $region8: #{gnn_head_forward.2} parent=0 // pred_region
    _
  $region9: #{gnn_head_forward.2} parent=0 // pred_fallthru
    _
  // Predicated region
  $region10: #{gnn_head_forward.2} parent=0 // pred_check
    _
  $region11: #{gnn_head_forward.2} parent=0 // pred_check_branch
    %16 = sbr.rel (0) target = $region13
  $region12: #{gnn_head_forward.2} parent=0 // pred_region
    _
  $region13: #{gnn_head_forward.2} parent=0 // pred_fallthru
    _
  // Predicated region
  $region14: #{gnn_head_forward.2} parent=0 // pred_check
    _
  $region15: #{gnn_head_forward.2} parent=0 // pred_check_branch
    %18 = sbr.rel (0) target = $region17
  $region16: #{gnn_head_forward.2} parent=0 // pred_region
    _
  $region17: #{gnn_head_forward.2} parent=0 // pred_fallthru
    _
  // Predicated region
  $region18: #{gnn_head_forward.2} parent=0 // pred_check
    _
  $region19: #{gnn_head_forward.2} parent=0 // pred_check_branch
    %20 = sbr.rel (0) target = $region21
  $region20: #{gnn_head_forward.2} parent=0 // pred_region
    _
  $region21: #{gnn_head_forward.2} parent=0 // pred_fallthru
    _
  // Predicated region
  $region22: #{gnn_head_forward.2} parent=0 // pred_check
    _
  $region23: #{gnn_head_forward.2} parent=0 // pred_check_branch
    %22 = sbr.rel (0) target = $region25
  $region24: #{gnn_head_forward.2} parent=0 // pred_region
    _
  $region25: #{gnn_head_forward.2} parent=0 // pred_fallthru
    _
  %v26 = vld [vmem:[%s2] sm:$0x3]
  %v27 = vld [vmem:[%s2 + $0x2] sm:$0x3]
  %v28 = vld [vmem:[%s2 + $0x4] sm:$0x3]
  %v29 = vld [vmem:[%s2 + $0x6] sm:$0x3]
  %v30 = vld [vmem:[%s2 + $0x8] sm:$0x3]
  %v31 = vld [vmem:[%s2 + $0xa] sm:$0x3]
  %v32 = vld [vmem:[%s2 + $0xc] sm:$0x3]
  %v33 = vld [vmem:[%s2 + $0xe] sm:$0x3]
  %v34 = vld [vmem:[%s2 + $0x10] sm:$0x3]
  %v35 = vld [vmem:[%s2 + $0x12] sm:$0x3]
  %v36 = vld [vmem:[%s2 + $0x14] sm:$0x3]
  %v37 = vld [vmem:[%s2 + $0x16] sm:$0x3]
  %v38 = vld [vmem:[%s2 + $0x18] sm:$0x3]
  %v39 = vld [vmem:[%s2 + $0x1a] sm:$0x3]
  %v40 = vld [vmem:[%s2 + $0x1c] sm:$0x3]
  %v41 = vld [vmem:[%s2 + $0x1e] sm:$0x3]
  %vm42 = vnez %v26
  %vm43 = vnez %v27
  %vm44 = vnez %v28
  %vm45 = vnez %v29
  %vm46 = vnez %v30
  %vm47 = vnez %v31
  %vm48 = vnez %v32
  %vm49 = vnez %v33
  %vm50 = vnez %v34
  %vm51 = vnez %v35
  %vm52 = vnez %v36
  %vm53 = vnez %v37
  %vm54 = vnez %v38
  %vm55 = vnez %v39
  %vm56 = vnez %v40
  %vm57 = vnez %v41
  %v58 = vld [vmem:[%s0] sm:$0xf]
  %v59 = vld [vmem:[%s0 + $0x4] sm:$0xf]
  %v60 = vld [vmem:[%s0 + $0x8] sm:$0xf]
  %v61 = vld [vmem:[%s0 + $0xc] sm:$0xf]
  %v62 = vld [vmem:[%s0 + $0x10] sm:$0xf]
  %v63 = vld [vmem:[%s0 + $0x14] sm:$0xf]
  %v64 = vld [vmem:[%s0 + $0x18] sm:$0xf]
  %v65 = vld [vmem:[%s0 + $0x1c] sm:$0xf]
  %v66 = vld [vmem:[%s0 + $0x20] sm:$0xf]
  %v67 = vld [vmem:[%s0 + $0x24] sm:$0xf]
  %v68 = vld [vmem:[%s0 + $0x28] sm:$0xf]
  %v69 = vld [vmem:[%s0 + $0x2c] sm:$0xf]
  %v70 = vld [vmem:[%s0 + $0x30] sm:$0xf]
  %v71 = vld [vmem:[%s0 + $0x34] sm:$0xf]
  %v72 = vld [vmem:[%s0 + $0x38] sm:$0xf]
  %v73 = vld [vmem:[%s0 + $0x3c] sm:$0xf]
  %v74 = vld [vmem:[%s3] sm:$0xf]
  %v91 = vunpack.c.l.b16 %v58
  %v92 = vunpack.c.l.b16 %v59
  %v93 = vunpack.c.l.b16 %v60
  %v94 = vunpack.c.l.b16 %v61
  %v95 = vunpack.c.l.b16 %v62
  %v96 = vunpack.c.l.b16 %v63
  %v97 = vunpack.c.l.b16 %v64
  %v98 = vunpack.c.l.b16 %v65
  %v99 = vunpack.c.l.b16 %v66
  %v100 = vunpack.c.l.b16 %v67
  %v101 = vunpack.c.l.b16 %v68
  %v102 = vunpack.c.l.b16 %v69
  %v103 = vunpack.c.l.b16 %v70
  %v104 = vunpack.c.l.b16 %v71
  %v105 = vunpack.c.l.b16 %v72
  %v106 = vunpack.c.l.b16 %v73
  %v107 = vpack.c.b16 %v92, %v91
  %v108 = vpack.c.b16 %v94, %v93
  %v109 = vpack.c.b16 %v96, %v95
  %v110 = vpack.c.b16 %v98, %v97
  %v111 = vpack.c.b16 %v100, %v99
  %v112 = vpack.c.b16 %v102, %v101
  %v113 = vpack.c.b16 %v104, %v103
  %v114 = vpack.c.b16 %v106, %v105
  %vm115 = vcmask 64512
  %v117 = vsel %vm115, %v107, 0
  %v120 = vsel %vm115, %v108, 0
  %v123 = vsel %vm115, %v109, 0
  %v126 = vsel %vm115, %v110, 0
  %v129 = vsel %vm115, %v111, 0
  %v132 = vsel %vm115, %v112, 0
  %v135 = vsel %vm115, %v113, 0
  %v138 = vsel %vm115, %v114, 0
  %vm140 = vcmask 1043456
  %v142 = vsel %vm140, %v74, 0
  %144 = vmatprep.subr.bf16.mxu0 0
  %145 = vmatpush1.bf16.msra.mxu0 0
  %146 = vmatprep.subr.bf16.mxu0 0
  %147 = vmatpush1.bf16.msra.mxu0 0
  %148 = vmatprep.subr.bf16.mxu0 0
  %149 = vmatpush1.bf16.msra.mxu0 0
  %150 = vmatprep.subr.bf16.mxu0 0
  %151 = vmatpush1.bf16.msra.mxu0 0
  %152 = vmatprep.subr.bf16.mxu0 0
  %153 = vmatpush1.bf16.msra.mxu0 0
  %154 = vmatprep.subr.bf16.mxu0 0
  %155 = vmatpush1.bf16.msra.mxu0 0
  %156 = vmatprep.subr.bf16.mxu0 0
  %157 = vmatpush1.bf16.msra.mxu0 0
  %158 = vmatprep.subr.bf16.mxu0 0
  %159 = vmatpush1.bf16.msra.mxu0 %v142
  %160 = vmatprep.subr.bf16.mxu0 0
  %161 = vmatpush2.bf16.msra.mxu0 0
  %162 = vmatprep.subr.bf16.mxu0 0
  %163 = vmatpush2.bf16.msra.mxu0 0
  %164 = vmatprep.subr.bf16.mxu0 0
  %165 = vmatpush2.bf16.msra.mxu0 0
  %166 = vmatprep.subr.bf16.mxu0 0
  %167 = vmatpush2.bf16.msra.mxu0 0
  %168 = vmatprep.subr.bf16.mxu0 0
  %169 = vmatpush2.bf16.msra.mxu0 0
  %170 = vmatprep.subr.bf16.mxu0 0
  %171 = vmatpush2.bf16.msra.mxu0 0
  %172 = vmatprep.subr.bf16.mxu0 0
  %173 = vmatpush2.bf16.msra.mxu0 0
  %174 = vmatprep.subr.bf16.mxu0 0
  %175 = vmatpush2.bf16.msra.mxu0 0
  %176 = vmatprep.mubr.bf16.mxu0 0
  %177 = vmatmul.mubr.bf16.gmra.mxu0 %v117
  %v178 = vpop.f32.mrf.mxu0
  %v179 = vadd.f32 0.0, %v178
  %v180 = vpop.f32.mrf.mxu0
  %v181 = vpop.f32.mrf.mxu0
  %v182 = vadd.f32 0.0, %v181
  %v183 = vpop.f32.mrf.mxu0
  %184 = vmatprep.mubr.bf16.mxu0 0
  %185 = vmatmul.mubr.bf16.gmra.mxu0 %v120
  %v186 = vpop.f32.mrf.mxu0
  %v187 = vadd.f32 0.0, %v186
  %v188 = vpop.f32.mrf.mxu0
  %v189 = vpop.f32.mrf.mxu0
  %v190 = vadd.f32 0.0, %v189
  %v191 = vpop.f32.mrf.mxu0
  %192 = vmatprep.mubr.bf16.mxu0 0
  %193 = vmatmul.mubr.bf16.gmra.mxu0 %v123
  %v194 = vpop.f32.mrf.mxu0
  %v195 = vadd.f32 0.0, %v194
  %v196 = vpop.f32.mrf.mxu0
  %v197 = vpop.f32.mrf.mxu0
  %v198 = vadd.f32 0.0, %v197
  %v199 = vpop.f32.mrf.mxu0
  %200 = vmatprep.mubr.bf16.mxu0 0
  %201 = vmatmul.mubr.bf16.gmra.mxu0 %v126
  %v202 = vpop.f32.mrf.mxu0
  %v203 = vadd.f32 0.0, %v202
  %v204 = vpop.f32.mrf.mxu0
  %v205 = vpop.f32.mrf.mxu0
  %v206 = vadd.f32 0.0, %v205
  %v207 = vpop.f32.mrf.mxu0
  %208 = vmatprep.mubr.bf16.mxu0 0
  %209 = vmatmul.mubr.bf16.gmra.mxu0 %v129
  %v210 = vpop.f32.mrf.mxu0
  %v211 = vadd.f32 0.0, %v210
  %v212 = vpop.f32.mrf.mxu0
  %v213 = vpop.f32.mrf.mxu0
  %v214 = vadd.f32 0.0, %v213
  %v215 = vpop.f32.mrf.mxu0
  %216 = vmatprep.mubr.bf16.mxu0 0
  %217 = vmatmul.mubr.bf16.gmra.mxu0 %v132
  %v218 = vpop.f32.mrf.mxu0
  %v219 = vadd.f32 0.0, %v218
  %v220 = vpop.f32.mrf.mxu0
  %v221 = vpop.f32.mrf.mxu0
  %v222 = vadd.f32 0.0, %v221
  %v223 = vpop.f32.mrf.mxu0
  %224 = vmatprep.mubr.bf16.mxu0 0
  %225 = vmatmul.mubr.bf16.gmra.mxu0 %v135
  %v226 = vpop.f32.mrf.mxu0
  %v227 = vadd.f32 0.0, %v226
  %v228 = vpop.f32.mrf.mxu0
  %v229 = vpop.f32.mrf.mxu0
  %v230 = vadd.f32 0.0, %v229
  %v231 = vpop.f32.mrf.mxu0
  %232 = vmatprep.mubr.bf16.mxu0 0
  %233 = vmatmul.mubr.bf16.gmra.mxu0 %v138
  %v234 = vpop.f32.mrf.mxu0
  %v235 = vadd.f32 0.0, %v234
  %v236 = vpop.f32.mrf.mxu0
  %v237 = vpop.f32.mrf.mxu0
  %v238 = vadd.f32 0.0, %v237
  %v239 = vpop.f32.mrf.mxu0
  %240 = vdwg.mxu0
  %257 = vrot.lane.b32.xlu0 %v179, 96
  %v258 = vpop.permute.xlu0 %257
  %259 = vrot.lane.b32.xlu0 %v182, 96
  %v260 = vpop.permute.xlu0 %259
  %261 = vrot.lane.b32.xlu0 %v187, 96
  %v262 = vpop.permute.xlu0 %261
  %263 = vrot.lane.b32.xlu0 %v190, 96
  %v264 = vpop.permute.xlu0 %263
  %265 = vrot.lane.b32.xlu0 %v195, 96
  %v266 = vpop.permute.xlu0 %265
  %267 = vrot.lane.b32.xlu0 %v198, 96
  %v268 = vpop.permute.xlu0 %267
  %269 = vrot.lane.b32.xlu0 %v203, 96
  %v270 = vpop.permute.xlu0 %269
  %271 = vrot.lane.b32.xlu0 %v206, 96
  %v272 = vpop.permute.xlu0 %271
  %273 = vrot.lane.b32.xlu0 %v211, 96
  %v274 = vpop.permute.xlu0 %273
  %275 = vrot.lane.b32.xlu0 %v214, 96
  %v276 = vpop.permute.xlu0 %275
  %277 = vrot.lane.b32.xlu0 %v219, 96
  %v278 = vpop.permute.xlu0 %277
  %279 = vrot.lane.b32.xlu0 %v222, 96
  %v280 = vpop.permute.xlu0 %279
  %281 = vrot.lane.b32.xlu0 %v227, 96
  %v282 = vpop.permute.xlu0 %281
  %283 = vrot.lane.b32.xlu0 %v230, 96
  %v284 = vpop.permute.xlu0 %283
  %285 = vrot.lane.b32.xlu0 %v235, 96
  %v286 = vpop.permute.xlu0 %285
  %287 = vrot.lane.b32.xlu0 %v238, 96
  %v288 = vpop.permute.xlu0 %287
  %305 = vxpose.xlu0.b32.start [1/16] %v258, 128
  %306 = vxpose.xlu0.b32.cont [2/16] %v260, 128
  %307 = vxpose.xlu0.b32.cont [3/16] %v262, 128
  %308 = vxpose.xlu0.b32.cont [4/16] %v264, 128
  %309 = vxpose.xlu0.b32.cont [5/16] %v266, 128
  %310 = vxpose.xlu0.b32.cont [6/16] %v268, 128
  %311 = vxpose.xlu0.b32.cont [7/16] %v270, 128
  %312 = vxpose.xlu0.b32.cont [8/16] %v272, 128
  %313 = vxpose.xlu0.b32.cont [9/16] %v274, 128
  %314 = vxpose.xlu0.b32.cont [10/16] %v276, 128
  %315 = vxpose.xlu0.b32.cont [11/16] %v278, 128
  %316 = vxpose.xlu0.b32.cont [12/16] %v280, 128
  %317 = vxpose.xlu0.b32.cont [13/16] %v282, 128
  %318 = vxpose.xlu0.b32.cont [14/16] %v284, 128
  %319 = vxpose.xlu0.b32.cont [15/16] %v286, 128
  %320 = vxpose.xlu0.b32.end [16/16] %v288, 128
  %v321 = vpop.trf.xlu0
  %v322 = vpop.trf.xlu0
  %v323 = vpop.trf.xlu0
  %v324 = vpop.trf.xlu0
  %v325 = vpop.trf.xlu0
  %v326 = vpop.trf.xlu0
  %v327 = vpop.trf.xlu0
  %v328 = vpop.trf.xlu0
  %v329 = vpop.trf.xlu0
  %v330 = vpop.trf.xlu0
  %v331 = vpop.trf.xlu0
  %v332 = vpop.trf.xlu0
  %v333 = vpop.trf.xlu0
  %v334 = vpop.trf.xlu0
  %v335 = vpop.trf.xlu0
  %v336 = vpop.trf.xlu0
  %v337 = vpack.c.bf16 %v182, %v179
  %v338 = vpack.c.bf16 %v190, %v187
  %v339 = vpack.c.bf16 %v198, %v195
  %v340 = vpack.c.bf16 %v206, %v203
  %v341 = vpack.c.bf16 %v214, %v211
  %v342 = vpack.c.bf16 %v222, %v219
  %v343 = vpack.c.bf16 %v230, %v227
  %v344 = vpack.c.bf16 %v238, %v235
  %v345 = vld [vmem:[%s1] sm:$0xf]
  %v346 = vld [vmem:[%s1 + $0x4] sm:$0xf]
  %v347 = vld [vmem:[%s1 + $0x8] sm:$0xf]
  %v348 = vld [vmem:[%s1 + $0xc] sm:$0xf]
  %v349 = vld [vmem:[%s1 + $0x10] sm:$0xf]
  %v350 = vld [vmem:[%s1 + $0x14] sm:$0xf]
  %v351 = vld [vmem:[%s1 + $0x18] sm:$0xf]
  %v352 = vld [vmem:[%s1 + $0x1c] sm:$0xf]
  %v353 = vld [vmem:[%s1 + $0x20] sm:$0xf]
  %v354 = vld [vmem:[%s1 + $0x24] sm:$0xf]
  %v355 = vld [vmem:[%s1 + $0x28] sm:$0xf]
  %v356 = vld [vmem:[%s1 + $0x2c] sm:$0xf]
  %v357 = vld [vmem:[%s1 + $0x30] sm:$0xf]
  %v358 = vld [vmem:[%s1 + $0x34] sm:$0xf]
  %v359 = vld [vmem:[%s1 + $0x38] sm:$0xf]
  %v360 = vld [vmem:[%s1 + $0x3c] sm:$0xf]
  %v361 = vld [vmem:[%s4] sm:$0xf]
  %v378 = vunpack.c.l.b16 %v345
  %v379 = vunpack.c.l.b16 %v346
  %v380 = vunpack.c.l.b16 %v347
  %v381 = vunpack.c.l.b16 %v348
  %v382 = vunpack.c.l.b16 %v349
  %v383 = vunpack.c.l.b16 %v350
  %v384 = vunpack.c.l.b16 %v351
  %v385 = vunpack.c.l.b16 %v352
  %v386 = vunpack.c.l.b16 %v353
  %v387 = vunpack.c.l.b16 %v354
  %v388 = vunpack.c.l.b16 %v355
  %v389 = vunpack.c.l.b16 %v356
  %v390 = vunpack.c.l.b16 %v357
  %v391 = vunpack.c.l.b16 %v358
  %v392 = vunpack.c.l.b16 %v359
  %v393 = vunpack.c.l.b16 %v360
  %v394 = vpack.c.b16 %v379, %v378
  %v395 = vpack.c.b16 %v381, %v380
  %v396 = vpack.c.b16 %v383, %v382
  %v397 = vpack.c.b16 %v385, %v384
  %v398 = vpack.c.b16 %v387, %v386
  %v399 = vpack.c.b16 %v389, %v388
  %v400 = vpack.c.b16 %v391, %v390
  %v401 = vpack.c.b16 %v393, %v392
  %v403 = vsel %vm115, %v394, 0
  %v406 = vsel %vm115, %v395, 0
  %v409 = vsel %vm115, %v396, 0
  %v412 = vsel %vm115, %v397, 0
  %v415 = vsel %vm115, %v398, 0
  %v418 = vsel %vm115, %v399, 0
  %v421 = vsel %vm115, %v400, 0
  %v424 = vsel %vm115, %v401, 0
  %v427 = vsel %vm140, %v361, 0
  %429 = vmatprep.subr.bf16.mxu0 0
  %430 = vmatpush1.bf16.msra.mxu0 0
  %431 = vmatprep.subr.bf16.mxu0 0
  %432 = vmatpush1.bf16.msra.mxu0 0
  %433 = vmatprep.subr.bf16.mxu0 0
  %434 = vmatpush1.bf16.msra.mxu0 0
  %435 = vmatprep.subr.bf16.mxu0 0
  %436 = vmatpush1.bf16.msra.mxu0 0
  %437 = vmatprep.subr.bf16.mxu0 0
  %438 = vmatpush1.bf16.msra.mxu0 0
  %439 = vmatprep.subr.bf16.mxu0 0
  %440 = vmatpush1.bf16.msra.mxu0 0
  %441 = vmatprep.subr.bf16.mxu0 0
  %442 = vmatpush1.bf16.msra.mxu0 0
  %443 = vmatprep.subr.bf16.mxu0 0
  %444 = vmatpush1.bf16.msra.mxu0 %v427
  %445 = vmatprep.subr.bf16.mxu0 0
  %446 = vmatpush2.bf16.msra.mxu0 0
  %447 = vmatprep.subr.bf16.mxu0 0
  %448 = vmatpush2.bf16.msra.mxu0 0
  %449 = vmatprep.subr.bf16.mxu0 0
  %450 = vmatpush2.bf16.msra.mxu0 0
  %451 = vmatprep.subr.bf16.mxu0 0
  %452 = vmatpush2.bf16.msra.mxu0 0
  %453 = vmatprep.subr.bf16.mxu0 0
  %454 = vmatpush2.bf16.msra.mxu0 0
  %455 = vmatprep.subr.bf16.mxu0 0
  %456 = vmatpush2.bf16.msra.mxu0 0
  %457 = vmatprep.subr.bf16.mxu0 0
  %458 = vmatpush2.bf16.msra.mxu0 0
  %459 = vmatprep.subr.bf16.mxu0 0
  %460 = vmatpush2.bf16.msra.mxu0 0
  %461 = vmatprep.mubr.bf16.mxu0 0
  %462 = vmatmul.mubr.bf16.gmra.mxu0 %v403
  %v463 = vpop.f32.mrf.mxu0
  %v464 = vadd.f32 0.0, %v463
  %v465 = vpop.f32.mrf.mxu0
  %v466 = vpop.f32.mrf.mxu0
  %v467 = vadd.f32 0.0, %v466
  %v468 = vpop.f32.mrf.mxu0
  %469 = vmatprep.mubr.bf16.mxu0 0
  %470 = vmatmul.mubr.bf16.gmra.mxu0 %v406
  %v471 = vpop.f32.mrf.mxu0
  %v472 = vadd.f32 0.0, %v471
  %v473 = vpop.f32.mrf.mxu0
  %v474 = vpop.f32.mrf.mxu0
  %v475 = vadd.f32 0.0, %v474
  %v476 = vpop.f32.mrf.mxu0
  %477 = vmatprep.mubr.bf16.mxu0 0
  %478 = vmatmul.mubr.bf16.gmra.mxu0 %v409
  %v479 = vpop.f32.mrf.mxu0
  %v480 = vadd.f32 0.0, %v479
  %v481 = vpop.f32.mrf.mxu0
  %v482 = vpop.f32.mrf.mxu0
  %v483 = vadd.f32 0.0, %v482
  %v484 = vpop.f32.mrf.mxu0
  %485 = vmatprep.mubr.bf16.mxu0 0
  %486 = vmatmul.mubr.bf16.gmra.mxu0 %v412
  %v487 = vpop.f32.mrf.mxu0
  %v488 = vadd.f32 0.0, %v487
  %v489 = vpop.f32.mrf.mxu0
  %v490 = vpop.f32.mrf.mxu0
  %v491 = vadd.f32 0.0, %v490
  %v492 = vpop.f32.mrf.mxu0
  %493 = vmatprep.mubr.bf16.mxu0 0
  %494 = vmatmul.mubr.bf16.gmra.mxu0 %v415
  %v495 = vpop.f32.mrf.mxu0
  %v496 = vadd.f32 0.0, %v495
  %v497 = vpop.f32.mrf.mxu0
  %v498 = vpop.f32.mrf.mxu0
  %v499 = vadd.f32 0.0, %v498
  %v500 = vpop.f32.mrf.mxu0
  %501 = vmatprep.mubr.bf16.mxu0 0
  %502 = vmatmul.mubr.bf16.gmra.mxu0 %v418
  %v503 = vpop.f32.mrf.mxu0
  %v504 = vadd.f32 0.0, %v503
  %v505 = vpop.f32.mrf.mxu0
  %v506 = vpop.f32.mrf.mxu0
  %v507 = vadd.f32 0.0, %v506
  %v508 = vpop.f32.mrf.mxu0
  %509 = vmatprep.mubr.bf16.mxu0 0
  %510 = vmatmul.mubr.bf16.gmra.mxu0 %v421
  %v511 = vpop.f32.mrf.mxu0
  %v512 = vadd.f32 0.0, %v511
  %v513 = vpop.f32.mrf.mxu0
  %v514 = vpop.f32.mrf.mxu0
  %v515 = vadd.f32 0.0, %v514
  %v516 = vpop.f32.mrf.mxu0
  %517 = vmatprep.mubr.bf16.mxu0 0
  %518 = vmatmul.mubr.bf16.gmra.mxu0 %v424
  %v519 = vpop.f32.mrf.mxu0
  %v520 = vadd.f32 0.0, %v519
  %v521 = vpop.f32.mrf.mxu0
  %v522 = vpop.f32.mrf.mxu0
  %v523 = vadd.f32 0.0, %v522
  %v524 = vpop.f32.mrf.mxu0
  %525 = vdwg.mxu0
  %527 = vset.pattern.permute.xlu0 0
  %528 = vperm.xlu0 %527, %v464
  %v529 = vpop.permute.xlu0 %528
  %532 = vset.pattern.permute.xlu0 0
  %533 = vperm.xlu0 %532, %v467
  %v534 = vpop.permute.xlu0 %533
  %537 = vset.pattern.permute.xlu0 0
  %538 = vperm.xlu0 %537, %v472
  %v539 = vpop.permute.xlu0 %538
  %542 = vset.pattern.permute.xlu0 0
  %543 = vperm.xlu0 %542, %v475
  %v544 = vpop.permute.xlu0 %543
  %547 = vset.pattern.permute.xlu0 0
  %548 = vperm.xlu0 %547, %v480
  %v549 = vpop.permute.xlu0 %548
  %552 = vset.pattern.permute.xlu0 0
  %553 = vperm.xlu0 %552, %v483
  %v554 = vpop.permute.xlu0 %553
  %557 = vset.pattern.permute.xlu0 0
  %558 = vperm.xlu0 %557, %v488
  %v559 = vpop.permute.xlu0 %558
  %562 = vset.pattern.permute.xlu0 0
  %563 = vperm.xlu0 %562, %v491
  %v564 = vpop.permute.xlu0 %563
  %567 = vset.pattern.permute.xlu0 0
  %568 = vperm.xlu0 %567, %v496
  %v569 = vpop.permute.xlu0 %568
  %572 = vset.pattern.permute.xlu0 0
  %573 = vperm.xlu0 %572, %v499
  %v574 = vpop.permute.xlu0 %573
  %577 = vset.pattern.permute.xlu0 0
  %578 = vperm.xlu0 %577, %v504
  %v579 = vpop.permute.xlu0 %578
  %582 = vset.pattern.permute.xlu0 0
  %583 = vperm.xlu0 %582, %v507
  %v584 = vpop.permute.xlu0 %583
  %587 = vset.pattern.permute.xlu0 0
  %588 = vperm.xlu0 %587, %v512
  %v589 = vpop.permute.xlu0 %588
  %592 = vset.pattern.permute.xlu0 0
  %593 = vperm.xlu0 %592, %v515
  %v594 = vpop.permute.xlu0 %593
  %597 = vset.pattern.permute.xlu0 0
  %598 = vperm.xlu0 %597, %v520
  %v599 = vpop.permute.xlu0 %598
  %602 = vset.pattern.permute.xlu0 0
  %603 = vperm.xlu0 %602, %v523
  %v604 = vpop.permute.xlu0 %603
  %v606 = vlaneseq
  %v607 = vshrl.u32 %v606, 7
  %v608 = vsub.s32 0, %v607
  %v609 = vrot.slane %v321, %v608
  %v610 = vadd.f32 %v529, %v609
  %v611 = vadd.f32 %v534, %v609
  %v612 = vadd.f32 %v539, %v609
  %v613 = vadd.f32 %v544, %v609
  %v614 = vadd.f32 %v549, %v609
  %v615 = vadd.f32 %v554, %v609
  %v616 = vadd.f32 %v559, %v609
  %v617 = vadd.f32 %v564, %v609
  %v618 = vadd.f32 %v569, %v609
  %v619 = vadd.f32 %v574, %v609
  %v620 = vadd.f32 %v579, %v609
  %v621 = vadd.f32 %v584, %v609
  %v622 = vadd.f32 %v589, %v609
  %v623 = vadd.f32 %v594, %v609
  %v624 = vadd.f32 %v599, %v609
  %v625 = vadd.f32 %v604, %v609
  %vm626 = vcmp.gt.f32.partialorder %v610, 0.0
  %vm627 = vcmp.gt.f32.partialorder %v611, 0.0
  %vm628 = vcmp.gt.f32.partialorder %v612, 0.0
  %vm629 = vcmp.gt.f32.partialorder %v613, 0.0
  %vm630 = vcmp.gt.f32.partialorder %v614, 0.0
  %vm631 = vcmp.gt.f32.partialorder %v615, 0.0
  %vm632 = vcmp.gt.f32.partialorder %v616, 0.0
  %vm633 = vcmp.gt.f32.partialorder %v617, 0.0
  %vm634 = vcmp.gt.f32.partialorder %v618, 0.0
  %vm635 = vcmp.gt.f32.partialorder %v619, 0.0
  %vm636 = vcmp.gt.f32.partialorder %v620, 0.0
  %vm637 = vcmp.gt.f32.partialorder %v621, 0.0
  %vm638 = vcmp.gt.f32.partialorder %v622, 0.0
  %vm639 = vcmp.gt.f32.partialorder %v623, 0.0
  %vm640 = vcmp.gt.f32.partialorder %v624, 0.0
  %vm641 = vcmp.gt.f32.partialorder %v625, 0.0
  %v642 = vmul.f32 %v610, 0.2
  %v643 = vmul.f32 %v611, 0.2
  %v644 = vmul.f32 %v612, 0.2
  %v645 = vmul.f32 %v613, 0.2
  %v646 = vmul.f32 %v614, 0.2
  %v647 = vmul.f32 %v615, 0.2
  %v648 = vmul.f32 %v616, 0.2
  %v649 = vmul.f32 %v617, 0.2
  %v650 = vmul.f32 %v618, 0.2
  %v651 = vmul.f32 %v619, 0.2
  %v652 = vmul.f32 %v620, 0.2
  %v653 = vmul.f32 %v621, 0.2
  %v654 = vmul.f32 %v622, 0.2
  %v655 = vmul.f32 %v623, 0.2
  %v656 = vmul.f32 %v624, 0.2
  %v657 = vmul.f32 %v625, 0.2
  %v658 = vsel %vm626, %v610, %v642
  %v659 = vsel %vm627, %v611, %v643
  %v660 = vsel %vm628, %v612, %v644
  %v661 = vsel %vm629, %v613, %v645
  %v662 = vsel %vm630, %v614, %v646
  %v663 = vsel %vm631, %v615, %v647
  %v664 = vsel %vm632, %v616, %v648
  %v665 = vsel %vm633, %v617, %v649
  %v666 = vsel %vm634, %v618, %v650
  %v667 = vsel %vm635, %v619, %v651
  %v668 = vsel %vm636, %v620, %v652
  %v669 = vsel %vm637, %v621, %v653
  %v670 = vsel %vm638, %v622, %v654
  %v671 = vsel %vm639, %v623, %v655
  %v672 = vsel %vm640, %v624, %v656
  %v673 = vsel %vm641, %v625, %v657
  %v674 = vsel %vm42, 16843009, 0
  %v675 = vsel %vm43, 16843009, 0
  %v676 = vsel %vm44, 16843009, 0
  %v677 = vsel %vm45, 16843009, 0
  %v678 = vsel %vm46, 16843009, 0
  %v679 = vsel %vm47, 16843009, 0
  %v680 = vsel %vm48, 16843009, 0
  %v681 = vsel %vm49, 16843009, 0
  %v682 = vsel %vm50, 16843009, 0
  %v683 = vsel %vm51, 16843009, 0
  %v684 = vsel %vm52, 16843009, 0
  %v685 = vsel %vm53, 16843009, 0
  %v686 = vsel %vm54, 16843009, 0
  %v687 = vsel %vm55, 16843009, 0
  %v688 = vsel %vm56, 16843009, 0
  %v689 = vsel %vm57, 16843009, 0
  %v690 = vunpack.c.0.s8 %v674
  %v691 = vunpack.c.0.s8 %v675
  %v692 = vunpack.c.0.s8 %v676
  %v693 = vunpack.c.0.s8 %v677
  %v694 = vunpack.c.0.s8 %v678
  %v695 = vunpack.c.0.s8 %v679
  %v696 = vunpack.c.0.s8 %v680
  %v697 = vunpack.c.0.s8 %v681
  %v698 = vunpack.c.0.s8 %v682
  %v699 = vunpack.c.0.s8 %v683
  %v700 = vunpack.c.0.s8 %v684
  %v701 = vunpack.c.0.s8 %v685
  %v702 = vunpack.c.0.s8 %v686
  %v703 = vunpack.c.0.s8 %v687
  %v704 = vunpack.c.0.s8 %v688
  %v705 = vunpack.c.0.s8 %v689
  %vm706 = vcmp.ne.s32.totalorder %v690, 0
  %vm707 = vcmp.ne.s32.totalorder %v691, 0
  %vm708 = vcmp.ne.s32.totalorder %v692, 0
  %vm709 = vcmp.ne.s32.totalorder %v693, 0
  %vm710 = vcmp.ne.s32.totalorder %v694, 0
  %vm711 = vcmp.ne.s32.totalorder %v695, 0
  %vm712 = vcmp.ne.s32.totalorder %v696, 0
  %vm713 = vcmp.ne.s32.totalorder %v697, 0
  %vm714 = vcmp.ne.s32.totalorder %v698, 0
  %vm715 = vcmp.ne.s32.totalorder %v699, 0
  %vm716 = vcmp.ne.s32.totalorder %v700, 0
  %vm717 = vcmp.ne.s32.totalorder %v701, 0
  %vm718 = vcmp.ne.s32.totalorder %v702, 0
  %vm719 = vcmp.ne.s32.totalorder %v703, 0
  %vm720 = vcmp.ne.s32.totalorder %v704, 0
  %vm721 = vcmp.ne.s32.totalorder %v705, 0
  %v722 = vsel %vm706, %v658, -1e+30
  %v723 = vsel %vm707, %v659, -1e+30
  %v724 = vsel %vm708, %v660, -1e+30
  %v725 = vsel %vm709, %v661, -1e+30
  %v726 = vsel %vm710, %v662, -1e+30
  %v727 = vsel %vm711, %v663, -1e+30
  %v728 = vsel %vm712, %v664, -1e+30
  %v729 = vsel %vm713, %v665, -1e+30
  %v730 = vsel %vm714, %v666, -1e+30
  %v731 = vsel %vm715, %v667, -1e+30
  %v732 = vsel %vm716, %v668, -1e+30
  %v733 = vsel %vm717, %v669, -1e+30
  %v734 = vsel %vm718, %v670, -1e+30
  %v735 = vsel %vm719, %v671, -1e+30
  %v736 = vsel %vm720, %v672, -1e+30
  %v737 = vsel %vm721, %v673, -1e+30
  %738 = vmax.xlane.f32.xlu0 %v722
  %v739 = vpop.xlane.xlu0 %738
  %740 = vmax.xlane.f32.xlu0 %v723
  %v741 = vpop.xlane.xlu0 %740
  %742 = vmax.xlane.f32.xlu0 %v724
  %v743 = vpop.xlane.xlu0 %742
  %744 = vmax.xlane.f32.xlu0 %v725
  %v745 = vpop.xlane.xlu0 %744
  %746 = vmax.xlane.f32.xlu0 %v726
  %v747 = vpop.xlane.xlu0 %746
  %748 = vmax.xlane.f32.xlu0 %v727
  %v749 = vpop.xlane.xlu0 %748
  %750 = vmax.xlane.f32.xlu0 %v728
  %v751 = vpop.xlane.xlu0 %750
  %752 = vmax.xlane.f32.xlu0 %v729
  %v753 = vpop.xlane.xlu0 %752
  %754 = vmax.xlane.f32.xlu0 %v730
  %v755 = vpop.xlane.xlu0 %754
  %756 = vmax.xlane.f32.xlu0 %v731
  %v757 = vpop.xlane.xlu0 %756
  %758 = vmax.xlane.f32.xlu0 %v732
  %v759 = vpop.xlane.xlu0 %758
  %760 = vmax.xlane.f32.xlu0 %v733
  %v761 = vpop.xlane.xlu0 %760
  %762 = vmax.xlane.f32.xlu0 %v734
  %v763 = vpop.xlane.xlu0 %762
  %764 = vmax.xlane.f32.xlu0 %v735
  %v765 = vpop.xlane.xlu0 %764
  %766 = vmax.xlane.f32.xlu0 %v736
  %v767 = vpop.xlane.xlu0 %766
  %768 = vmax.xlane.f32.xlu0 %v737
  %v769 = vpop.xlane.xlu0 %768
  %v770 = vsub.f32 %v722, %v739
  %v771 = vsub.f32 %v723, %v741
  %v772 = vsub.f32 %v724, %v743
  %v773 = vsub.f32 %v725, %v745
  %v774 = vsub.f32 %v726, %v747
  %v775 = vsub.f32 %v727, %v749
  %v776 = vsub.f32 %v728, %v751
  %v777 = vsub.f32 %v729, %v753
  %v778 = vsub.f32 %v730, %v755
  %v779 = vsub.f32 %v731, %v757
  %v780 = vsub.f32 %v732, %v759
  %v781 = vsub.f32 %v733, %v761
  %v782 = vsub.f32 %v734, %v763
  %v783 = vsub.f32 %v735, %v765
  %v784 = vsub.f32 %v736, %v767
  %v785 = vsub.f32 %v737, %v769
  %v786 = vmul.f32 %v770, 1.442695
  %v787 = vpow.pop %v786
  %v788 = vmul.f32 %v771, 1.442695
  %v789 = vpow.pop %v788
  %v790 = vmul.f32 %v772, 1.442695
  %v791 = vpow.pop %v790
  %v792 = vmul.f32 %v773, 1.442695
  %v793 = vpow.pop %v792
  %v794 = vmul.f32 %v774, 1.442695
  %v795 = vpow.pop %v794
  %v796 = vmul.f32 %v775, 1.442695
  %v797 = vpow.pop %v796
  %v798 = vmul.f32 %v776, 1.442695
  %v799 = vpow.pop %v798
  %v800 = vmul.f32 %v777, 1.442695
  %v801 = vpow.pop %v800
  %v802 = vmul.f32 %v778, 1.442695
  %v803 = vpow.pop %v802
  %v804 = vmul.f32 %v779, 1.442695
  %v805 = vpow.pop %v804
  %v806 = vmul.f32 %v780, 1.442695
  %v807 = vpow.pop %v806
  %v808 = vmul.f32 %v781, 1.442695
  %v809 = vpow.pop %v808
  %v810 = vmul.f32 %v782, 1.442695
  %v811 = vpow.pop %v810
  %v812 = vmul.f32 %v783, 1.442695
  %v813 = vpow.pop %v812
  %v814 = vmul.f32 %v784, 1.442695
  %v815 = vpow.pop %v814
  %v816 = vmul.f32 %v785, 1.442695
  %v817 = vpow.pop %v816
  %818 = vadd.xlane.f32.xlu0 %v787
  %v819 = vpop.xlane.xlu0 %818
  %820 = vadd.xlane.f32.xlu0 %v789
  %v821 = vpop.xlane.xlu0 %820
  %822 = vadd.xlane.f32.xlu0 %v791
  %v823 = vpop.xlane.xlu0 %822
  %824 = vadd.xlane.f32.xlu0 %v793
  %v825 = vpop.xlane.xlu0 %824
  %826 = vadd.xlane.f32.xlu0 %v795
  %v827 = vpop.xlane.xlu0 %826
  %828 = vadd.xlane.f32.xlu0 %v797
  %v829 = vpop.xlane.xlu0 %828
  %830 = vadd.xlane.f32.xlu0 %v799
  %v831 = vpop.xlane.xlu0 %830
  %832 = vadd.xlane.f32.xlu0 %v801
  %v833 = vpop.xlane.xlu0 %832
  %834 = vadd.xlane.f32.xlu0 %v803
  %v835 = vpop.xlane.xlu0 %834
  %836 = vadd.xlane.f32.xlu0 %v805
  %v837 = vpop.xlane.xlu0 %836
  %838 = vadd.xlane.f32.xlu0 %v807
  %v839 = vpop.xlane.xlu0 %838
  %840 = vadd.xlane.f32.xlu0 %v809
  %v841 = vpop.xlane.xlu0 %840
  %842 = vadd.xlane.f32.xlu0 %v811
  %v843 = vpop.xlane.xlu0 %842
  %844 = vadd.xlane.f32.xlu0 %v813
  %v845 = vpop.xlane.xlu0 %844
  %846 = vadd.xlane.f32.xlu0 %v815
  %v847 = vpop.xlane.xlu0 %846
  %848 = vadd.xlane.f32.xlu0 %v817
  %v849 = vpop.xlane.xlu0 %848
  %v850 = vpack.c.bf16 %v789, %v787
  %v851 = vpack.c.bf16 %v793, %v791
  %v852 = vpack.c.bf16 %v797, %v795
  %v853 = vpack.c.bf16 %v801, %v799
  %v854 = vpack.c.bf16 %v805, %v803
  %v855 = vpack.c.bf16 %v809, %v807
  %v856 = vpack.c.bf16 %v813, %v811
  %v857 = vpack.c.bf16 %v817, %v815
  %858 = vmatprep.subr.bf16.mxu0 0
  %859 = vmatpush1.bf16.msra.mxu0 %v344
  %860 = vmatprep.subr.bf16.mxu0 0
  %861 = vmatpush1.bf16.msra.mxu0 %v343
  %862 = vmatprep.subr.bf16.mxu0 0
  %863 = vmatpush1.bf16.msra.mxu0 %v342
  %864 = vmatprep.subr.bf16.mxu0 0
  %865 = vmatpush1.bf16.msra.mxu0 %v341
  %866 = vmatprep.subr.bf16.mxu0 0
  %867 = vmatpush1.bf16.msra.mxu0 %v340
  %868 = vmatprep.subr.bf16.mxu0 0
  %869 = vmatpush1.bf16.msra.mxu0 %v339
  %870 = vmatprep.subr.bf16.mxu0 0
  %871 = vmatpush1.bf16.msra.mxu0 %v338
  %872 = vmatprep.subr.bf16.mxu0 0
  %873 = vmatpush1.bf16.msra.mxu0 %v337
  %874 = vmatprep.subr.bf16.mxu0 0
  %875 = vmatpush2.bf16.msra.mxu0 0
  %876 = vmatprep.subr.bf16.mxu0 0
  %877 = vmatpush2.bf16.msra.mxu0 0
  %878 = vmatprep.subr.bf16.mxu0 0
  %879 = vmatpush2.bf16.msra.mxu0 0
  %880 = vmatprep.subr.bf16.mxu0 0
  %881 = vmatpush2.bf16.msra.mxu0 0
  %882 = vmatprep.subr.bf16.mxu0 0
  %883 = vmatpush2.bf16.msra.mxu0 0
  %884 = vmatprep.subr.bf16.mxu0 0
  %885 = vmatpush2.bf16.msra.mxu0 0
  %886 = vmatprep.subr.bf16.mxu0 0
  %887 = vmatpush2.bf16.msra.mxu0 0
  %888 = vmatprep.subr.bf16.mxu0 0
  %889 = vmatpush2.bf16.msra.mxu0 0
  %890 = vmatprep.mubr.bf16.mxu0 0
  %891 = vmatmul.mubr.bf16.gmra.mxu0 %v850
  %v892 = vpop.f32.mrf.mxu0
  %v893 = vadd.f32 0.0, %v892
  %v894 = vpop.f32.mrf.mxu0
  %v895 = vpop.f32.mrf.mxu0
  %v896 = vadd.f32 0.0, %v895
  %v897 = vpop.f32.mrf.mxu0
  %898 = vmatprep.mubr.bf16.mxu0 0
  %899 = vmatmul.mubr.bf16.gmra.mxu0 %v851
  %v900 = vpop.f32.mrf.mxu0
  %v901 = vadd.f32 0.0, %v900
  %v902 = vpop.f32.mrf.mxu0
  %v903 = vpop.f32.mrf.mxu0
  %v904 = vadd.f32 0.0, %v903
  %v905 = vpop.f32.mrf.mxu0
  %906 = vmatprep.mubr.bf16.mxu0 0
  %907 = vmatmul.mubr.bf16.gmra.mxu0 %v852
  %v908 = vpop.f32.mrf.mxu0
  %v909 = vadd.f32 0.0, %v908
  %v910 = vpop.f32.mrf.mxu0
  %v911 = vpop.f32.mrf.mxu0
  %v912 = vadd.f32 0.0, %v911
  %v913 = vpop.f32.mrf.mxu0
  %914 = vmatprep.mubr.bf16.mxu0 0
  %915 = vmatmul.mubr.bf16.gmra.mxu0 %v853
  %v916 = vpop.f32.mrf.mxu0
  %v917 = vadd.f32 0.0, %v916
  %v918 = vpop.f32.mrf.mxu0
  %v919 = vpop.f32.mrf.mxu0
  %v920 = vadd.f32 0.0, %v919
  %v921 = vpop.f32.mrf.mxu0
  %922 = vmatprep.mubr.bf16.mxu0 0
  %923 = vmatmul.mubr.bf16.gmra.mxu0 %v854
  %v924 = vpop.f32.mrf.mxu0
  %v925 = vadd.f32 0.0, %v924
  %v926 = vpop.f32.mrf.mxu0
  %v927 = vpop.f32.mrf.mxu0
  %v928 = vadd.f32 0.0, %v927
  %v929 = vpop.f32.mrf.mxu0
  %930 = vmatprep.mubr.bf16.mxu0 0
  %931 = vmatmul.mubr.bf16.gmra.mxu0 %v855
  %v932 = vpop.f32.mrf.mxu0
  %v933 = vadd.f32 0.0, %v932
  %v934 = vpop.f32.mrf.mxu0
  %v935 = vpop.f32.mrf.mxu0
  %v936 = vadd.f32 0.0, %v935
  %v937 = vpop.f32.mrf.mxu0
  %938 = vmatprep.mubr.bf16.mxu0 0
  %939 = vmatmul.mubr.bf16.gmra.mxu0 %v856
  %v940 = vpop.f32.mrf.mxu0
  %v941 = vadd.f32 0.0, %v940
  %v942 = vpop.f32.mrf.mxu0
  %v943 = vpop.f32.mrf.mxu0
  %v944 = vadd.f32 0.0, %v943
  %v945 = vpop.f32.mrf.mxu0
  %946 = vmatprep.mubr.bf16.mxu0 0
  %947 = vmatmul.mubr.bf16.gmra.mxu0 %v857
  %v948 = vpop.f32.mrf.mxu0
  %v949 = vadd.f32 0.0, %v948
  %v950 = vpop.f32.mrf.mxu0
  %v951 = vpop.f32.mrf.mxu0
  %v952 = vadd.f32 0.0, %v951
  %v953 = vpop.f32.mrf.mxu0
  %954 = vdwg.mxu0
  %v955 = vrcp.pop %v819
  %v956 = vrcp.pop %v821
  %v957 = vrcp.pop %v823
  %v958 = vrcp.pop %v825
  %v959 = vrcp.pop %v827
  %v960 = vrcp.pop %v829
  %v961 = vrcp.pop %v831
  %v962 = vrcp.pop %v833
  %v963 = vrcp.pop %v835
  %v964 = vrcp.pop %v837
  %v965 = vrcp.pop %v839
  %v966 = vrcp.pop %v841
  %v967 = vrcp.pop %v843
  %v968 = vrcp.pop %v845
  %v969 = vrcp.pop %v847
  %v970 = vrcp.pop %v849
  %v971 = vmul.f32 %v893, %v955
  %v972 = vmul.f32 %v896, %v956
  %v973 = vmul.f32 %v901, %v957
  %v974 = vmul.f32 %v904, %v958
  %v975 = vmul.f32 %v909, %v959
  %v976 = vmul.f32 %v912, %v960
  %v977 = vmul.f32 %v917, %v961
  %v978 = vmul.f32 %v920, %v962
  %v979 = vmul.f32 %v925, %v963
  %v980 = vmul.f32 %v928, %v964
  %v981 = vmul.f32 %v933, %v965
  %v982 = vmul.f32 %v936, %v966
  %v983 = vmul.f32 %v941, %v967
  %v984 = vmul.f32 %v944, %v968
  %v985 = vmul.f32 %v949, %v969
  %v986 = vmul.f32 %v952, %v970
  %987 = vset.pattern.permute.xlu0 1
  %988 = vperm.xlu0 %987, %v464
  %v989 = vpop.permute.xlu0 %988
  %991 = vset.pattern.permute.xlu0 1
  %992 = vperm.xlu0 %991, %v467
  %v993 = vpop.permute.xlu0 %992
  %995 = vset.pattern.permute.xlu0 1
  %996 = vperm.xlu0 %995, %v472
  %v997 = vpop.permute.xlu0 %996
  %999 = vset.pattern.permute.xlu0 1
  %1000 = vperm.xlu0 %999, %v475
  %v1001 = vpop.permute.xlu0 %1000
  %1003 = vset.pattern.permute.xlu0 1
  %1004 = vperm.xlu0 %1003, %v480
  %v1005 = vpop.permute.xlu0 %1004
  %1007 = vset.pattern.permute.xlu0 1
  %1008 = vperm.xlu0 %1007, %v483
  %v1009 = vpop.permute.xlu0 %1008
  %1011 = vset.pattern.permute.xlu0 1
  %1012 = vperm.xlu0 %1011, %v488
  %v1013 = vpop.permute.xlu0 %1012
  %1015 = vset.pattern.permute.xlu0 1
  %1016 = vperm.xlu0 %1015, %v491
  %v1017 = vpop.permute.xlu0 %1016
  %1019 = vset.pattern.permute.xlu0 1
  %1020 = vperm.xlu0 %1019, %v496
  %v1021 = vpop.permute.xlu0 %1020
  %1023 = vset.pattern.permute.xlu0 1
  %1024 = vperm.xlu0 %1023, %v499
  %v1025 = vpop.permute.xlu0 %1024
  %1027 = vset.pattern.permute.xlu0 1
  %1028 = vperm.xlu0 %1027, %v504
  %v1029 = vpop.permute.xlu0 %1028
  %1031 = vset.pattern.permute.xlu0 1
  %1032 = vperm.xlu0 %1031, %v507
  %v1033 = vpop.permute.xlu0 %1032
  %1035 = vset.pattern.permute.xlu0 1
  %1036 = vperm.xlu0 %1035, %v512
  %v1037 = vpop.permute.xlu0 %1036
  %1039 = vset.pattern.permute.xlu0 1
  %1040 = vperm.xlu0 %1039, %v515
  %v1041 = vpop.permute.xlu0 %1040
  %1043 = vset.pattern.permute.xlu0 1
  %1044 = vperm.xlu0 %1043, %v520
  %v1045 = vpop.permute.xlu0 %1044
  %1047 = vset.pattern.permute.xlu0 1
  %1048 = vperm.xlu0 %1047, %v523
  %v1049 = vpop.permute.xlu0 %1048
  %v1051 = vlaneseq
  %v1052 = vshrl.u32 %v1051, 7
  %v1053 = vsub.s32 1, %v1052
  %v1054 = vrot.slane %v321, %v1053
  %v1055 = vadd.f32 %v989, %v1054
  %v1056 = vadd.f32 %v993, %v1054
  %v1057 = vadd.f32 %v997, %v1054
  %v1058 = vadd.f32 %v1001, %v1054
  %v1059 = vadd.f32 %v1005, %v1054
  %v1060 = vadd.f32 %v1009, %v1054
  %v1061 = vadd.f32 %v1013, %v1054
  %v1062 = vadd.f32 %v1017, %v1054
  %v1063 = vadd.f32 %v1021, %v1054
  %v1064 = vadd.f32 %v1025, %v1054
  %v1065 = vadd.f32 %v1029, %v1054
  %v1066 = vadd.f32 %v1033, %v1054
  %v1067 = vadd.f32 %v1037, %v1054
  %v1068 = vadd.f32 %v1041, %v1054
  %v1069 = vadd.f32 %v1045, %v1054
  %v1070 = vadd.f32 %v1049, %v1054
  %vm1071 = vcmp.gt.f32.partialorder %v1055, 0.0
  %vm1072 = vcmp.gt.f32.partialorder %v1056, 0.0
  %vm1073 = vcmp.gt.f32.partialorder %v1057, 0.0
  %vm1074 = vcmp.gt.f32.partialorder %v1058, 0.0
  %vm1075 = vcmp.gt.f32.partialorder %v1059, 0.0
  %vm1076 = vcmp.gt.f32.partialorder %v1060, 0.0
  %vm1077 = vcmp.gt.f32.partialorder %v1061, 0.0
  %vm1078 = vcmp.gt.f32.partialorder %v1062, 0.0
  %vm1079 = vcmp.gt.f32.partialorder %v1063, 0.0
  %vm1080 = vcmp.gt.f32.partialorder %v1064, 0.0
  %vm1081 = vcmp.gt.f32.partialorder %v1065, 0.0
  %vm1082 = vcmp.gt.f32.partialorder %v1066, 0.0
  %vm1083 = vcmp.gt.f32.partialorder %v1067, 0.0
  %vm1084 = vcmp.gt.f32.partialorder %v1068, 0.0
  %vm1085 = vcmp.gt.f32.partialorder %v1069, 0.0
  %vm1086 = vcmp.gt.f32.partialorder %v1070, 0.0
  %v1087 = vmul.f32 %v1055, 0.2
  %v1088 = vmul.f32 %v1056, 0.2
  %v1089 = vmul.f32 %v1057, 0.2
  %v1090 = vmul.f32 %v1058, 0.2
  %v1091 = vmul.f32 %v1059, 0.2
  %v1092 = vmul.f32 %v1060, 0.2
  %v1093 = vmul.f32 %v1061, 0.2
  %v1094 = vmul.f32 %v1062, 0.2
  %v1095 = vmul.f32 %v1063, 0.2
  %v1096 = vmul.f32 %v1064, 0.2
  %v1097 = vmul.f32 %v1065, 0.2
  %v1098 = vmul.f32 %v1066, 0.2
  %v1099 = vmul.f32 %v1067, 0.2
  %v1100 = vmul.f32 %v1068, 0.2
  %v1101 = vmul.f32 %v1069, 0.2
  %v1102 = vmul.f32 %v1070, 0.2
  %v1103 = vsel %vm1071, %v1055, %v1087
  %v1104 = vsel %vm1072, %v1056, %v1088
  %v1105 = vsel %vm1073, %v1057, %v1089
  %v1106 = vsel %vm1074, %v1058, %v1090
  %v1107 = vsel %vm1075, %v1059, %v1091
  %v1108 = vsel %vm1076, %v1060, %v1092
  %v1109 = vsel %vm1077, %v1061, %v1093
  %v1110 = vsel %vm1078, %v1062, %v1094
  %v1111 = vsel %vm1079, %v1063, %v1095
  %v1112 = vsel %vm1080, %v1064, %v1096
  %v1113 = vsel %vm1081, %v1065, %v1097
  %v1114 = vsel %vm1082, %v1066, %v1098
  %v1115 = vsel %vm1083, %v1067, %v1099
  %v1116 = vsel %vm1084, %v1068, %v1100
  %v1117 = vsel %vm1085, %v1069, %v1101
  %v1118 = vsel %vm1086, %v1070, %v1102
  %v1119 = vsel %vm706, %v1103, -1e+30
  %v1120 = vsel %vm707, %v1104, -1e+30
  %v1121 = vsel %vm708, %v1105, -1e+30
  %v1122 = vsel %vm709, %v1106, -1e+30
  %v1123 = vsel %vm710, %v1107, -1e+30
  %v1124 = vsel %vm711, %v1108, -1e+30
  %v1125 = vsel %vm712, %v1109, -1e+30
  %v1126 = vsel %vm713, %v1110, -1e+30
  %v1127 = vsel %vm714, %v1111, -1e+30
  %v1128 = vsel %vm715, %v1112, -1e+30
  %v1129 = vsel %vm716, %v1113, -1e+30
  %v1130 = vsel %vm717, %v1114, -1e+30
  %v1131 = vsel %vm718, %v1115, -1e+30
  %v1132 = vsel %vm719, %v1116, -1e+30
  %v1133 = vsel %vm720, %v1117, -1e+30
  %v1134 = vsel %vm721, %v1118, -1e+30
  %1135 = vmax.xlane.f32.xlu0 %v1119
  %v1136 = vpop.xlane.xlu0 %1135
  %1137 = vmax.xlane.f32.xlu0 %v1120
  %v1138 = vpop.xlane.xlu0 %1137
  %1139 = vmax.xlane.f32.xlu0 %v1121
  %v1140 = vpop.xlane.xlu0 %1139
  %1141 = vmax.xlane.f32.xlu0 %v1122
  %v1142 = vpop.xlane.xlu0 %1141
  %1143 = vmax.xlane.f32.xlu0 %v1123
  %v1144 = vpop.xlane.xlu0 %1143
  %1145 = vmax.xlane.f32.xlu0 %v1124
  %v1146 = vpop.xlane.xlu0 %1145
  %1147 = vmax.xlane.f32.xlu0 %v1125
  %v1148 = vpop.xlane.xlu0 %1147
  %1149 = vmax.xlane.f32.xlu0 %v1126
  %v1150 = vpop.xlane.xlu0 %1149
  %1151 = vmax.xlane.f32.xlu0 %v1127
  %v1152 = vpop.xlane.xlu0 %1151
  %1153 = vmax.xlane.f32.xlu0 %v1128
  %v1154 = vpop.xlane.xlu0 %1153
  %1155 = vmax.xlane.f32.xlu0 %v1129
  %v1156 = vpop.xlane.xlu0 %1155
  %1157 = vmax.xlane.f32.xlu0 %v1130
  %v1158 = vpop.xlane.xlu0 %1157
  %1159 = vmax.xlane.f32.xlu0 %v1131
  %v1160 = vpop.xlane.xlu0 %1159
  %1161 = vmax.xlane.f32.xlu0 %v1132
  %v1162 = vpop.xlane.xlu0 %1161
  %1163 = vmax.xlane.f32.xlu0 %v1133
  %v1164 = vpop.xlane.xlu0 %1163
  %1165 = vmax.xlane.f32.xlu0 %v1134
  %v1166 = vpop.xlane.xlu0 %1165
  %v1167 = vsub.f32 %v1119, %v1136
  %v1168 = vsub.f32 %v1120, %v1138
  %v1169 = vsub.f32 %v1121, %v1140
  %v1170 = vsub.f32 %v1122, %v1142
  %v1171 = vsub.f32 %v1123, %v1144
  %v1172 = vsub.f32 %v1124, %v1146
  %v1173 = vsub.f32 %v1125, %v1148
  %v1174 = vsub.f32 %v1126, %v1150
  %v1175 = vsub.f32 %v1127, %v1152
  %v1176 = vsub.f32 %v1128, %v1154
  %v1177 = vsub.f32 %v1129, %v1156
  %v1178 = vsub.f32 %v1130, %v1158
  %v1179 = vsub.f32 %v1131, %v1160
  %v1180 = vsub.f32 %v1132, %v1162
  %v1181 = vsub.f32 %v1133, %v1164
  %v1182 = vsub.f32 %v1134, %v1166
  %v1183 = vmul.f32 %v1167, 1.442695
  %v1184 = vpow.pop %v1183
  %v1185 = vmul.f32 %v1168, 1.442695
  %v1186 = vpow.pop %v1185
  %v1187 = vmul.f32 %v1169, 1.442695
  %v1188 = vpow.pop %v1187
  %v1189 = vmul.f32 %v1170, 1.442695
  %v1190 = vpow.pop %v1189
  %v1191 = vmul.f32 %v1171, 1.442695
  %v1192 = vpow.pop %v1191
  %v1193 = vmul.f32 %v1172, 1.442695
  %v1194 = vpow.pop %v1193
  %v1195 = vmul.f32 %v1173, 1.442695
  %v1196 = vpow.pop %v1195
  %v1197 = vmul.f32 %v1174, 1.442695
  %v1198 = vpow.pop %v1197
  %v1199 = vmul.f32 %v1175, 1.442695
  %v1200 = vpow.pop %v1199
  %v1201 = vmul.f32 %v1176, 1.442695
  %v1202 = vpow.pop %v1201
  %v1203 = vmul.f32 %v1177, 1.442695
  %v1204 = vpow.pop %v1203
  %v1205 = vmul.f32 %v1178, 1.442695
  %v1206 = vpow.pop %v1205
  %v1207 = vmul.f32 %v1179, 1.442695
  %v1208 = vpow.pop %v1207
  %v1209 = vmul.f32 %v1180, 1.442695
  %v1210 = vpow.pop %v1209
  %v1211 = vmul.f32 %v1181, 1.442695
  %v1212 = vpow.pop %v1211
  %v1213 = vmul.f32 %v1182, 1.442695
  %v1214 = vpow.pop %v1213
  %1215 = vadd.xlane.f32.xlu0 %v1184
  %v1216 = vpop.xlane.xlu0 %1215
  %1217 = vadd.xlane.f32.xlu0 %v1186
  %v1218 = vpop.xlane.xlu0 %1217
  %1219 = vadd.xlane.f32.xlu0 %v1188
  %v1220 = vpop.xlane.xlu0 %1219
  %1221 = vadd.xlane.f32.xlu0 %v1190
  %v1222 = vpop.xlane.xlu0 %1221
  %1223 = vadd.xlane.f32.xlu0 %v1192
  %v1224 = vpop.xlane.xlu0 %1223
  %1225 = vadd.xlane.f32.xlu0 %v1194
  %v1226 = vpop.xlane.xlu0 %1225
  %1227 = vadd.xlane.f32.xlu0 %v1196
  %v1228 = vpop.xlane.xlu0 %1227
  %1229 = vadd.xlane.f32.xlu0 %v1198
  %v1230 = vpop.xlane.xlu0 %1229
  %1231 = vadd.xlane.f32.xlu0 %v1200
  %v1232 = vpop.xlane.xlu0 %1231
  %1233 = vadd.xlane.f32.xlu0 %v1202
  %v1234 = vpop.xlane.xlu0 %1233
  %1235 = vadd.xlane.f32.xlu0 %v1204
  %v1236 = vpop.xlane.xlu0 %1235
  %1237 = vadd.xlane.f32.xlu0 %v1206
  %v1238 = vpop.xlane.xlu0 %1237
  %1239 = vadd.xlane.f32.xlu0 %v1208
  %v1240 = vpop.xlane.xlu0 %1239
  %1241 = vadd.xlane.f32.xlu0 %v1210
  %v1242 = vpop.xlane.xlu0 %1241
  %1243 = vadd.xlane.f32.xlu0 %v1212
  %v1244 = vpop.xlane.xlu0 %1243
  %1245 = vadd.xlane.f32.xlu0 %v1214
  %v1246 = vpop.xlane.xlu0 %1245
  %v1247 = vpack.c.bf16 %v1186, %v1184
  %v1248 = vpack.c.bf16 %v1190, %v1188
  %v1249 = vpack.c.bf16 %v1194, %v1192
  %v1250 = vpack.c.bf16 %v1198, %v1196
  %v1251 = vpack.c.bf16 %v1202, %v1200
  %v1252 = vpack.c.bf16 %v1206, %v1204
  %v1253 = vpack.c.bf16 %v1210, %v1208
  %v1254 = vpack.c.bf16 %v1214, %v1212
  %1263 = vrot.lane.b32.xlu0 %v337, 120
  %v1264 = vpop.permute.xlu0 %1263
  %1265 = vrot.lane.b32.xlu0 %v338, 120
  %v1266 = vpop.permute.xlu0 %1265
  %1267 = vrot.lane.b32.xlu0 %v339, 120
  %v1268 = vpop.permute.xlu0 %1267
  %1269 = vrot.lane.b32.xlu0 %v340, 120
  %v1270 = vpop.permute.xlu0 %1269
  %1271 = vrot.lane.b32.xlu0 %v341, 120
  %v1272 = vpop.permute.xlu0 %1271
  %1273 = vrot.lane.b32.xlu0 %v342, 120
  %v1274 = vpop.permute.xlu0 %1273
  %1275 = vrot.lane.b32.xlu0 %v343, 120
  %v1276 = vpop.permute.xlu0 %1275
  %1277 = vrot.lane.b32.xlu0 %v344, 120
  %v1278 = vpop.permute.xlu0 %1277
  %1287 = vmatprep.subr.bf16.mxu0 0
  %1288 = vmatpush1.bf16.msra.mxu0 %v1278
  %1289 = vmatprep.subr.bf16.mxu0 0
  %1290 = vmatpush1.bf16.msra.mxu0 %v1276
  %1291 = vmatprep.subr.bf16.mxu0 0
  %1292 = vmatpush1.bf16.msra.mxu0 %v1274
  %1293 = vmatprep.subr.bf16.mxu0 0
  %1294 = vmatpush1.bf16.msra.mxu0 %v1272
  %1295 = vmatprep.subr.bf16.mxu0 0
  %1296 = vmatpush1.bf16.msra.mxu0 %v1270
  %1297 = vmatprep.subr.bf16.mxu0 0
  %1298 = vmatpush1.bf16.msra.mxu0 %v1268
  %1299 = vmatprep.subr.bf16.mxu0 0
  %1300 = vmatpush1.bf16.msra.mxu0 %v1266
  %1301 = vmatprep.subr.bf16.mxu0 0
  %1302 = vmatpush1.bf16.msra.mxu0 %v1264
  %1303 = vmatprep.subr.bf16.mxu0 0
  %1304 = vmatpush2.bf16.msra.mxu0 0
  %1305 = vmatprep.subr.bf16.mxu0 0
  %1306 = vmatpush2.bf16.msra.mxu0 0
  %1307 = vmatprep.subr.bf16.mxu0 0
  %1308 = vmatpush2.bf16.msra.mxu0 0
  %1309 = vmatprep.subr.bf16.mxu0 0
  %1310 = vmatpush2.bf16.msra.mxu0 0
  %1311 = vmatprep.subr.bf16.mxu0 0
  %1312 = vmatpush2.bf16.msra.mxu0 0
  %1313 = vmatprep.subr.bf16.mxu0 0
  %1314 = vmatpush2.bf16.msra.mxu0 0
  %1315 = vmatprep.subr.bf16.mxu0 0
  %1316 = vmatpush2.bf16.msra.mxu0 0
  %1317 = vmatprep.subr.bf16.mxu0 0
  %1318 = vmatpush2.bf16.msra.mxu0 0
  %1319 = vmatprep.mubr.bf16.mxu0 0
  %1320 = vmatmul.mubr.bf16.gmra.mxu0 %v1247
  %v1321 = vpop.f32.mrf.mxu0
  %v1322 = vadd.f32 0.0, %v1321
  %v1323 = vpop.f32.mrf.mxu0
  %v1324 = vpop.f32.mrf.mxu0
  %v1325 = vadd.f32 0.0, %v1324
  %v1326 = vpop.f32.mrf.mxu0
  %1327 = vmatprep.mubr.bf16.mxu0 0
  %1328 = vmatmul.mubr.bf16.gmra.mxu0 %v1248
  %v1329 = vpop.f32.mrf.mxu0
  %v1330 = vadd.f32 0.0, %v1329
  %v1331 = vpop.f32.mrf.mxu0
  %v1332 = vpop.f32.mrf.mxu0
  %v1333 = vadd.f32 0.0, %v1332
  %v1334 = vpop.f32.mrf.mxu0
  %1335 = vmatprep.mubr.bf16.mxu0 0
  %1336 = vmatmul.mubr.bf16.gmra.mxu0 %v1249
  %v1337 = vpop.f32.mrf.mxu0
  %v1338 = vadd.f32 0.0, %v1337
  %v1339 = vpop.f32.mrf.mxu0
  %v1340 = vpop.f32.mrf.mxu0
  %v1341 = vadd.f32 0.0, %v1340
  %v1342 = vpop.f32.mrf.mxu0
  %1343 = vmatprep.mubr.bf16.mxu0 0
  %1344 = vmatmul.mubr.bf16.gmra.mxu0 %v1250
  %v1345 = vpop.f32.mrf.mxu0
  %v1346 = vadd.f32 0.0, %v1345
  %v1347 = vpop.f32.mrf.mxu0
  %v1348 = vpop.f32.mrf.mxu0
  %v1349 = vadd.f32 0.0, %v1348
  %v1350 = vpop.f32.mrf.mxu0
  %1351 = vmatprep.mubr.bf16.mxu0 0
  %1352 = vmatmul.mubr.bf16.gmra.mxu0 %v1251
  %v1353 = vpop.f32.mrf.mxu0
  %v1354 = vadd.f32 0.0, %v1353
  %v1355 = vpop.f32.mrf.mxu0
  %v1356 = vpop.f32.mrf.mxu0
  %v1357 = vadd.f32 0.0, %v1356
  %v1358 = vpop.f32.mrf.mxu0
  %1359 = vmatprep.mubr.bf16.mxu0 0
  %1360 = vmatmul.mubr.bf16.gmra.mxu0 %v1252
  %v1361 = vpop.f32.mrf.mxu0
  %v1362 = vadd.f32 0.0, %v1361
  %v1363 = vpop.f32.mrf.mxu0
  %v1364 = vpop.f32.mrf.mxu0
  %v1365 = vadd.f32 0.0, %v1364
  %v1366 = vpop.f32.mrf.mxu0
  %1367 = vmatprep.mubr.bf16.mxu0 0
  %1368 = vmatmul.mubr.bf16.gmra.mxu0 %v1253
  %v1369 = vpop.f32.mrf.mxu0
  %v1370 = vadd.f32 0.0, %v1369
  %v1371 = vpop.f32.mrf.mxu0
  %v1372 = vpop.f32.mrf.mxu0
  %v1373 = vadd.f32 0.0, %v1372
  %v1374 = vpop.f32.mrf.mxu0
  %1375 = vmatprep.mubr.bf16.mxu0 0
  %1376 = vmatmul.mubr.bf16.gmra.mxu0 %v1254
  %v1377 = vpop.f32.mrf.mxu0
  %v1378 = vadd.f32 0.0, %v1377
  %v1379 = vpop.f32.mrf.mxu0
  %v1380 = vpop.f32.mrf.mxu0
  %v1381 = vadd.f32 0.0, %v1380
  %v1382 = vpop.f32.mrf.mxu0
  %1383 = vdwg.mxu0
  %v1384 = vrcp.pop %v1216
  %v1385 = vrcp.pop %v1218
  %v1386 = vrcp.pop %v1220
  %v1387 = vrcp.pop %v1222
  %v1388 = vrcp.pop %v1224
  %v1389 = vrcp.pop %v1226
  %v1390 = vrcp.pop %v1228
  %v1391 = vrcp.pop %v1230
  %v1392 = vrcp.pop %v1232
  %v1393 = vrcp.pop %v1234
  %v1394 = vrcp.pop %v1236
  %v1395 = vrcp.pop %v1238
  %v1396 = vrcp.pop %v1240
  %v1397 = vrcp.pop %v1242
  %v1398 = vrcp.pop %v1244
  %v1399 = vrcp.pop %v1246
  %v1400 = vmul.f32 %v1322, %v1384
  %v1401 = vmul.f32 %v1325, %v1385
  %v1402 = vmul.f32 %v1330, %v1386
  %v1403 = vmul.f32 %v1333, %v1387
  %v1404 = vmul.f32 %v1338, %v1388
  %v1405 = vmul.f32 %v1341, %v1389
  %v1406 = vmul.f32 %v1346, %v1390
  %v1407 = vmul.f32 %v1349, %v1391
  %v1408 = vmul.f32 %v1354, %v1392
  %v1409 = vmul.f32 %v1357, %v1393
  %v1410 = vmul.f32 %v1362, %v1394
  %v1411 = vmul.f32 %v1365, %v1395
  %v1412 = vmul.f32 %v1370, %v1396
  %v1413 = vmul.f32 %v1373, %v1397
  %v1414 = vmul.f32 %v1378, %v1398
  %v1415 = vmul.f32 %v1381, %v1399
  %1416 = vset.pattern.permute.xlu0 2
  %1417 = vperm.xlu0 %1416, %v464
  %v1418 = vpop.permute.xlu0 %1417
  %1420 = vset.pattern.permute.xlu0 2
  %1421 = vperm.xlu0 %1420, %v467
  %v1422 = vpop.permute.xlu0 %1421
  %1424 = vset.pattern.permute.xlu0 2
  %1425 = vperm.xlu0 %1424, %v472
  %v1426 = vpop.permute.xlu0 %1425
  %1428 = vset.pattern.permute.xlu0 2
  %1429 = vperm.xlu0 %1428, %v475
  %v1430 = vpop.permute.xlu0 %1429
  %1432 = vset.pattern.permute.xlu0 2
  %1433 = vperm.xlu0 %1432, %v480
  %v1434 = vpop.permute.xlu0 %1433
  %1436 = vset.pattern.permute.xlu0 2
  %1437 = vperm.xlu0 %1436, %v483
  %v1438 = vpop.permute.xlu0 %1437
  %1440 = vset.pattern.permute.xlu0 2
  %1441 = vperm.xlu0 %1440, %v488
  %v1442 = vpop.permute.xlu0 %1441
  %1444 = vset.pattern.permute.xlu0 2
  %1445 = vperm.xlu0 %1444, %v491
  %v1446 = vpop.permute.xlu0 %1445
  %1448 = vset.pattern.permute.xlu0 2
  %1449 = vperm.xlu0 %1448, %v496
  %v1450 = vpop.permute.xlu0 %1449
  %1452 = vset.pattern.permute.xlu0 2
  %1453 = vperm.xlu0 %1452, %v499
  %v1454 = vpop.permute.xlu0 %1453
  %1456 = vset.pattern.permute.xlu0 2
  %1457 = vperm.xlu0 %1456, %v504
  %v1458 = vpop.permute.xlu0 %1457
  %1460 = vset.pattern.permute.xlu0 2
  %1461 = vperm.xlu0 %1460, %v507
  %v1462 = vpop.permute.xlu0 %1461
  %1464 = vset.pattern.permute.xlu0 2
  %1465 = vperm.xlu0 %1464, %v512
  %v1466 = vpop.permute.xlu0 %1465
  %1468 = vset.pattern.permute.xlu0 2
  %1469 = vperm.xlu0 %1468, %v515
  %v1470 = vpop.permute.xlu0 %1469
  %1472 = vset.pattern.permute.xlu0 2
  %1473 = vperm.xlu0 %1472, %v520
  %v1474 = vpop.permute.xlu0 %1473
  %1476 = vset.pattern.permute.xlu0 2
  %1477 = vperm.xlu0 %1476, %v523
  %v1478 = vpop.permute.xlu0 %1477
  %v1480 = vlaneseq
  %v1481 = vshrl.u32 %v1480, 7
  %v1482 = vsub.s32 2, %v1481
  %v1483 = vrot.slane %v321, %v1482
  %v1484 = vadd.f32 %v1418, %v1483
  %v1485 = vadd.f32 %v1422, %v1483
  %v1486 = vadd.f32 %v1426, %v1483
  %v1487 = vadd.f32 %v1430, %v1483
  %v1488 = vadd.f32 %v1434, %v1483
  %v1489 = vadd.f32 %v1438, %v1483
  %v1490 = vadd.f32 %v1442, %v1483
  %v1491 = vadd.f32 %v1446, %v1483
  %v1492 = vadd.f32 %v1450, %v1483
  %v1493 = vadd.f32 %v1454, %v1483
  %v1494 = vadd.f32 %v1458, %v1483
  %v1495 = vadd.f32 %v1462, %v1483
  %v1496 = vadd.f32 %v1466, %v1483
  %v1497 = vadd.f32 %v1470, %v1483
  %v1498 = vadd.f32 %v1474, %v1483
  %v1499 = vadd.f32 %v1478, %v1483
  %vm1500 = vcmp.gt.f32.partialorder %v1484, 0.0
  %vm1501 = vcmp.gt.f32.partialorder %v1485, 0.0
  %vm1502 = vcmp.gt.f32.partialorder %v1486, 0.0
  %vm1503 = vcmp.gt.f32.partialorder %v1487, 0.0
  %vm1504 = vcmp.gt.f32.partialorder %v1488, 0.0
  %vm1505 = vcmp.gt.f32.partialorder %v1489, 0.0
  %vm1506 = vcmp.gt.f32.partialorder %v1490, 0.0
  %vm1507 = vcmp.gt.f32.partialorder %v1491, 0.0
  %vm1508 = vcmp.gt.f32.partialorder %v1492, 0.0
  %vm1509 = vcmp.gt.f32.partialorder %v1493, 0.0
  %vm1510 = vcmp.gt.f32.partialorder %v1494, 0.0
  %vm1511 = vcmp.gt.f32.partialorder %v1495, 0.0
  %vm1512 = vcmp.gt.f32.partialorder %v1496, 0.0
  %vm1513 = vcmp.gt.f32.partialorder %v1497, 0.0
  %vm1514 = vcmp.gt.f32.partialorder %v1498, 0.0
  %vm1515 = vcmp.gt.f32.partialorder %v1499, 0.0
  %v1516 = vmul.f32 %v1484, 0.2
  %v1517 = vmul.f32 %v1485, 0.2
  %v1518 = vmul.f32 %v1486, 0.2
  %v1519 = vmul.f32 %v1487, 0.2
  %v1520 = vmul.f32 %v1488, 0.2
  %v1521 = vmul.f32 %v1489, 0.2
  %v1522 = vmul.f32 %v1490, 0.2
  %v1523 = vmul.f32 %v1491, 0.2
  %v1524 = vmul.f32 %v1492, 0.2
  %v1525 = vmul.f32 %v1493, 0.2
  %v1526 = vmul.f32 %v1494, 0.2
  %v1527 = vmul.f32 %v1495, 0.2
  %v1528 = vmul.f32 %v1496, 0.2
  %v1529 = vmul.f32 %v1497, 0.2
  %v1530 = vmul.f32 %v1498, 0.2
  %v1531 = vmul.f32 %v1499, 0.2
  %v1532 = vsel %vm1500, %v1484, %v1516
  %v1533 = vsel %vm1501, %v1485, %v1517
  %v1534 = vsel %vm1502, %v1486, %v1518
  %v1535 = vsel %vm1503, %v1487, %v1519
  %v1536 = vsel %vm1504, %v1488, %v1520
  %v1537 = vsel %vm1505, %v1489, %v1521
  %v1538 = vsel %vm1506, %v1490, %v1522
  %v1539 = vsel %vm1507, %v1491, %v1523
  %v1540 = vsel %vm1508, %v1492, %v1524
  %v1541 = vsel %vm1509, %v1493, %v1525
  %v1542 = vsel %vm1510, %v1494, %v1526
  %v1543 = vsel %vm1511, %v1495, %v1527
  %v1544 = vsel %vm1512, %v1496, %v1528
  %v1545 = vsel %vm1513, %v1497, %v1529
  %v1546 = vsel %vm1514, %v1498, %v1530
  %v1547 = vsel %vm1515, %v1499, %v1531
  %v1548 = vsel %vm706, %v1532, -1e+30
  %v1549 = vsel %vm707, %v1533, -1e+30
  %v1550 = vsel %vm708, %v1534, -1e+30
  %v1551 = vsel %vm709, %v1535, -1e+30
  %v1552 = vsel %vm710, %v1536, -1e+30
  %v1553 = vsel %vm711, %v1537, -1e+30
  %v1554 = vsel %vm712, %v1538, -1e+30
  %v1555 = vsel %vm713, %v1539, -1e+30
  %v1556 = vsel %vm714, %v1540, -1e+30
  %v1557 = vsel %vm715, %v1541, -1e+30
  %v1558 = vsel %vm716, %v1542, -1e+30
  %v1559 = vsel %vm717, %v1543, -1e+30
  %v1560 = vsel %vm718, %v1544, -1e+30
  %v1561 = vsel %vm719, %v1545, -1e+30
  %v1562 = vsel %vm720, %v1546, -1e+30
  %v1563 = vsel %vm721, %v1547, -1e+30
  %1564 = vmax.xlane.f32.xlu0 %v1548
  %v1565 = vpop.xlane.xlu0 %1564
  %1566 = vmax.xlane.f32.xlu0 %v1549
  %v1567 = vpop.xlane.xlu0 %1566
  %1568 = vmax.xlane.f32.xlu0 %v1550
  %v1569 = vpop.xlane.xlu0 %1568
  %1570 = vmax.xlane.f32.xlu0 %v1551
  %v1571 = vpop.xlane.xlu0 %1570
  %1572 = vmax.xlane.f32.xlu0 %v1552
  %v1573 = vpop.xlane.xlu0 %1572
  %1574 = vmax.xlane.f32.xlu0 %v1553
  %v1575 = vpop.xlane.xlu0 %1574
  %1576 = vmax.xlane.f32.xlu0 %v1554
  %v1577 = vpop.xlane.xlu0 %1576
  %1578 = vmax.xlane.f32.xlu0 %v1555
  %v1579 = vpop.xlane.xlu0 %1578
  %1580 = vmax.xlane.f32.xlu0 %v1556
  %v1581 = vpop.xlane.xlu0 %1580
  %1582 = vmax.xlane.f32.xlu0 %v1557
  %v1583 = vpop.xlane.xlu0 %1582
  %1584 = vmax.xlane.f32.xlu0 %v1558
  %v1585 = vpop.xlane.xlu0 %1584
  %1586 = vmax.xlane.f32.xlu0 %v1559
  %v1587 = vpop.xlane.xlu0 %1586
  %1588 = vmax.xlane.f32.xlu0 %v1560
  %v1589 = vpop.xlane.xlu0 %1588
  %1590 = vmax.xlane.f32.xlu0 %v1561
  %v1591 = vpop.xlane.xlu0 %1590
  %1592 = vmax.xlane.f32.xlu0 %v1562
  %v1593 = vpop.xlane.xlu0 %1592
  %1594 = vmax.xlane.f32.xlu0 %v1563
  %v1595 = vpop.xlane.xlu0 %1594
  %v1596 = vsub.f32 %v1548, %v1565
  %v1597 = vsub.f32 %v1549, %v1567
  %v1598 = vsub.f32 %v1550, %v1569
  %v1599 = vsub.f32 %v1551, %v1571
  %v1600 = vsub.f32 %v1552, %v1573
  %v1601 = vsub.f32 %v1553, %v1575
  %v1602 = vsub.f32 %v1554, %v1577
  %v1603 = vsub.f32 %v1555, %v1579
  %v1604 = vsub.f32 %v1556, %v1581
  %v1605 = vsub.f32 %v1557, %v1583
  %v1606 = vsub.f32 %v1558, %v1585
  %v1607 = vsub.f32 %v1559, %v1587
  %v1608 = vsub.f32 %v1560, %v1589
  %v1609 = vsub.f32 %v1561, %v1591
  %v1610 = vsub.f32 %v1562, %v1593
  %v1611 = vsub.f32 %v1563, %v1595
  %v1612 = vmul.f32 %v1596, 1.442695
  %v1613 = vpow.pop %v1612
  %v1614 = vmul.f32 %v1597, 1.442695
  %v1615 = vpow.pop %v1614
  %v1616 = vmul.f32 %v1598, 1.442695
  %v1617 = vpow.pop %v1616
  %v1618 = vmul.f32 %v1599, 1.442695
  %v1619 = vpow.pop %v1618
  %v1620 = vmul.f32 %v1600, 1.442695
  %v1621 = vpow.pop %v1620
  %v1622 = vmul.f32 %v1601, 1.442695
  %v1623 = vpow.pop %v1622
  %v1624 = vmul.f32 %v1602, 1.442695
  %v1625 = vpow.pop %v1624
  %v1626 = vmul.f32 %v1603, 1.442695
  %v1627 = vpow.pop %v1626
  %v1628 = vmul.f32 %v1604, 1.442695
  %v1629 = vpow.pop %v1628
  %v1630 = vmul.f32 %v1605, 1.442695
  %v1631 = vpow.pop %v1630
  %v1632 = vmul.f32 %v1606, 1.442695
  %v1633 = vpow.pop %v1632
  %v1634 = vmul.f32 %v1607, 1.442695
  %v1635 = vpow.pop %v1634
  %v1636 = vmul.f32 %v1608, 1.442695
  %v1637 = vpow.pop %v1636
  %v1638 = vmul.f32 %v1609, 1.442695
  %v1639 = vpow.pop %v1638
  %v1640 = vmul.f32 %v1610, 1.442695
  %v1641 = vpow.pop %v1640
  %v1642 = vmul.f32 %v1611, 1.442695
  %v1643 = vpow.pop %v1642
  %1644 = vadd.xlane.f32.xlu0 %v1613
  %v1645 = vpop.xlane.xlu0 %1644
  %1646 = vadd.xlane.f32.xlu0 %v1615
  %v1647 = vpop.xlane.xlu0 %1646
  %1648 = vadd.xlane.f32.xlu0 %v1617
  %v1649 = vpop.xlane.xlu0 %1648
  %1650 = vadd.xlane.f32.xlu0 %v1619
  %v1651 = vpop.xlane.xlu0 %1650
  %1652 = vadd.xlane.f32.xlu0 %v1621
  %v1653 = vpop.xlane.xlu0 %1652
  %1654 = vadd.xlane.f32.xlu0 %v1623
  %v1655 = vpop.xlane.xlu0 %1654
  %1656 = vadd.xlane.f32.xlu0 %v1625
  %v1657 = vpop.xlane.xlu0 %1656
  %1658 = vadd.xlane.f32.xlu0 %v1627
  %v1659 = vpop.xlane.xlu0 %1658
  %1660 = vadd.xlane.f32.xlu0 %v1629
  %v1661 = vpop.xlane.xlu0 %1660
  %1662 = vadd.xlane.f32.xlu0 %v1631
  %v1663 = vpop.xlane.xlu0 %1662
  %1664 = vadd.xlane.f32.xlu0 %v1633
  %v1665 = vpop.xlane.xlu0 %1664
  %1666 = vadd.xlane.f32.xlu0 %v1635
  %v1667 = vpop.xlane.xlu0 %1666
  %1668 = vadd.xlane.f32.xlu0 %v1637
  %v1669 = vpop.xlane.xlu0 %1668
  %1670 = vadd.xlane.f32.xlu0 %v1639
  %v1671 = vpop.xlane.xlu0 %1670
  %1672 = vadd.xlane.f32.xlu0 %v1641
  %v1673 = vpop.xlane.xlu0 %1672
  %1674 = vadd.xlane.f32.xlu0 %v1643
  %v1675 = vpop.xlane.xlu0 %1674
  %v1676 = vpack.c.bf16 %v1615, %v1613
  %v1677 = vpack.c.bf16 %v1619, %v1617
  %v1678 = vpack.c.bf16 %v1623, %v1621
  %v1679 = vpack.c.bf16 %v1627, %v1625
  %v1680 = vpack.c.bf16 %v1631, %v1629
  %v1681 = vpack.c.bf16 %v1635, %v1633
  %v1682 = vpack.c.bf16 %v1639, %v1637
  %v1683 = vpack.c.bf16 %v1643, %v1641
  %1684 = vrot.lane.b32.xlu0 %v337, 112
  %v1685 = vpop.permute.xlu0 %1684
  %1686 = vrot.lane.b32.xlu0 %v338, 112
  %v1687 = vpop.permute.xlu0 %1686
  %1688 = vrot.lane.b32.xlu0 %v339, 112
  %v1689 = vpop.permute.xlu0 %1688
  %1690 = vrot.lane.b32.xlu0 %v340, 112
  %v1691 = vpop.permute.xlu0 %1690
  %1692 = vrot.lane.b32.xlu0 %v341, 112
  %v1693 = vpop.permute.xlu0 %1692
  %1694 = vrot.lane.b32.xlu0 %v342, 112
  %v1695 = vpop.permute.xlu0 %1694
  %1696 = vrot.lane.b32.xlu0 %v343, 112
  %v1697 = vpop.permute.xlu0 %1696
  %1698 = vrot.lane.b32.xlu0 %v344, 112
  %v1699 = vpop.permute.xlu0 %1698
  %1708 = vmatprep.subr.bf16.mxu0 0
  %1709 = vmatpush1.bf16.msra.mxu0 %v1699
  %1710 = vmatprep.subr.bf16.mxu0 0
  %1711 = vmatpush1.bf16.msra.mxu0 %v1697
  %1712 = vmatprep.subr.bf16.mxu0 0
  %1713 = vmatpush1.bf16.msra.mxu0 %v1695
  %1714 = vmatprep.subr.bf16.mxu0 0
  %1715 = vmatpush1.bf16.msra.mxu0 %v1693
  %1716 = vmatprep.subr.bf16.mxu0 0
  %1717 = vmatpush1.bf16.msra.mxu0 %v1691
  %1718 = vmatprep.subr.bf16.mxu0 0
  %1719 = vmatpush1.bf16.msra.mxu0 %v1689
  %1720 = vmatprep.subr.bf16.mxu0 0
  %1721 = vmatpush1.bf16.msra.mxu0 %v1687
  %1722 = vmatprep.subr.bf16.mxu0 0
  %1723 = vmatpush1.bf16.msra.mxu0 %v1685
  %1724 = vmatprep.subr.bf16.mxu0 0
  %1725 = vmatpush2.bf16.msra.mxu0 0
  %1726 = vmatprep.subr.bf16.mxu0 0
  %1727 = vmatpush2.bf16.msra.mxu0 0
  %1728 = vmatprep.subr.bf16.mxu0 0
  %1729 = vmatpush2.bf16.msra.mxu0 0
  %1730 = vmatprep.subr.bf16.mxu0 0
  %1731 = vmatpush2.bf16.msra.mxu0 0
  %1732 = vmatprep.subr.bf16.mxu0 0
  %1733 = vmatpush2.bf16.msra.mxu0 0
  %1734 = vmatprep.subr.bf16.mxu0 0
  %1735 = vmatpush2.bf16.msra.mxu0 0
  %1736 = vmatprep.subr.bf16.mxu0 0
  %1737 = vmatpush2.bf16.msra.mxu0 0
  %1738 = vmatprep.subr.bf16.mxu0 0
  %1739 = vmatpush2.bf16.msra.mxu0 0
  %1740 = vmatprep.mubr.bf16.mxu0 0
  %1741 = vmatmul.mubr.bf16.gmra.mxu0 %v1676
  %v1742 = vpop.f32.mrf.mxu0
  %v1743 = vadd.f32 0.0, %v1742
  %v1744 = vpop.f32.mrf.mxu0
  %v1745 = vpop.f32.mrf.mxu0
  %v1746 = vadd.f32 0.0, %v1745
  %v1747 = vpop.f32.mrf.mxu0
  %1748 = vmatprep.mubr.bf16.mxu0 0
  %1749 = vmatmul.mubr.bf16.gmra.mxu0 %v1677
  %v1750 = vpop.f32.mrf.mxu0
  %v1751 = vadd.f32 0.0, %v1750
  %v1752 = vpop.f32.mrf.mxu0
  %v1753 = vpop.f32.mrf.mxu0
  %v1754 = vadd.f32 0.0, %v1753
  %v1755 = vpop.f32.mrf.mxu0
  %1756 = vmatprep.mubr.bf16.mxu0 0
  %1757 = vmatmul.mubr.bf16.gmra.mxu0 %v1678
  %v1758 = vpop.f32.mrf.mxu0
  %v1759 = vadd.f32 0.0, %v1758
  %v1760 = vpop.f32.mrf.mxu0
  %v1761 = vpop.f32.mrf.mxu0
  %v1762 = vadd.f32 0.0, %v1761
  %v1763 = vpop.f32.mrf.mxu0
  %1764 = vmatprep.mubr.bf16.mxu0 0
  %1765 = vmatmul.mubr.bf16.gmra.mxu0 %v1679
  %v1766 = vpop.f32.mrf.mxu0
  %v1767 = vadd.f32 0.0, %v1766
  %v1768 = vpop.f32.mrf.mxu0
  %v1769 = vpop.f32.mrf.mxu0
  %v1770 = vadd.f32 0.0, %v1769
  %v1771 = vpop.f32.mrf.mxu0
  %1772 = vmatprep.mubr.bf16.mxu0 0
  %1773 = vmatmul.mubr.bf16.gmra.mxu0 %v1680
  %v1774 = vpop.f32.mrf.mxu0
  %v1775 = vadd.f32 0.0, %v1774
  %v1776 = vpop.f32.mrf.mxu0
  %v1777 = vpop.f32.mrf.mxu0
  %v1778 = vadd.f32 0.0, %v1777
  %v1779 = vpop.f32.mrf.mxu0
  %1780 = vmatprep.mubr.bf16.mxu0 0
  %1781 = vmatmul.mubr.bf16.gmra.mxu0 %v1681
  %v1782 = vpop.f32.mrf.mxu0
  %v1783 = vadd.f32 0.0, %v1782
  %v1784 = vpop.f32.mrf.mxu0
  %v1785 = vpop.f32.mrf.mxu0
  %v1786 = vadd.f32 0.0, %v1785
  %v1787 = vpop.f32.mrf.mxu0
  %1788 = vmatprep.mubr.bf16.mxu0 0
  %1789 = vmatmul.mubr.bf16.gmra.mxu0 %v1682
  %v1790 = vpop.f32.mrf.mxu0
  %v1791 = vadd.f32 0.0, %v1790
  %v1792 = vpop.f32.mrf.mxu0
  %v1793 = vpop.f32.mrf.mxu0
  %v1794 = vadd.f32 0.0, %v1793
  %v1795 = vpop.f32.mrf.mxu0
  %1796 = vmatprep.mubr.bf16.mxu0 0
  %1797 = vmatmul.mubr.bf16.gmra.mxu0 %v1683
  %v1798 = vpop.f32.mrf.mxu0
  %v1799 = vadd.f32 0.0, %v1798
  %v1800 = vpop.f32.mrf.mxu0
  %v1801 = vpop.f32.mrf.mxu0
  %v1802 = vadd.f32 0.0, %v1801
  %v1803 = vpop.f32.mrf.mxu0
  %1804 = vdwg.mxu0
  %v1805 = vrcp.pop %v1645
  %v1806 = vrcp.pop %v1647
  %v1807 = vrcp.pop %v1649
  %v1808 = vrcp.pop %v1651
  %v1809 = vrcp.pop %v1653
  %v1810 = vrcp.pop %v1655
  %v1811 = vrcp.pop %v1657
  %v1812 = vrcp.pop %v1659
  %v1813 = vrcp.pop %v1661
  %v1814 = vrcp.pop %v1663
  %v1815 = vrcp.pop %v1665
  %v1816 = vrcp.pop %v1667
  %v1817 = vrcp.pop %v1669
  %v1818 = vrcp.pop %v1671
  %v1819 = vrcp.pop %v1673
  %v1820 = vrcp.pop %v1675
  %v1821 = vmul.f32 %v1743, %v1805
  %v1822 = vmul.f32 %v1746, %v1806
  %v1823 = vmul.f32 %v1751, %v1807
  %v1824 = vmul.f32 %v1754, %v1808
  %v1825 = vmul.f32 %v1759, %v1809
  %v1826 = vmul.f32 %v1762, %v1810
  %v1827 = vmul.f32 %v1767, %v1811
  %v1828 = vmul.f32 %v1770, %v1812
  %v1829 = vmul.f32 %v1775, %v1813
  %v1830 = vmul.f32 %v1778, %v1814
  %v1831 = vmul.f32 %v1783, %v1815
  %v1832 = vmul.f32 %v1786, %v1816
  %v1833 = vmul.f32 %v1791, %v1817
  %v1834 = vmul.f32 %v1794, %v1818
  %v1835 = vmul.f32 %v1799, %v1819
  %v1836 = vmul.f32 %v1802, %v1820
  %1837 = vset.pattern.permute.xlu0 3
  %1838 = vperm.xlu0 %1837, %v464
  %v1839 = vpop.permute.xlu0 %1838
  %1841 = vset.pattern.permute.xlu0 3
  %1842 = vperm.xlu0 %1841, %v467
  %v1843 = vpop.permute.xlu0 %1842
  %1845 = vset.pattern.permute.xlu0 3
  %1846 = vperm.xlu0 %1845, %v472
  %v1847 = vpop.permute.xlu0 %1846
  %1849 = vset.pattern.permute.xlu0 3
  %1850 = vperm.xlu0 %1849, %v475
  %v1851 = vpop.permute.xlu0 %1850
  %1853 = vset.pattern.permute.xlu0 3
  %1854 = vperm.xlu0 %1853, %v480
  %v1855 = vpop.permute.xlu0 %1854
  %1857 = vset.pattern.permute.xlu0 3
  %1858 = vperm.xlu0 %1857, %v483
  %v1859 = vpop.permute.xlu0 %1858
  %1861 = vset.pattern.permute.xlu0 3
  %1862 = vperm.xlu0 %1861, %v488
  %v1863 = vpop.permute.xlu0 %1862
  %1865 = vset.pattern.permute.xlu0 3
  %1866 = vperm.xlu0 %1865, %v491
  %v1867 = vpop.permute.xlu0 %1866
  %1869 = vset.pattern.permute.xlu0 3
  %1870 = vperm.xlu0 %1869, %v496
  %v1871 = vpop.permute.xlu0 %1870
  %1873 = vset.pattern.permute.xlu0 3
  %1874 = vperm.xlu0 %1873, %v499
  %v1875 = vpop.permute.xlu0 %1874
  %1877 = vset.pattern.permute.xlu0 3
  %1878 = vperm.xlu0 %1877, %v504
  %v1879 = vpop.permute.xlu0 %1878
  %1881 = vset.pattern.permute.xlu0 3
  %1882 = vperm.xlu0 %1881, %v507
  %v1883 = vpop.permute.xlu0 %1882
  %1885 = vset.pattern.permute.xlu0 3
  %1886 = vperm.xlu0 %1885, %v512
  %v1887 = vpop.permute.xlu0 %1886
  %1889 = vset.pattern.permute.xlu0 3
  %1890 = vperm.xlu0 %1889, %v515
  %v1891 = vpop.permute.xlu0 %1890
  %1893 = vset.pattern.permute.xlu0 3
  %1894 = vperm.xlu0 %1893, %v520
  %v1895 = vpop.permute.xlu0 %1894
  %1897 = vset.pattern.permute.xlu0 3
  %1898 = vperm.xlu0 %1897, %v523
  %v1899 = vpop.permute.xlu0 %1898
  %v1901 = vlaneseq
  %v1902 = vshrl.u32 %v1901, 7
  %v1903 = vsub.s32 3, %v1902
  %v1904 = vrot.slane %v321, %v1903
  %v1905 = vadd.f32 %v1839, %v1904
  %v1906 = vadd.f32 %v1843, %v1904
  %v1907 = vadd.f32 %v1847, %v1904
  %v1908 = vadd.f32 %v1851, %v1904
  %v1909 = vadd.f32 %v1855, %v1904
  %v1910 = vadd.f32 %v1859, %v1904
  %v1911 = vadd.f32 %v1863, %v1904
  %v1912 = vadd.f32 %v1867, %v1904
  %v1913 = vadd.f32 %v1871, %v1904
  %v1914 = vadd.f32 %v1875, %v1904
  %v1915 = vadd.f32 %v1879, %v1904
  %v1916 = vadd.f32 %v1883, %v1904
  %v1917 = vadd.f32 %v1887, %v1904
  %v1918 = vadd.f32 %v1891, %v1904
  %v1919 = vadd.f32 %v1895, %v1904
  %v1920 = vadd.f32 %v1899, %v1904
  %vm1921 = vcmp.gt.f32.partialorder %v1905, 0.0
  %vm1922 = vcmp.gt.f32.partialorder %v1906, 0.0
  %vm1923 = vcmp.gt.f32.partialorder %v1907, 0.0
  %vm1924 = vcmp.gt.f32.partialorder %v1908, 0.0
  %vm1925 = vcmp.gt.f32.partialorder %v1909, 0.0
  %vm1926 = vcmp.gt.f32.partialorder %v1910, 0.0
  %vm1927 = vcmp.gt.f32.partialorder %v1911, 0.0
  %vm1928 = vcmp.gt.f32.partialorder %v1912, 0.0
  %vm1929 = vcmp.gt.f32.partialorder %v1913, 0.0
  %vm1930 = vcmp.gt.f32.partialorder %v1914, 0.0
  %vm1931 = vcmp.gt.f32.partialorder %v1915, 0.0
  %vm1932 = vcmp.gt.f32.partialorder %v1916, 0.0
  %vm1933 = vcmp.gt.f32.partialorder %v1917, 0.0
  %vm1934 = vcmp.gt.f32.partialorder %v1918, 0.0
  %vm1935 = vcmp.gt.f32.partialorder %v1919, 0.0
  %vm1936 = vcmp.gt.f32.partialorder %v1920, 0.0
  %v1937 = vmul.f32 %v1905, 0.2
  %v1938 = vmul.f32 %v1906, 0.2
  %v1939 = vmul.f32 %v1907, 0.2
  %v1940 = vmul.f32 %v1908, 0.2
  %v1941 = vmul.f32 %v1909, 0.2
  %v1942 = vmul.f32 %v1910, 0.2
  %v1943 = vmul.f32 %v1911, 0.2
  %v1944 = vmul.f32 %v1912, 0.2
  %v1945 = vmul.f32 %v1913, 0.2
  %v1946 = vmul.f32 %v1914, 0.2
  %v1947 = vmul.f32 %v1915, 0.2
  %v1948 = vmul.f32 %v1916, 0.2
  %v1949 = vmul.f32 %v1917, 0.2
  %v1950 = vmul.f32 %v1918, 0.2
  %v1951 = vmul.f32 %v1919, 0.2
  %v1952 = vmul.f32 %v1920, 0.2
  %v1953 = vsel %vm1921, %v1905, %v1937
  %v1954 = vsel %vm1922, %v1906, %v1938
  %v1955 = vsel %vm1923, %v1907, %v1939
  %v1956 = vsel %vm1924, %v1908, %v1940
  %v1957 = vsel %vm1925, %v1909, %v1941
  %v1958 = vsel %vm1926, %v1910, %v1942
  %v1959 = vsel %vm1927, %v1911, %v1943
  %v1960 = vsel %vm1928, %v1912, %v1944
  %v1961 = vsel %vm1929, %v1913, %v1945
  %v1962 = vsel %vm1930, %v1914, %v1946
  %v1963 = vsel %vm1931, %v1915, %v1947
  %v1964 = vsel %vm1932, %v1916, %v1948
  %v1965 = vsel %vm1933, %v1917, %v1949
  %v1966 = vsel %vm1934, %v1918, %v1950
  %v1967 = vsel %vm1935, %v1919, %v1951
  %v1968 = vsel %vm1936, %v1920, %v1952
  %v1969 = vsel %vm706, %v1953, -1e+30
  %v1970 = vsel %vm707, %v1954, -1e+30
  %v1971 = vsel %vm708, %v1955, -1e+30
  %v1972 = vsel %vm709, %v1956, -1e+30
  %v1973 = vsel %vm710, %v1957, -1e+30
  %v1974 = vsel %vm711, %v1958, -1e+30
  %v1975 = vsel %vm712, %v1959, -1e+30
  %v1976 = vsel %vm713, %v1960, -1e+30
  %v1977 = vsel %vm714, %v1961, -1e+30
  %v1978 = vsel %vm715, %v1962, -1e+30
  %v1979 = vsel %vm716, %v1963, -1e+30
  %v1980 = vsel %vm717, %v1964, -1e+30
  %v1981 = vsel %vm718, %v1965, -1e+30
  %v1982 = vsel %vm719, %v1966, -1e+30
  %v1983 = vsel %vm720, %v1967, -1e+30
  %v1984 = vsel %vm721, %v1968, -1e+30
  %1985 = vmax.xlane.f32.xlu0 %v1969
  %v1986 = vpop.xlane.xlu0 %1985
  %1987 = vmax.xlane.f32.xlu0 %v1970
  %v1988 = vpop.xlane.xlu0 %1987
  %1989 = vmax.xlane.f32.xlu0 %v1971
  %v1990 = vpop.xlane.xlu0 %1989
  %1991 = vmax.xlane.f32.xlu0 %v1972
  %v1992 = vpop.xlane.xlu0 %1991
  %1993 = vmax.xlane.f32.xlu0 %v1973
  %v1994 = vpop.xlane.xlu0 %1993
  %1995 = vmax.xlane.f32.xlu0 %v1974
  %v1996 = vpop.xlane.xlu0 %1995
  %1997 = vmax.xlane.f32.xlu0 %v1975
  %v1998 = vpop.xlane.xlu0 %1997
  %1999 = vmax.xlane.f32.xlu0 %v1976
  %v2000 = vpop.xlane.xlu0 %1999
  %2001 = vmax.xlane.f32.xlu0 %v1977
  %v2002 = vpop.xlane.xlu0 %2001
  %2003 = vmax.xlane.f32.xlu0 %v1978
  %v2004 = vpop.xlane.xlu0 %2003
  %2005 = vmax.xlane.f32.xlu0 %v1979
  %v2006 = vpop.xlane.xlu0 %2005
  %2007 = vmax.xlane.f32.xlu0 %v1980
  %v2008 = vpop.xlane.xlu0 %2007
  %2009 = vmax.xlane.f32.xlu0 %v1981
  %v2010 = vpop.xlane.xlu0 %2009
  %2011 = vmax.xlane.f32.xlu0 %v1982
  %v2012 = vpop.xlane.xlu0 %2011
  %2013 = vmax.xlane.f32.xlu0 %v1983
  %v2014 = vpop.xlane.xlu0 %2013
  %2015 = vmax.xlane.f32.xlu0 %v1984
  %v2016 = vpop.xlane.xlu0 %2015
  %v2017 = vsub.f32 %v1969, %v1986
  %v2018 = vsub.f32 %v1970, %v1988
  %v2019 = vsub.f32 %v1971, %v1990
  %v2020 = vsub.f32 %v1972, %v1992
  %v2021 = vsub.f32 %v1973, %v1994
  %v2022 = vsub.f32 %v1974, %v1996
  %v2023 = vsub.f32 %v1975, %v1998
  %v2024 = vsub.f32 %v1976, %v2000
  %v2025 = vsub.f32 %v1977, %v2002
  %v2026 = vsub.f32 %v1978, %v2004
  %v2027 = vsub.f32 %v1979, %v2006
  %v2028 = vsub.f32 %v1980, %v2008
  %v2029 = vsub.f32 %v1981, %v2010
  %v2030 = vsub.f32 %v1982, %v2012
  %v2031 = vsub.f32 %v1983, %v2014
  %v2032 = vsub.f32 %v1984, %v2016
  %v2033 = vmul.f32 %v2017, 1.442695
  %v2034 = vpow.pop %v2033
  %v2035 = vmul.f32 %v2018, 1.442695
  %v2036 = vpow.pop %v2035
  %v2037 = vmul.f32 %v2019, 1.442695
  %v2038 = vpow.pop %v2037
  %v2039 = vmul.f32 %v2020, 1.442695
  %v2040 = vpow.pop %v2039
  %v2041 = vmul.f32 %v2021, 1.442695
  %v2042 = vpow.pop %v2041
  %v2043 = vmul.f32 %v2022, 1.442695
  %v2044 = vpow.pop %v2043
  %v2045 = vmul.f32 %v2023, 1.442695
  %v2046 = vpow.pop %v2045
  %v2047 = vmul.f32 %v2024, 1.442695
  %v2048 = vpow.pop %v2047
  %v2049 = vmul.f32 %v2025, 1.442695
  %v2050 = vpow.pop %v2049
  %v2051 = vmul.f32 %v2026, 1.442695
  %v2052 = vpow.pop %v2051
  %v2053 = vmul.f32 %v2027, 1.442695
  %v2054 = vpow.pop %v2053
  %v2055 = vmul.f32 %v2028, 1.442695
  %v2056 = vpow.pop %v2055
  %v2057 = vmul.f32 %v2029, 1.442695
  %v2058 = vpow.pop %v2057
  %v2059 = vmul.f32 %v2030, 1.442695
  %v2060 = vpow.pop %v2059
  %v2061 = vmul.f32 %v2031, 1.442695
  %v2062 = vpow.pop %v2061
  %v2063 = vmul.f32 %v2032, 1.442695
  %v2064 = vpow.pop %v2063
  %2065 = vadd.xlane.f32.xlu0 %v2034
  %v2066 = vpop.xlane.xlu0 %2065
  %2067 = vadd.xlane.f32.xlu0 %v2036
  %v2068 = vpop.xlane.xlu0 %2067
  %2069 = vadd.xlane.f32.xlu0 %v2038
  %v2070 = vpop.xlane.xlu0 %2069
  %2071 = vadd.xlane.f32.xlu0 %v2040
  %v2072 = vpop.xlane.xlu0 %2071
  %2073 = vadd.xlane.f32.xlu0 %v2042
  %v2074 = vpop.xlane.xlu0 %2073
  %2075 = vadd.xlane.f32.xlu0 %v2044
  %v2076 = vpop.xlane.xlu0 %2075
  %2077 = vadd.xlane.f32.xlu0 %v2046
  %v2078 = vpop.xlane.xlu0 %2077
  %2079 = vadd.xlane.f32.xlu0 %v2048
  %v2080 = vpop.xlane.xlu0 %2079
  %2081 = vadd.xlane.f32.xlu0 %v2050
  %v2082 = vpop.xlane.xlu0 %2081
  %2083 = vadd.xlane.f32.xlu0 %v2052
  %v2084 = vpop.xlane.xlu0 %2083
  %2085 = vadd.xlane.f32.xlu0 %v2054
  %v2086 = vpop.xlane.xlu0 %2085
  %2087 = vadd.xlane.f32.xlu0 %v2056
  %v2088 = vpop.xlane.xlu0 %2087
  %2089 = vadd.xlane.f32.xlu0 %v2058
  %v2090 = vpop.xlane.xlu0 %2089
  %2091 = vadd.xlane.f32.xlu0 %v2060
  %v2092 = vpop.xlane.xlu0 %2091
  %2093 = vadd.xlane.f32.xlu0 %v2062
  %v2094 = vpop.xlane.xlu0 %2093
  %2095 = vadd.xlane.f32.xlu0 %v2064
  %v2096 = vpop.xlane.xlu0 %2095
  %v2097 = vpack.c.bf16 %v2036, %v2034
  %v2098 = vpack.c.bf16 %v2040, %v2038
  %v2099 = vpack.c.bf16 %v2044, %v2042
  %v2100 = vpack.c.bf16 %v2048, %v2046
  %v2101 = vpack.c.bf16 %v2052, %v2050
  %v2102 = vpack.c.bf16 %v2056, %v2054
  %v2103 = vpack.c.bf16 %v2060, %v2058
  %v2104 = vpack.c.bf16 %v2064, %v2062
  %2105 = vrot.lane.b32.xlu0 %v337, 104
  %v2106 = vpop.permute.xlu0 %2105
  %2107 = vrot.lane.b32.xlu0 %v338, 104
  %v2108 = vpop.permute.xlu0 %2107
  %2109 = vrot.lane.b32.xlu0 %v339, 104
  %v2110 = vpop.permute.xlu0 %2109
  %2111 = vrot.lane.b32.xlu0 %v340, 104
  %v2112 = vpop.permute.xlu0 %2111
  %2113 = vrot.lane.b32.xlu0 %v341, 104
  %v2114 = vpop.permute.xlu0 %2113
  %2115 = vrot.lane.b32.xlu0 %v342, 104
  %v2116 = vpop.permute.xlu0 %2115
  %2117 = vrot.lane.b32.xlu0 %v343, 104
  %v2118 = vpop.permute.xlu0 %2117
  %2119 = vrot.lane.b32.xlu0 %v344, 104
  %v2120 = vpop.permute.xlu0 %2119
  %2129 = vmatprep.subr.bf16.mxu0 0
  %2130 = vmatpush1.bf16.msra.mxu0 %v2120
  %2131 = vmatprep.subr.bf16.mxu0 0
  %2132 = vmatpush1.bf16.msra.mxu0 %v2118
  %2133 = vmatprep.subr.bf16.mxu0 0
  %2134 = vmatpush1.bf16.msra.mxu0 %v2116
  %2135 = vmatprep.subr.bf16.mxu0 0
  %2136 = vmatpush1.bf16.msra.mxu0 %v2114
  %2137 = vmatprep.subr.bf16.mxu0 0
  %2138 = vmatpush1.bf16.msra.mxu0 %v2112
  %2139 = vmatprep.subr.bf16.mxu0 0
  %2140 = vmatpush1.bf16.msra.mxu0 %v2110
  %2141 = vmatprep.subr.bf16.mxu0 0
  %2142 = vmatpush1.bf16.msra.mxu0 %v2108
  %2143 = vmatprep.subr.bf16.mxu0 0
  %2144 = vmatpush1.bf16.msra.mxu0 %v2106
  %2145 = vmatprep.subr.bf16.mxu0 0
  %2146 = vmatpush2.bf16.msra.mxu0 0
  %2147 = vmatprep.subr.bf16.mxu0 0
  %2148 = vmatpush2.bf16.msra.mxu0 0
  %2149 = vmatprep.subr.bf16.mxu0 0
  %2150 = vmatpush2.bf16.msra.mxu0 0
  %2151 = vmatprep.subr.bf16.mxu0 0
  %2152 = vmatpush2.bf16.msra.mxu0 0
  %2153 = vmatprep.subr.bf16.mxu0 0
  %2154 = vmatpush2.bf16.msra.mxu0 0
  %2155 = vmatprep.subr.bf16.mxu0 0
  %2156 = vmatpush2.bf16.msra.mxu0 0
  %2157 = vmatprep.subr.bf16.mxu0 0
  %2158 = vmatpush2.bf16.msra.mxu0 0
  %2159 = vmatprep.subr.bf16.mxu0 0
  %2160 = vmatpush2.bf16.msra.mxu0 0
  %2161 = vmatprep.mubr.bf16.mxu0 0
  %2162 = vmatmul.mubr.bf16.gmra.mxu0 %v2097
  %v2163 = vpop.f32.mrf.mxu0
  %v2164 = vadd.f32 0.0, %v2163
  %v2165 = vpop.f32.mrf.mxu0
  %v2166 = vpop.f32.mrf.mxu0
  %v2167 = vadd.f32 0.0, %v2166
  %v2168 = vpop.f32.mrf.mxu0
  %2169 = vmatprep.mubr.bf16.mxu0 0
  %2170 = vmatmul.mubr.bf16.gmra.mxu0 %v2098
  %v2171 = vpop.f32.mrf.mxu0
  %v2172 = vadd.f32 0.0, %v2171
  %v2173 = vpop.f32.mrf.mxu0
  %v2174 = vpop.f32.mrf.mxu0
  %v2175 = vadd.f32 0.0, %v2174
  %v2176 = vpop.f32.mrf.mxu0
  %2177 = vmatprep.mubr.bf16.mxu0 0
  %2178 = vmatmul.mubr.bf16.gmra.mxu0 %v2099
  %v2179 = vpop.f32.mrf.mxu0
  %v2180 = vadd.f32 0.0, %v2179
  %v2181 = vpop.f32.mrf.mxu0
  %v2182 = vpop.f32.mrf.mxu0
  %v2183 = vadd.f32 0.0, %v2182
  %v2184 = vpop.f32.mrf.mxu0
  %2185 = vmatprep.mubr.bf16.mxu0 0
  %2186 = vmatmul.mubr.bf16.gmra.mxu0 %v2100
  %v2187 = vpop.f32.mrf.mxu0
  %v2188 = vadd.f32 0.0, %v2187
  %v2189 = vpop.f32.mrf.mxu0
  %v2190 = vpop.f32.mrf.mxu0
  %v2191 = vadd.f32 0.0, %v2190
  %v2192 = vpop.f32.mrf.mxu0
  %2193 = vmatprep.mubr.bf16.mxu0 0
  %2194 = vmatmul.mubr.bf16.gmra.mxu0 %v2101
  %v2195 = vpop.f32.mrf.mxu0
  %v2196 = vadd.f32 0.0, %v2195
  %v2197 = vpop.f32.mrf.mxu0
  %v2198 = vpop.f32.mrf.mxu0
  %v2199 = vadd.f32 0.0, %v2198
  %v2200 = vpop.f32.mrf.mxu0
  %2201 = vmatprep.mubr.bf16.mxu0 0
  %2202 = vmatmul.mubr.bf16.gmra.mxu0 %v2102
  %v2203 = vpop.f32.mrf.mxu0
  %v2204 = vadd.f32 0.0, %v2203
  %v2205 = vpop.f32.mrf.mxu0
  %v2206 = vpop.f32.mrf.mxu0
  %v2207 = vadd.f32 0.0, %v2206
  %v2208 = vpop.f32.mrf.mxu0
  %2209 = vmatprep.mubr.bf16.mxu0 0
  %2210 = vmatmul.mubr.bf16.gmra.mxu0 %v2103
  %v2211 = vpop.f32.mrf.mxu0
  %v2212 = vadd.f32 0.0, %v2211
  %v2213 = vpop.f32.mrf.mxu0
  %v2214 = vpop.f32.mrf.mxu0
  %v2215 = vadd.f32 0.0, %v2214
  %v2216 = vpop.f32.mrf.mxu0
  %2217 = vmatprep.mubr.bf16.mxu0 0
  %2218 = vmatmul.mubr.bf16.gmra.mxu0 %v2104
  %v2219 = vpop.f32.mrf.mxu0
  %v2220 = vadd.f32 0.0, %v2219
  %v2221 = vpop.f32.mrf.mxu0
  %v2222 = vpop.f32.mrf.mxu0
  %v2223 = vadd.f32 0.0, %v2222
  %v2224 = vpop.f32.mrf.mxu0
  %2225 = vdwg.mxu0
  %v2226 = vrcp.pop %v2066
  %v2227 = vrcp.pop %v2068
  %v2228 = vrcp.pop %v2070
  %v2229 = vrcp.pop %v2072
  %v2230 = vrcp.pop %v2074
  %v2231 = vrcp.pop %v2076
  %v2232 = vrcp.pop %v2078
  %v2233 = vrcp.pop %v2080
  %v2234 = vrcp.pop %v2082
  %v2235 = vrcp.pop %v2084
  %v2236 = vrcp.pop %v2086
  %v2237 = vrcp.pop %v2088
  %v2238 = vrcp.pop %v2090
  %v2239 = vrcp.pop %v2092
  %v2240 = vrcp.pop %v2094
  %v2241 = vrcp.pop %v2096
  %v2242 = vmul.f32 %v2164, %v2226
  %v2243 = vmul.f32 %v2167, %v2227
  %v2244 = vmul.f32 %v2172, %v2228
  %v2245 = vmul.f32 %v2175, %v2229
  %v2246 = vmul.f32 %v2180, %v2230
  %v2247 = vmul.f32 %v2183, %v2231
  %v2248 = vmul.f32 %v2188, %v2232
  %v2249 = vmul.f32 %v2191, %v2233
  %v2250 = vmul.f32 %v2196, %v2234
  %v2251 = vmul.f32 %v2199, %v2235
  %v2252 = vmul.f32 %v2204, %v2236
  %v2253 = vmul.f32 %v2207, %v2237
  %v2254 = vmul.f32 %v2212, %v2238
  %v2255 = vmul.f32 %v2215, %v2239
  %v2256 = vmul.f32 %v2220, %v2240
  %v2257 = vmul.f32 %v2223, %v2241
  %2274 = vrot.lane.b32.xlu0 %v1400, 8
  %v2275 = vpop.permute.xlu0 %2274
  %2276 = vrot.lane.b32.xlu0 %v1401, 8
  %v2277 = vpop.permute.xlu0 %2276
  %2278 = vrot.lane.b32.xlu0 %v1402, 8
  %v2279 = vpop.permute.xlu0 %2278
  %2280 = vrot.lane.b32.xlu0 %v1403, 8
  %v2281 = vpop.permute.xlu0 %2280
  %2282 = vrot.lane.b32.xlu0 %v1404, 8
  %v2283 = vpop.permute.xlu0 %2282
  %2284 = vrot.lane.b32.xlu0 %v1405, 8
  %v2285 = vpop.permute.xlu0 %2284
  %2286 = vrot.lane.b32.xlu0 %v1406, 8
  %v2287 = vpop.permute.xlu0 %2286
  %2288 = vrot.lane.b32.xlu0 %v1407, 8
  %v2289 = vpop.permute.xlu0 %2288
  %2290 = vrot.lane.b32.xlu0 %v1408, 8
  %v2291 = vpop.permute.xlu0 %2290
  %2292 = vrot.lane.b32.xlu0 %v1409, 8
  %v2293 = vpop.permute.xlu0 %2292
  %2294 = vrot.lane.b32.xlu0 %v1410, 8
  %v2295 = vpop.permute.xlu0 %2294
  %2296 = vrot.lane.b32.xlu0 %v1411, 8
  %v2297 = vpop.permute.xlu0 %2296
  %2298 = vrot.lane.b32.xlu0 %v1412, 8
  %v2299 = vpop.permute.xlu0 %2298
  %2300 = vrot.lane.b32.xlu0 %v1413, 8
  %v2301 = vpop.permute.xlu0 %2300
  %2302 = vrot.lane.b32.xlu0 %v1414, 8
  %v2303 = vpop.permute.xlu0 %2302
  %2304 = vrot.lane.b32.xlu0 %v1415, 8
  %v2305 = vpop.permute.xlu0 %2304
  %2338 = vrot.lane.b32.xlu0 %v1821, 16
  %v2339 = vpop.permute.xlu0 %2338
  %2340 = vrot.lane.b32.xlu0 %v1822, 16
  %v2341 = vpop.permute.xlu0 %2340
  %2342 = vrot.lane.b32.xlu0 %v1823, 16
  %v2343 = vpop.permute.xlu0 %2342
  %2344 = vrot.lane.b32.xlu0 %v1824, 16
  %v2345 = vpop.permute.xlu0 %2344
  %2346 = vrot.lane.b32.xlu0 %v1825, 16
  %v2347 = vpop.permute.xlu0 %2346
  %2348 = vrot.lane.b32.xlu0 %v1826, 16
  %v2349 = vpop.permute.xlu0 %2348
  %2350 = vrot.lane.b32.xlu0 %v1827, 16
  %v2351 = vpop.permute.xlu0 %2350
  %2352 = vrot.lane.b32.xlu0 %v1828, 16
  %v2353 = vpop.permute.xlu0 %2352
  %2354 = vrot.lane.b32.xlu0 %v1829, 16
  %v2355 = vpop.permute.xlu0 %2354
  %2356 = vrot.lane.b32.xlu0 %v1830, 16
  %v2357 = vpop.permute.xlu0 %2356
  %2358 = vrot.lane.b32.xlu0 %v1831, 16
  %v2359 = vpop.permute.xlu0 %2358
  %2360 = vrot.lane.b32.xlu0 %v1832, 16
  %v2361 = vpop.permute.xlu0 %2360
  %2362 = vrot.lane.b32.xlu0 %v1833, 16
  %v2363 = vpop.permute.xlu0 %2362
  %2364 = vrot.lane.b32.xlu0 %v1834, 16
  %v2365 = vpop.permute.xlu0 %2364
  %2366 = vrot.lane.b32.xlu0 %v1835, 16
  %v2367 = vpop.permute.xlu0 %2366
  %2368 = vrot.lane.b32.xlu0 %v1836, 16
  %v2369 = vpop.permute.xlu0 %2368
  %2402 = vrot.lane.b32.xlu0 %v2242, 24
  %v2403 = vpop.permute.xlu0 %2402
  %2404 = vrot.lane.b32.xlu0 %v2243, 24
  %v2405 = vpop.permute.xlu0 %2404
  %2406 = vrot.lane.b32.xlu0 %v2244, 24
  %v2407 = vpop.permute.xlu0 %2406
  %2408 = vrot.lane.b32.xlu0 %v2245, 24
  %v2409 = vpop.permute.xlu0 %2408
  %2410 = vrot.lane.b32.xlu0 %v2246, 24
  %v2411 = vpop.permute.xlu0 %2410
  %2412 = vrot.lane.b32.xlu0 %v2247, 24
  %v2413 = vpop.permute.xlu0 %2412
  %2414 = vrot.lane.b32.xlu0 %v2248, 24
  %v2415 = vpop.permute.xlu0 %2414
  %2416 = vrot.lane.b32.xlu0 %v2249, 24
  %v2417 = vpop.permute.xlu0 %2416
  %2418 = vrot.lane.b32.xlu0 %v2250, 24
  %v2419 = vpop.permute.xlu0 %2418
  %2420 = vrot.lane.b32.xlu0 %v2251, 24
  %v2421 = vpop.permute.xlu0 %2420
  %2422 = vrot.lane.b32.xlu0 %v2252, 24
  %v2423 = vpop.permute.xlu0 %2422
  %2424 = vrot.lane.b32.xlu0 %v2253, 24
  %v2425 = vpop.permute.xlu0 %2424
  %2426 = vrot.lane.b32.xlu0 %v2254, 24
  %v2427 = vpop.permute.xlu0 %2426
  %2428 = vrot.lane.b32.xlu0 %v2255, 24
  %v2429 = vpop.permute.xlu0 %2428
  %2430 = vrot.lane.b32.xlu0 %v2256, 24
  %v2431 = vpop.permute.xlu0 %2430
  %2432 = vrot.lane.b32.xlu0 %v2257, 24
  %v2433 = vpop.permute.xlu0 %2432
  %v2450 = vsel %vm115, %v971, %v2275
  %v2451 = vsel %vm115, %v972, %v2277
  %v2452 = vsel %vm115, %v973, %v2279
  %v2453 = vsel %vm115, %v974, %v2281
  %v2454 = vsel %vm115, %v975, %v2283
  %v2455 = vsel %vm115, %v976, %v2285
  %v2456 = vsel %vm115, %v977, %v2287
  %v2457 = vsel %vm115, %v978, %v2289
  %v2458 = vsel %vm115, %v979, %v2291
  %v2459 = vsel %vm115, %v980, %v2293
  %v2460 = vsel %vm115, %v981, %v2295
  %v2461 = vsel %vm115, %v982, %v2297
  %v2462 = vsel %vm115, %v983, %v2299
  %v2463 = vsel %vm115, %v984, %v2301
  %v2464 = vsel %vm115, %v985, %v2303
  %v2465 = vsel %vm115, %v986, %v2305
  %vm2466 = vcmask 130048
  %v2467 = vsel %vm2466, %v2450, %v2339
  %v2468 = vsel %vm2466, %v2451, %v2341
  %v2469 = vsel %vm2466, %v2452, %v2343
  %v2470 = vsel %vm2466, %v2453, %v2345
  %v2471 = vsel %vm2466, %v2454, %v2347
  %v2472 = vsel %vm2466, %v2455, %v2349
  %v2473 = vsel %vm2466, %v2456, %v2351
  %v2474 = vsel %vm2466, %v2457, %v2353
  %v2475 = vsel %vm2466, %v2458, %v2355
  %v2476 = vsel %vm2466, %v2459, %v2357
  %v2477 = vsel %vm2466, %v2460, %v2359
  %v2478 = vsel %vm2466, %v2461, %v2361
  %v2479 = vsel %vm2466, %v2462, %v2363
  %v2480 = vsel %vm2466, %v2463, %v2365
  %v2481 = vsel %vm2466, %v2464, %v2367
  %v2482 = vsel %vm2466, %v2465, %v2369
  %vm2483 = vcmask 195584
  %v2484 = vsel %vm2483, %v2467, %v2403
  %v2485 = vsel %vm2483, %v2468, %v2405
  %v2486 = vsel %vm2483, %v2469, %v2407
  %v2487 = vsel %vm2483, %v2470, %v2409
  %v2488 = vsel %vm2483, %v2471, %v2411
  %v2489 = vsel %vm2483, %v2472, %v2413
  %v2490 = vsel %vm2483, %v2473, %v2415
  %v2491 = vsel %vm2483, %v2474, %v2417
  %v2492 = vsel %vm2483, %v2475, %v2419
  %v2493 = vsel %vm2483, %v2476, %v2421
  %v2494 = vsel %vm2483, %v2477, %v2423
  %v2495 = vsel %vm2483, %v2478, %v2425
  %v2496 = vsel %vm2483, %v2479, %v2427
  %v2497 = vsel %vm2483, %v2480, %v2429
  %v2498 = vsel %vm2483, %v2481, %v2431
  %v2499 = vsel %vm2483, %v2482, %v2433
  %vm2500 = vcmask 261120
  %v2501 = vsel %vm2500, %v2484, 0.0
  %v2502 = vsel %vm2500, %v2485, 0.0
  %v2503 = vsel %vm2500, %v2486, 0.0
  %v2504 = vsel %vm2500, %v2487, 0.0
  %v2505 = vsel %vm2500, %v2488, 0.0
  %v2506 = vsel %vm2500, %v2489, 0.0
  %v2507 = vsel %vm2500, %v2490, 0.0
  %v2508 = vsel %vm2500, %v2491, 0.0
  %v2509 = vsel %vm2500, %v2492, 0.0
  %v2510 = vsel %vm2500, %v2493, 0.0
  %v2511 = vsel %vm2500, %v2494, 0.0
  %v2512 = vsel %vm2500, %v2495, 0.0
  %v2513 = vsel %vm2500, %v2496, 0.0
  %v2514 = vsel %vm2500, %v2497, 0.0
  %v2515 = vsel %vm2500, %v2498, 0.0
  %v2516 = vsel %vm2500, %v2499, 0.0
  %v2517 = vld [vmem:[%s5] sm:$0x1]
  %v2519 = vlaneseq
  %v2520 = vshrl.u32 %v2519, 7
  %v2521 = vsub.s32 0, %v2520
  %v2522 = vrot.slane %v2517, %v2521
  %v2524 = vadd.f32 %v2501, %v2522
  %v2525 = vadd.f32 %v2502, %v2522
  %v2526 = vadd.f32 %v2503, %v2522
  %v2527 = vadd.f32 %v2504, %v2522
  %v2528 = vadd.f32 %v2505, %v2522
  %v2529 = vadd.f32 %v2506, %v2522
  %v2530 = vadd.f32 %v2507, %v2522
  %v2531 = vadd.f32 %v2508, %v2522
  %v2532 = vadd.f32 %v2509, %v2522
  %v2533 = vadd.f32 %v2510, %v2522
  %v2534 = vadd.f32 %v2511, %v2522
  %v2535 = vadd.f32 %v2512, %v2522
  %v2536 = vadd.f32 %v2513, %v2522
  %v2537 = vadd.f32 %v2514, %v2522
  %v2538 = vadd.f32 %v2515, %v2522
  %v2539 = vadd.f32 %v2516, %v2522
  %v2540 = vmax.f32 %v2524, 0.0
  %v2541 = vmax.f32 %v2525, 0.0
  %v2542 = vmax.f32 %v2526, 0.0
  %v2543 = vmax.f32 %v2527, 0.0
  %v2544 = vmax.f32 %v2528, 0.0
  %v2545 = vmax.f32 %v2529, 0.0
  %v2546 = vmax.f32 %v2530, 0.0
  %v2547 = vmax.f32 %v2531, 0.0
  %v2548 = vmax.f32 %v2532, 0.0
  %v2549 = vmax.f32 %v2533, 0.0
  %v2550 = vmax.f32 %v2534, 0.0
  %v2551 = vmax.f32 %v2535, 0.0
  %v2552 = vmax.f32 %v2536, 0.0
  %v2553 = vmax.f32 %v2537, 0.0
  %v2554 = vmax.f32 %v2538, 0.0
  %v2555 = vmax.f32 %v2539, 0.0
  %v2556 = vpack.c.bf16 %v2541, %v2540
  %v2557 = vpack.c.bf16 %v2543, %v2542
  %v2558 = vpack.c.bf16 %v2545, %v2544
  %v2559 = vpack.c.bf16 %v2547, %v2546
  %v2560 = vpack.c.bf16 %v2549, %v2548
  %v2561 = vpack.c.bf16 %v2551, %v2550
  %v2562 = vpack.c.bf16 %v2553, %v2552
  %v2563 = vpack.c.bf16 %v2555, %v2554
  %v2572 = vunpack.c.l.b16 %v2556
  %v2573 = vunpack.c.h.b16 %v2556
  %v2574 = vunpack.c.l.b16 %v2557
  %v2575 = vunpack.c.h.b16 %v2557
  %v2576 = vunpack.c.l.b16 %v2558
  %v2577 = vunpack.c.h.b16 %v2558
  %v2578 = vunpack.c.l.b16 %v2559
  %v2579 = vunpack.c.h.b16 %v2559
  %v2580 = vunpack.c.l.b16 %v2560
  %v2581 = vunpack.c.h.b16 %v2560
  %v2582 = vunpack.c.l.b16 %v2561
  %v2583 = vunpack.c.h.b16 %v2561
  %v2584 = vunpack.c.l.b16 %v2562
  %v2585 = vunpack.c.h.b16 %v2562
  %v2586 = vunpack.c.l.b16 %v2563
  %v2587 = vunpack.c.h.b16 %v2563
  %v2588 = vpack.c.b16 %v2572, %v2572
  %v2589 = vpack.c.b16 %v2573, %v2573
  %v2590 = vpack.c.b16 %v2574, %v2574
  %v2591 = vpack.c.b16 %v2575, %v2575
  %v2592 = vpack.c.b16 %v2576, %v2576
  %v2593 = vpack.c.b16 %v2577, %v2577
  %v2594 = vpack.c.b16 %v2578, %v2578
  %v2595 = vpack.c.b16 %v2579, %v2579
  %v2596 = vpack.c.b16 %v2580, %v2580
  %v2597 = vpack.c.b16 %v2581, %v2581
  %v2598 = vpack.c.b16 %v2582, %v2582
  %v2599 = vpack.c.b16 %v2583, %v2583
  %v2600 = vpack.c.b16 %v2584, %v2584
  %v2601 = vpack.c.b16 %v2585, %v2585
  %v2602 = vpack.c.b16 %v2586, %v2586
  %v2603 = vpack.c.b16 %v2587, %v2587
  %2620 = vst [vmem:[%s6] sm:$0xf] %v2588
  %2621 = vst [vmem:[%s6 + $0x4] sm:$0xf] %v2589
  %2622 = vst [vmem:[%s6 + $0x8] sm:$0xf] %v2590
  %2623 = vst [vmem:[%s6 + $0xc] sm:$0xf] %v2591
  %2624 = vst [vmem:[%s6 + $0x10] sm:$0xf] %v2592
  %2625 = vst [vmem:[%s6 + $0x14] sm:$0xf] %v2593
  %2626 = vst [vmem:[%s6 + $0x18] sm:$0xf] %v2594
  %2627 = vst [vmem:[%s6 + $0x1c] sm:$0xf] %v2595
  %2628 = vst [vmem:[%s6 + $0x20] sm:$0xf] %v2596
  %2629 = vst [vmem:[%s6 + $0x24] sm:$0xf] %v2597
  %2630 = vst [vmem:[%s6 + $0x28] sm:$0xf] %v2598
  %2631 = vst [vmem:[%s6 + $0x2c] sm:$0xf] %v2599
  %2632 = vst [vmem:[%s6 + $0x30] sm:$0xf] %v2600
  %2633 = vst [vmem:[%s6 + $0x34] sm:$0xf] %v2601
  %2634 = vst [vmem:[%s6 + $0x38] sm:$0xf] %v2602
  %2635 = vst [vmem:[%s6 + $0x3c] sm:$0xf] %v2603
  // Predicated region
  $region26: #{gnn_head_forward.2} parent=0 // pred_check
    _
  $region27: #{gnn_head_forward.2} parent=0 // pred_check_branch
    %2637 = sbr.rel (0) target = $region29
  $region28: #{gnn_head_forward.2} parent=0 // pred_region
    _
  $region29: #{gnn_head_forward.2} parent=0 // pred_fallthru
    _
  // Predicated region
  $region30: #{gnn_head_forward.2} parent=0 // pred_check
    _
  $region31: #{gnn_head_forward.2} parent=0 // pred_check_branch
    %2639 = sbr.rel (0) target = $region33
  $region32: #{gnn_head_forward.2} parent=0 // pred_region
    _
  $region33: #{gnn_head_forward.2} parent=0 // pred_fallthru
    _

</llo_original>
